<compile_context>
chip_gen: v5e
topology: v5e:2x2
jax: 0.10.0
libtpu: 0.0.40
codegen_flags: <defaults>
</compile_context>

<pallas_src>
import functools

import jax
import jax.numpy as jnp
from jax import lax
from jax.experimental import pallas as pl
from jax.experimental.pallas import tpu as pltpu

EPS = 1e-5                     # nn.BatchNorm2d default eps
LANE = 128                     # TPU lane width; channel dims padded to this
VMEM_LIMIT = 32 * 1024 * 1024  # explicit scoped-VMEM budget (fits v5e/v6e/v7x)


# ----------------------------------------------------------------------------
# small helpers
# ----------------------------------------------------------------------------
def _round_up(x, m):
    return (x + m - 1) // m * m


def _pick_tile(m, cap=256):
    """Largest row tile <= cap (multiple of 8) dividing m; fallback: whole m."""
    for t in (256, 128, 64, 32, 16, 8):
        if t <= cap and m % t == 0:
            return t
    return m


def _compiler_params():
    return pltpu.CompilerParams(dimension_semantics=("parallel",),
                                vmem_limit_bytes=VMEM_LIMIT)


def _fold_bn(stats, count, gamma, beta):
    """Fold BatchNorm(train) into one per-channel affine from global partials.

    stats: (G, 2, C) per-tile [sum, sumsq]; count: number of reduced elements.
    Returns scale, bias of shape (1, C) so that  bn(y) == y * scale + bias.
    """
    s = jnp.sum(stats[:, 0, :], axis=0)
    ss = jnp.sum(stats[:, 1, :], axis=0)
    mean = s / count
    var = jnp.maximum(ss / count - mean * mean, 0.0)   # biased variance
    scale = gamma * lax.rsqrt(var + EPS)
    bias = beta - mean * scale
    return scale.reshape(1, -1), bias.reshape(1, -1)


# ----------------------------------------------------------------------------
# Pallas kernels
# ----------------------------------------------------------------------------
def _pw_conv_stats_kernel(x_ref, w_ref, y_ref, st_ref):
    """1x1 conv tile: y = x @ w (bf16 operands, f32 acc) + BN partial stats."""
    y = jnp.dot(x_ref[...].astype(jnp.bfloat16), w_ref[...],
                preferred_element_type=jnp.float32)
    y_ref[...] = y
    s = jnp.sum(y, axis=0, keepdims=True)
    ss = jnp.sum(y * y, axis=0, keepdims=True)
    st_ref[0] = jnp.concatenate([s, ss], axis=0)          # (2, Cout)


def _pw_affine_conv_stats_kernel(x_ref, s_ref, b_ref, w_ref, y_ref, st_ref):
    """Fused: previous stage's folded BN affine + ReLU6, then 1x1 conv + stats."""
    x = jnp.clip(x_ref[...] * s_ref[...] + b_ref[...], 0.0, 6.0)
    y = jnp.dot(x.astype(jnp.bfloat16), w_ref[...],
                preferred_element_type=jnp.float32)
    y_ref[...] = y
    s = jnp.sum(y, axis=0, keepdims=True)
    ss = jnp.sum(y * y, axis=0, keepdims=True)
    st_ref[0] = jnp.concatenate([s, ss], axis=0)


def _dw_conv_stats_kernel(x_ref, w_ref, s_ref, b_ref, y_ref, st_ref, *,
                          ksize, stride, padding, h_out, w_out, pre_affine):
    """Depthwise KxK conv for one batch item.

    Fused with the previous stage's folded BN affine + ReLU6 (if any); spatial
    zero-padding is built in VMEM (no HBM round trip); emits BN partial stats.
    """
    x = x_ref[0]                                           # (H, W, C) f32
    h, w, c = x.shape
    if pre_affine:
        sc = s_ref[...].reshape(1, 1, c)
        bi = b_ref[...].reshape(1, 1, c)
        x = jnp.clip(x * sc + bi, 0.0, 6.0)
    if padding > 0:
        zr = jnp.zeros((padding, w, c), x.dtype)
        x = jnp.concatenate([zr, x, zr], axis=0)
        zc = jnp.zeros((h + 2 * padding, padding, c), x.dtype)
        x = jnp.concatenate([zc, x, zc], axis=1)
    wk = w_ref[...]                                        # (K, K, C)
    acc = None
    for kh in range(ksize):
        for kw in range(ksize):
            if stride == 1:
                patch = x[kh:kh + h_out, kw:kw + w_out, :]     # contiguous view
            else:
                # TODO(synk): for stride>1 a single stride de-interleave before
                # the tap loop would avoid K*K strided slices.
                patch = lax.slice(
                    x, (kh, kw, 0),
                    (kh + (h_out - 1) * stride + 1,
                     kw + (w_out - 1) * stride + 1, c),
                    (stride, stride, 1))
            term = patch * wk[kh, kw].reshape(1, 1, c)
            acc = term if acc is None else acc + term
    y_ref[0] = acc
    s = jnp.sum(acc, axis=(0, 1))[None, :]
    ss = jnp.sum(acc * acc, axis=(0, 1))[None, :]
    st_ref[0] = jnp.concatenate([s, ss], axis=0)           # (2, C)


def _bn_apply_kernel(*refs, use_res):
    """Final folded BN affine (+ optional residual add)."""
    if use_res:
        y_ref, s_ref, b_ref, r_ref, o_ref = refs
        o_ref[...] = y_ref[...] * s_ref[...] + b_ref[...] + r_ref[...]
    else:
        y_ref, s_ref, b_ref, o_ref = refs
        o_ref[...] = y_ref[...] * s_ref[...] + b_ref[...]


# ----------------------------------------------------------------------------
# pallas_call wrappers
# ----------------------------------------------------------------------------
def pw_conv_stats(x2d, w_bf16):
    m, cin = x2d.shape
    cout = w_bf16.shape[1]
    tm = _pick_tile(m)
    g = m // tm
    cost = pl.CostEstimate(flops=2 * m * cin * cout, transcendentals=0,
                           bytes_accessed=4 * m * (cin + cout) + 2 * cin * cout)
    return pl.pallas_call(
        _pw_conv_stats_kernel,
        out_shape=(jax.ShapeDtypeStruct((m, cout), jnp.float32),
                   jax.ShapeDtypeStruct((g, 2, cout), jnp.float32)),
        grid=(g,),
        in_specs=[pl.BlockSpec((tm, cin), lambda i: (i, 0)),
                  pl.BlockSpec((cin, cout), lambda i: (0, 0))],
        out_specs=(pl.BlockSpec((tm, cout), lambda i: (i, 0)),
                   pl.BlockSpec((1, 2, cout), lambda i: (i, 0, 0))),
        compiler_params=_compiler_params(),
        cost_estimate=cost,
    )(x2d, w_bf16)


def pw_affine_conv_stats(x2d, scale, bias, w_bf16):
    m, cin = x2d.shape
    cout = w_bf16.shape[1]
    tm = _pick_tile(m)
    g = m // tm
    cost = pl.CostEstimate(flops=2 * m * cin * cout + 3 * m * cin,
                           transcendentals=0,
                           bytes_accessed=4 * m * (cin + cout) + 2 * cin * cout)
    return pl.pallas_call(
        _pw_affine_conv_stats_kernel,
        out_shape=(jax.ShapeDtypeStruct((m, cout), jnp.float32),
                   jax.ShapeDtypeStruct((g, 2, cout), jnp.float32)),
        grid=(g,),
        in_specs=[pl.BlockSpec((tm, cin), lambda i: (i, 0)),
                  pl.BlockSpec((1, cin), lambda i: (0, 0)),
                  pl.BlockSpec((1, cin), lambda i: (0, 0)),
                  pl.BlockSpec((cin, cout), lambda i: (0, 0))],
        out_specs=(pl.BlockSpec((tm, cout), lambda i: (i, 0)),
                   pl.BlockSpec((1, 2, cout), lambda i: (i, 0, 0))),
        compiler_params=_compiler_params(),
        cost_estimate=cost,
    )(x2d, scale, bias, w_bf16)


def dw_conv_stats(x_nhwc, w_dw, scale_prev, bias_prev, *, ksize, stride,
                  padding, pre_affine):
    n, h, w, c = x_nhwc.shape
    h_out = (h + 2 * padding - ksize) // stride + 1
    w_out = (w + 2 * padding - ksize) // stride + 1
    kern = functools.partial(_dw_conv_stats_kernel, ksize=ksize, stride=stride,
                             padding=padding, h_out=h_out, w_out=w_out,
                             pre_affine=pre_affine)
    # TODO(synk): for very large H*W, add a second grid axis over row bands
    # (with a `padding`-row halo) to keep per-step VMEM bounded on v7x (64 MiB).
    return pl.pallas_call(
        kern,
        out_shape=(jax.ShapeDtypeStruct((n, h_out, w_out, c), jnp.float32),
                   jax.ShapeDtypeStruct((n, 2, c), jnp.float32)),
        grid=(n,),
        in_specs=[pl.BlockSpec((1, h, w, c), lambda b: (b, 0, 0, 0)),
                  pl.BlockSpec((ksize, ksize, c), lambda b: (0, 0, 0)),
                  pl.BlockSpec((1, c), lambda b: (0, 0)),
                  pl.BlockSpec((1, c), lambda b: (0, 0))],
        out_specs=(pl.BlockSpec((1, h_out, w_out, c), lambda b: (b, 0, 0, 0)),
                   pl.BlockSpec((1, 2, c), lambda b: (b, 0, 0))),
        compiler_params=_compiler_params(),
    )(x_nhwc, w_dw, scale_prev, bias_prev)


def bn_apply(y2d, scale, bias, residual=None):
    m, c = y2d.shape
    tm = _pick_tile(m)
    g = m // tm
    use_res = residual is not None
    kern = functools.partial(_bn_apply_kernel, use_res=use_res)
    in_specs = [pl.BlockSpec((tm, c), lambda i: (i, 0)),
                pl.BlockSpec((1, c), lambda i: (0, 0)),
                pl.BlockSpec((1, c), lambda i: (0, 0))]
    args = [y2d, scale, bias]
    if use_res:
        in_specs.append(pl.BlockSpec((tm, c), lambda i: (i, 0)))
        args.append(residual)
    return pl.pallas_call(
        kern,
        out_shape=jax.ShapeDtypeStruct((m, c), jnp.float32),
        grid=(g,),
        in_specs=in_specs,
        out_specs=pl.BlockSpec((tm, c), lambda i: (i, 0)),
        compiler_params=_compiler_params(),
    )(*args)


# ----------------------------------------------------------------------------
# Module: InvertedResidual forward
# ----------------------------------------------------------------------------
def init_params(key, inp, oup, ksize, expand_ratio):
    hidden = inp * expand_ratio
    ks = jax.random.split(key, 9)
    p = {}
    if expand_ratio != 1:
        p["w_expand"] = 0.3 * jax.random.normal(ks[0], (inp, hidden), jnp.float32)
        p["g1"] = 1.0 + 0.1 * jax.random.normal(ks[1], (hidden,), jnp.float32)
        p["b1"] = 0.1 * jax.random.normal(ks[2], (hidden,), jnp.float32)
    p["w_dw"] = 0.3 * jax.random.normal(ks[3], (ksize, ksize, hidden), jnp.float32)
    p["g2"] = 1.0 + 0.1 * jax.random.normal(ks[4], (hidden,), jnp.float32)
    p["b2"] = 0.1 * jax.random.normal(ks[5], (hidden,), jnp.float32)
    p["w_proj"] = 0.3 * jax.random.normal(ks[6], (hidden, oup), jnp.float32)
    p["g3"] = 1.0 + 0.1 * jax.random.normal(ks[7], (oup,), jnp.float32)
    p["b3"] = 0.1 * jax.random.normal(ks[8], (oup,), jnp.float32)
    return p


def inverted_residual(x_nchw, params, *, ksize, padding, stride, expand_ratio):
    """Forward pass. Input/output are NCHW (PyTorch convention)."""
    x = jnp.transpose(x_nchw, (0, 2, 3, 1)).astype(jnp.float32)   # -> NHWC
    n, h, w, inp = x.shape
    oup = params["w_proj"].shape[1]
    hidden = params["w_dw"].shape[-1]
    use_res = (stride == 1) and (inp == oup)

    hid_p = _round_up(hidden, LANE)
    oup_p = _round_up(oup, LANE)

    m_in = n * h * w
    x_flat = x.reshape(m_in, inp)

    # 1) expansion 1x1 conv (pre-BN output + stats).  BN1+ReLU6 is applied as a
    #    folded affine fused into the depthwise kernel.
    if expand_ratio != 1:
        w_e = jnp.pad(params["w_expand"],
                      ((0, 0), (0, hid_p - hidden))).astype(jnp.bfloat16)
        y1, st1 = pw_conv_stats(x_flat, w_e)
        scale1, bias1 = _fold_bn(st1, m_in,
                                 jnp.pad(params["g1"], (0, hid_p - hidden)),
                                 jnp.pad(params["b1"], (0, hid_p - hidden)))
        dw_in = y1.reshape(n, h, w, hid_p)
        pre_affine = True
    else:
        # hidden == inp: the depthwise conv reads the raw input directly.
        dw_in = jnp.pad(x, ((0, 0), (0, 0), (0, 0), (0, hid_p - inp)))
        scale1 = jnp.ones((1, hid_p), jnp.float32)
        bias1 = jnp.zeros((1, hid_p), jnp.float32)
        pre_affine = False

    # 2) depthwise KxK conv (pre-BN output + stats); BN2+ReLU6 folded into (3).
    w_dw_p = jnp.pad(params["w_dw"], ((0, 0), (0, 0), (0, hid_p - hidden)))
    dw, st2 = dw_conv_stats(dw_in, w_dw_p, scale1, bias1, ksize=ksize,
                            stride=stride, padding=padding,
                            pre_affine=pre_affine)
    _, h_out, w_out, _ = dw.shape
    m_out = n * h_out * w_out
    scale2, bias2 = _fold_bn(st2, m_out,
                             jnp.pad(params["g2"], (0, hid_p - hidden)),
                             jnp.pad(params["b2"], (0, hid_p - hidden)))

    # 3) projection 1x1 conv, fused with BN2 affine + ReLU6 on its input.
    w_p = jnp.pad(params["w_proj"],
                  ((0, hid_p - hidden), (0, oup_p - oup))).astype(jnp.bfloat16)
    y3, st3 = pw_affine_conv_stats(dw.reshape(m_out, hid_p), scale2, bias2, w_p)
    scale3, bias3 = _fold_bn(st3, m_out,
                             jnp.pad(params["g3"], (0, oup_p - oup)),
                             jnp.pad(params["b3"], (0, oup_p - oup)))

    # 4) final BN affine (+ residual).
    if use_res:
        res = jnp.pad(x_flat, ((0, 0), (0, oup_p - inp)))
        out_p = bn_apply(y3, scale3, bias3, residual=res)
    else:
        out_p = bn_apply(y3, scale3, bias3)

    out = out_p[:, :oup].reshape(n, h_out, w_out, oup)
    return jnp.transpose(out, (0, 3, 1, 2))                # -> NCHW


# ----------------------------------------------------------------------------
# Pure-JAX reference (for verification)
# ----------------------------------------------------------------------------
def reference(x_nchw, params, *, ksize, padding, stride, expand_ratio):
    x = jnp.transpose(x_nchw, (0, 2, 3, 1)).astype(jnp.float32)

    def bn(y, g, b):
        mean = jnp.mean(y, axis=(0, 1, 2), keepdims=True)
        var = jnp.mean(jnp.square(y - mean), axis=(0, 1, 2), keepdims=True)
        return (y - mean) * lax.rsqrt(var + EPS) * g + b

    prec = lax.Precision.HIGHEST
    h = x
    if expand_ratio != 1:
        h = lax.conv_general_dilated(h, params["w_expand"][None, None], (1, 1),
                                     "VALID",
                                     dimension_numbers=("NHWC", "HWIO", "NHWC"),
                                     precision=prec)
        h = jnp.clip(bn(h, params["g1"], params["b1"]), 0.0, 6.0)
    hidden = h.shape[-1]
    h = lax.conv_general_dilated(h, params["w_dw"][:, :, None, :],
                                 (stride, stride),
                                 [(padding, padding), (padding, padding)],
                                 dimension_numbers=("NHWC", "HWIO", "NHWC"),
                                 feature_group_count=hidden, precision=prec)
    h = jnp.clip(bn(h, params["g2"], params["b2"]), 0.0, 6.0)
    h = lax.conv_general_dilated(h, params["w_proj"][None, None], (1, 1),
                                 "VALID",
                                 dimension_numbers=("NHWC", "HWIO", "NHWC"),
                                 precision=prec)
    h = bn(h, params["g3"], params["b3"])
    if stride == 1 and x.shape[-1] == h.shape[-1]:
        h = h + x
    return jnp.transpose(h, (0, 3, 1, 2))


if __name__ == "__main__":
    def _run_case(key, n, inp, hw, oup, ksize, padding, stride, expand):
        kx, kp = jax.random.split(key)
        x = jax.random.normal(kx, (n, inp, hw, hw), jnp.float32)  # NCHW input
        params = init_params(kp, inp, oup, ksize, expand)
        fwd = jax.jit(functools.partial(inverted_residual, ksize=ksize,
                                        padding=padding, stride=stride,
                                        expand_ratio=expand))
        out = jax.block_until_ready(fwd(x, params))
        ref = reference(x, params, ksize=ksize, padding=padding,
                        stride=stride, expand_ratio=expand)
        h_out = (hw + 2 * padding - ksize) // stride + 1
        assert out.shape == (n, oup, h_out, h_out), out.shape
        # Tolerance accounts for bf16 MXU operand rounding vs the f32 reference.
        assert jnp.allclose(out, ref, atol=5e-2, rtol=5e-2), "mismatch vs ref"

    key = jax.random.PRNGKey(0)
    k1, k2 = jax.random.split(key)
    # expand_ratio=2, stride=1, inp==oup -> expansion + depthwise + residual.
    _run_case(k1, 2, 4, 16, 4, 3, 1, 1, 2)
    # expand_ratio=1 branch (no expansion conv), still with residual.
    _run_case(k2, 2, 4, 16, 4, 3, 1, 1, 1)
    print("KERNEL_OK")
</pallas_src>

<mosaic_0001>
module attributes {stable_mosaic.version = 11 : i64} {
  func.func @_pw_conv_stats_kernel(%arg0: i32, %arg1: memref<256x4xf32, #tpu.memory_space<vmem>>, %arg2: memref<4x128xbf16, #tpu.memory_space<vmem>>, %arg3: memref<256x128xf32, #tpu.memory_space<vmem>>, %arg4: memref<1x2x128xf32, #tpu.memory_space<vmem>>) attributes {dimension_semantics = [#tpu.dimension_semantics<parallel>], iteration_bounds = array<i64: 2>, scalar_prefetch = 0 : i64, scratch_operands = 0 : i64, tpu.core_type = #tpu.core_type<tc>, window_params = [{transform_indices = @transform_0, window_bounds = array<i64: 256, 4>}, {pipeline_mode = #tpu.pipeline_mode<synchronous>, transform_indices = @transform_1, window_bounds = array<i64: 4, 128>}, {transform_indices = @transform_2, window_bounds = array<i64: 256, 128>}, {transform_indices = @transform_3, window_bounds = array<i64: 1, 2, 128>}]} {
    %c0 = arith.constant 0 : index
    %c0_0 = arith.constant 0 : index
    %0 = vector.load %arg1[%c0, %c0_0] : memref<256x4xf32, #tpu.memory_space<vmem>>, vector<256x4xf32>
    %1 = arith.truncf %0 : vector<256x4xf32> to vector<256x4xbf16>
    %c0_1 = arith.constant 0 : index
    %c0_2 = arith.constant 0 : index
    %2 = vector.load %arg2[%c0_1, %c0_2] : memref<4x128xbf16, #tpu.memory_space<vmem>>, vector<4x128xbf16>
    %cst = arith.constant dense<0.000000e+00> : vector<256x128xf32>
    %3 = tpu.matmul %1, %2, %cst {dimension_numbers = #tpu.dot_dimension_numbers<[1], [0], [0], [1], [0, 0, 1, 1], [], []>} : vector<256x4xbf16>, vector<4x128xbf16>, vector<256x128xf32> -> vector<256x128xf32>
    %c0_3 = arith.constant 0 : index
    %c0_4 = arith.constant 0 : index
    %4 = vector.load %arg3[%c0_3, %c0_4] : memref<256x128xf32, #tpu.memory_space<vmem>>, vector<256x128xf32>
    tpu.vector_store %arg3[%c0_3, %c0_4], %3 {strides = array<i32>} : memref<256x128xf32, #tpu.memory_space<vmem>>, vector<256x128xf32>,
    %cst_5 = arith.constant dense<0.000000e+00> : vector<128xf32>
    %5 = vector.multi_reduction <add>, %3, %cst_5 [0] : vector<256x128xf32> to vector<128xf32>
    %6 = vector.shape_cast %5 : vector<128xf32> to vector<1x128xf32>
    %7 = arith.mulf %3, %3 : vector<256x128xf32>
    %cst_6 = arith.constant dense<0.000000e+00> : vector<128xf32>
    %8 = vector.multi_reduction <add>, %7, %cst_6 [0] : vector<256x128xf32> to vector<128xf32>
    %9 = vector.shape_cast %8 : vector<128xf32> to vector<1x128xf32>
    %10 = tpu.concatenate %6, %9 in 0 : vector<1x128xf32>, vector<1x128xf32> -> vector<2x128xf32>
    %c0_7 = arith.constant 0 : index
    %c0_8 = arith.constant 0 : index
    %c0_9 = arith.constant 0 : index
    %11 = vector.load %arg4[%c0_7, %c0_8, %c0_9] : memref<1x2x128xf32, #tpu.memory_space<vmem>>, vector<1x2x128xf32>
    %12 = vector.shape_cast %11 : vector<1x2x128xf32> to vector<2x128xf32>
    %13 = vector.shape_cast %10 : vector<2x128xf32> to vector<1x2x128xf32>
    tpu.vector_store %arg4[%c0_7, %c0_8, %c0_9], %13 {strides = array<i32>} : memref<1x2x128xf32, #tpu.memory_space<vmem>>, vector<1x2x128xf32>,
    return
  }
  func.func @transform_0(%arg0: i32) -> (i32, i32) {
    %c0_i32 = arith.constant 0 : i32
    %c0_i32_0 = arith.constant 0 : i32
    return %arg0, %c0_i32 : i32, i32
  }
  func.func @transform_1(%arg0: i32) -> (i32, i32) {
    %c0_i32 = arith.constant 0 : i32
    %c0_i32_0 = arith.constant 0 : i32
    %c0_i32_1 = arith.constant 0 : i32
    return %c0_i32, %c0_i32_0 : i32, i32
  }
  func.func @transform_2(%arg0: i32) -> (i32, i32) {
    %c0_i32 = arith.constant 0 : i32
    %c0_i32_0 = arith.constant 0 : i32
    return %arg0, %c0_i32 : i32, i32
  }
  func.func @transform_3(%arg0: i32) -> (i32, i32, i32) {
    %c0_i32 = arith.constant 0 : i32
    %c0_i32_0 = arith.constant 0 : i32
    %c0_i32_1 = arith.constant 0 : i32
    return %arg0, %c0_i32, %c0_i32_0 : i32, i32, i32
  }
}

module attributes {stable_mosaic.version = 11 : i64} {
  func.func @_dw_conv_stats_kernel(%arg0: i32, %arg1: memref<1x16x16x128xf32, #tpu.memory_space<vmem>>, %arg2: memref<3x3x128xf32, #tpu.memory_space<vmem>>, %arg3: memref<1x128xf32, #tpu.memory_space<vmem>>, %arg4: memref<1x128xf32, #tpu.memory_space<vmem>>, %arg5: memref<1x16x16x128xf32, #tpu.memory_space<vmem>>, %arg6: memref<1x2x128xf32, #tpu.memory_space<vmem>>) attributes {dimension_semantics = [#tpu.dimension_semantics<parallel>], iteration_bounds = array<i64: 2>, scalar_prefetch = 0 : i64, scratch_operands = 0 : i64, tpu.core_type = #tpu.core_type<tc>, window_params = [{transform_indices = @transform_0, window_bounds = array<i64: 1, 16, 16, 128>}, {pipeline_mode = #tpu.pipeline_mode<synchronous>, transform_indices = @transform_1, window_bounds = array<i64: 3, 3, 128>}, {pipeline_mode = #tpu.pipeline_mode<synchronous>, transform_indices = @transform_2, window_bounds = array<i64: 1, 128>}, {pipeline_mode = #tpu.pipeline_mode<synchronous>, transform_indices = @transform_3, window_bounds = array<i64: 1, 128>}, {transform_indices = @transform_4, window_bounds = array<i64: 1, 16, 16, 128>}, {transform_indices = @transform_5, window_bounds = array<i64: 1, 2, 128>}]} {
    %c0 = arith.constant 0 : index
    %c0_0 = arith.constant 0 : index
    %c0_1 = arith.constant 0 : index
    %c0_2 = arith.constant 0 : index
    %0 = vector.load %arg1[%c0, %c0_0, %c0_1, %c0_2] : memref<1x16x16x128xf32, #tpu.memory_space<vmem>>, vector<1x16x16x128xf32>
    %1 = vector.shape_cast %0 : vector<1x16x16x128xf32> to vector<16x16x128xf32>
    %c0_3 = arith.constant 0 : index
    %c0_4 = arith.constant 0 : index
    %2 = vector.load %arg3[%c0_3, %c0_4] : memref<1x128xf32, #tpu.memory_space<vmem>>, vector<1x128xf32>
    %3 = vector.shape_cast %2 : vector<1x128xf32> to vector<1x1x128xf32>
    %c0_5 = arith.constant 0 : index
    %c0_6 = arith.constant 0 : index
    %4 = vector.load %arg4[%c0_5, %c0_6] : memref<1x128xf32, #tpu.memory_space<vmem>>, vector<1x128xf32>
    %5 = vector.shape_cast %4 : vector<1x128xf32> to vector<1x1x128xf32>
    %6 = vector.broadcast %3 : vector<1x1x128xf32> to vector<16x16x128xf32>
    %7 = arith.mulf %1, %6 : vector<16x16x128xf32>
    %8 = vector.broadcast %5 : vector<1x1x128xf32> to vector<16x16x128xf32>
    %9 = arith.addf %7, %8 : vector<16x16x128xf32>
    %cst = arith.constant 0.000000e+00 : f32
    %cst_7 = arith.constant 6.000000e+00 : f32
    %10 = vector.broadcast %cst : f32 to vector<16x16x128xf32>
    %11 = arith.maximumf %10, %9 : vector<16x16x128xf32>
    %12 = vector.broadcast %cst_7 : f32 to vector<16x16x128xf32>
    %13 = arith.minimumf %12, %11 : vector<16x16x128xf32>
    %cst_8 = arith.constant 0.000000e+00 : f32
    %14 = vector.broadcast %cst_8 : f32 to vector<1x16x128xf32>
    %15 = tpu.concatenate %14, %13, %14 in 0 : vector<1x16x128xf32>, vector<16x16x128xf32>, vector<1x16x128xf32> -> vector<18x16x128xf32>
    %cst_9 = arith.constant 0.000000e+00 : f32
    %16 = vector.broadcast %cst_9 : f32 to vector<18x1x128xf32>
    %17 = tpu.concatenate %16, %15, %16 in 1 : vector<18x1x128xf32>, vector<18x16x128xf32>, vector<18x1x128xf32> -> vector<18x18x128xf32>
    %c0_10 = arith.constant 0 : index
    %c0_11 = arith.constant 0 : index
    %c0_12 = arith.constant 0 : index
    %18 = vector.load %arg2[%c0_10, %c0_11, %c0_12] : memref<3x3x128xf32, #tpu.memory_space<vmem>>, vector<3x3x128xf32>
    %19 = vector.extract_strided_slice %17 {offsets = [0, 0, 0], sizes = [16, 16, 128], strides = [1, 1, 1]} : vector<18x18x128xf32> to vector<16x16x128xf32>
    %20 = vector.extract_strided_slice %18 {offsets = [0, 0, 0], sizes = [1, 1, 128], strides = [1, 1, 1]} : vector<3x3x128xf32> to vector<1x1x128xf32>
    %21 = vector.shape_cast %20 : vector<1x1x128xf32> to vector<128xf32>
    %22 = vector.shape_cast %21 : vector<128xf32> to vector<1x1x128xf32>
    %23 = vector.broadcast %22 : vector<1x1x128xf32> to vector<16x16x128xf32>
    %24 = arith.mulf %19, %23 : vector<16x16x128xf32>
    %25 = vector.extract_strided_slice %17 {offsets = [0, 1, 0], sizes = [16, 16, 128], strides = [1, 1, 1]} : vector<18x18x128xf32> to vector<16x16x128xf32>
    %26 = vector.extract_strided_slice %18 {offsets = [0, 1, 0], sizes = [1, 1, 128], strides = [1, 1, 1]} : vector<3x3x128xf32> to vector<1x1x128xf32>
    %27 = vector.shape_cast %26 : vector<1x1x128xf32> to vector<128xf32>
    %28 = vector.shape_cast %27 : vector<128xf32> to vector<1x1x128xf32>
    %29 = vector.broadcast %28 : vector<1x1x128xf32> to vector<16x16x128xf32>
    %30 = arith.mulf %25, %29 : vector<16x16x128xf32>
    %31 = arith.addf %24, %30 : vector<16x16x128xf32>
    %32 = vector.extract_strided_slice %17 {offsets = [0, 2, 0], sizes = [16, 16, 128], strides = [1, 1, 1]} : vector<18x18x128xf32> to vector<16x16x128xf32>
    %33 = vector.extract_strided_slice %18 {offsets = [0, 2, 0], sizes = [1, 1, 128], strides = [1, 1, 1]} : vector<3x3x128xf32> to vector<1x1x128xf32>
    %34 = vector.shape_cast %33 : vector<1x1x128xf32> to vector<128xf32>
    %35 = vector.shape_cast %34 : vector<128xf32> to vector<1x1x128xf32>
    %36 = vector.broadcast %35 : vector<1x1x128xf32> to vector<16x16x128xf32>
    %37 = arith.mulf %32, %36 : vector<16x16x128xf32>
    %38 = arith.addf %31, %37 : vector<16x16x128xf32>
    %39 = vector.extract_strided_slice %17 {offsets = [1, 0, 0], sizes = [16, 16, 128], strides = [1, 1, 1]} : vector<18x18x128xf32> to vector<16x16x128xf32>
    %40 = vector.extract_strided_slice %18 {offsets = [1, 0, 0], sizes = [1, 1, 128], strides = [1, 1, 1]} : vector<3x3x128xf32> to vector<1x1x128xf32>
    %41 = vector.shape_cast %40 : vector<1x1x128xf32> to vector<128xf32>
    %42 = vector.shape_cast %41 : vector<128xf32> to vector<1x1x128xf32>
    %43 = vector.broadcast %42 : vector<1x1x128xf32> to vector<16x16x128xf32>
    %44 = arith.mulf %39, %43 : vector<16x16x128xf32>
    %45 = arith.addf %38, %44 : vector<16x16x128xf32>
    %46 = vector.extract_strided_slice %17 {offsets = [1, 1, 0], sizes = [16, 16, 128], strides = [1, 1, 1]} : vector<18x18x128xf32> to vector<16x16x128xf32>
    %47 = vector.extract_strided_slice %18 {offsets = [1, 1, 0], sizes = [1, 1, 128], strides = [1, 1, 1]} : vector<3x3x128xf32> to vector<1x1x128xf32>
    %48 = vector.shape_cast %47 : vector<1x1x128xf32> to vector<128xf32>
    %49 = vector.shape_cast %48 : vector<128xf32> to vector<1x1x128xf32>
    %50 = vector.broadcast %49 : vector<1x1x128xf32> to vector<16x16x128xf32>
    %51 = arith.mulf %46, %50 : vector<16x16x128xf32>
    %52 = arith.addf %45, %51 : vector<16x16x128xf32>
    %53 = vector.extract_strided_slice %17 {offsets = [1, 2, 0], sizes = [16, 16, 128], strides = [1, 1, 1]} : vector<18x18x128xf32> to vector<16x16x128xf32>
    %54 = vector.extract_strided_slice %18 {offsets = [1, 2, 0], sizes = [1, 1, 128], strides = [1, 1, 1]} : vector<3x3x128xf32> to vector<1x1x128xf32>
    %55 = vector.shape_cast %54 : vector<1x1x128xf32> to vector<128xf32>
    %56 = vector.shape_cast %55 : vector<128xf32> to vector<1x1x128xf32>
    %57 = vector.broadcast %56 : vector<1x1x128xf32> to vector<16x16x128xf32>
    %58 = arith.mulf %53, %57 : vector<16x16x128xf32>
    %59 = arith.addf %52, %58 : vector<16x16x128xf32>
    %60 = vector.extract_strided_slice %17 {offsets = [2, 0, 0], sizes = [16, 16, 128], strides = [1, 1, 1]} : vector<18x18x128xf32> to vector<16x16x128xf32>
    %61 = vector.extract_strided_slice %18 {offsets = [2, 0, 0], sizes = [1, 1, 128], strides = [1, 1, 1]} : vector<3x3x128xf32> to vector<1x1x128xf32>
    %62 = vector.shape_cast %61 : vector<1x1x128xf32> to vector<128xf32>
    %63 = vector.shape_cast %62 : vector<128xf32> to vector<1x1x128xf32>
    %64 = vector.broadcast %63 : vector<1x1x128xf32> to vector<16x16x128xf32>
    %65 = arith.mulf %60, %64 : vector<16x16x128xf32>
    %66 = arith.addf %59, %65 : vector<16x16x128xf32>
    %67 = vector.extract_strided_slice %17 {offsets = [2, 1, 0], sizes = [16, 16, 128], strides = [1, 1, 1]} : vector<18x18x128xf32> to vector<16x16x128xf32>
    %68 = vector.extract_strided_slice %18 {offsets = [2, 1, 0], sizes = [1, 1, 128], strides = [1, 1, 1]} : vector<3x3x128xf32> to vector<1x1x128xf32>
    %69 = vector.shape_cast %68 : vector<1x1x128xf32> to vector<128xf32>
    %70 = vector.shape_cast %69 : vector<128xf32> to vector<1x1x128xf32>
    %71 = vector.broadcast %70 : vector<1x1x128xf32> to vector<16x16x128xf32>
    %72 = arith.mulf %67, %71 : vector<16x16x128xf32>
    %73 = arith.addf %66, %72 : vector<16x16x128xf32>
    %74 = vector.extract_strided_slice %17 {offsets = [2, 2, 0], sizes = [16, 16, 128], strides = [1, 1, 1]} : vector<18x18x128xf32> to vector<16x16x128xf32>
    %75 = vector.extract_strided_slice %18 {offsets = [2, 2, 0], sizes = [1, 1, 128], strides = [1, 1, 1]} : vector<3x3x128xf32> to vector<1x1x128xf32>
    %76 = vector.shape_cast %75 : vector<1x1x128xf32> to vector<128xf32>
    %77 = vector.shape_cast %76 : vector<128xf32> to vector<1x1x128xf32>
    %78 = vector.broadcast %77 : vector<1x1x128xf32> to vector<16x16x128xf32>
    %79 = arith.mulf %74, %78 : vector<16x16x128xf32>
    %80 = arith.addf %73, %79 : vector<16x16x128xf32>
    %c0_13 = arith.constant 0 : index
    %c0_14 = arith.constant 0 : index
    %c0_15 = arith.constant 0 : index
    %c0_16 = arith.constant 0 : index
    %81 = vector.load %arg5[%c0_13, %c0_14, %c0_15, %c0_16] : memref<1x16x16x128xf32, #tpu.memory_space<vmem>>, vector<1x16x16x128xf32>
    %82 = vector.shape_cast %81 : vector<1x16x16x128xf32> to vector<16x16x128xf32>
    %83 = vector.shape_cast %80 : vector<16x16x128xf32> to vector<1x16x16x128xf32>
    tpu.vector_store %arg5[%c0_13, %c0_14, %c0_15, %c0_16], %83 {strides = array<i32>} : memref<1x16x16x128xf32, #tpu.memory_space<vmem>>, vector<1x16x16x128xf32>,
    %cst_17 = arith.constant dense<0.000000e+00> : vector<128xf32>
    %84 = vector.multi_reduction <add>, %80, %cst_17 [0, 1] : vector<16x16x128xf32> to vector<128xf32>
    %85 = vector.shape_cast %84 : vector<128xf32> to vector<1x128xf32>
    %86 = arith.mulf %80, %80 : vector<16x16x128xf32>
    %cst_18 = arith.constant dense<0.000000e+00> : vector<128xf32>
    %87 = vector.multi_reduction <add>, %86, %cst_18 [0, 1] : vector<16x16x128xf32> to vector<128xf32>
    %88 = vector.shape_cast %87 : vector<128xf32> to vector<1x128xf32>
    %89 = tpu.concatenate %85, %88 in 0 : vector<1x128xf32>, vector<1x128xf32> -> vector<2x128xf32>
    %c0_19 = arith.constant 0 : index
    %c0_20 = arith.constant 0 : index
    %c0_21 = arith.constant 0 : index
    %90 = vector.load %arg6[%c0_19, %c0_20, %c0_21] : memref<1x2x128xf32, #tpu.memory_space<vmem>>, vector<1x2x128xf32>
    %91 = vector.shape_cast %90 : vector<1x2x128xf32> to vector<2x128xf32>
    %92 = vector.shape_cast %89 : vector<2x128xf32> to vector<1x2x128xf32>
    tpu.vector_store %arg6[%c0_19, %c0_20, %c0_21], %92 {strides = array<i32>} : memref<1x2x128xf32, #tpu.memory_space<vmem>>, vector<1x2x128xf32>,
    return
  }
  func.func @transform_0(%arg0: i32) -> (i32, i32, i32, i32) {
    %c0_i32 = arith.constant 0 : i32
    %c0_i32_0 = arith.constant 0 : i32
    %c0_i32_1 = arith.constant 0 : i32
    %c0_i32_2 = arith.constant 0 : i32
    return %arg0, %c0_i32, %c0_i32_0, %c0_i32_1 : i32, i32, i32, i32
  }
  func.func @transform_1(%arg0: i32) -> (i32, i32, i32) {
    %c0_i32 = arith.constant 0 : i32
    %c0_i32_0 = arith.constant 0 : i32
    %c0_i32_1 = arith.constant 0 : i32
    %c0_i32_2 = arith.constant 0 : i32
    return %c0_i32, %c0_i32_0, %c0_i32_1 : i32, i32, i32
  }
  func.func @transform_2(%arg0: i32) -> (i32, i32) {
    %c0_i32 = arith.constant 0 : i32
    %c0_i32_0 = arith.constant 0 : i32
    %c0_i32_1 = arith.constant 0 : i32
    return %c0_i32, %c0_i32_0 : i32, i32
  }
  func.func @transform_3(%arg0: i32) -> (i32, i32) {
    %c0_i32 = arith.constant 0 : i32
    %c0_i32_0 = arith.constant 0 : i32
    %c0_i32_1 = arith.constant 0 : i32
    return %c0_i32, %c0_i32_0 : i32, i32
  }
  func.func @transform_4(%arg0: i32) -> (i32, i32, i32, i32) {
    %c0_i32 = arith.constant 0 : i32
    %c0_i32_0 = arith.constant 0 : i32
    %c0_i32_1 = arith.constant 0 : i32
    %c0_i32_2 = arith.constant 0 : i32
    return %arg0, %c0_i32, %c0_i32_0, %c0_i32_1 : i32, i32, i32, i32
  }
  func.func @transform_5(%arg0: i32) -> (i32, i32, i32) {
    %c0_i32 = arith.constant 0 : i32
    %c0_i32_0 = arith.constant 0 : i32
    %c0_i32_1 = arith.constant 0 : i32
    return %arg0, %c0_i32, %c0_i32_0 : i32, i32, i32
  }
}

module attributes {stable_mosaic.version = 11 : i64} {
  func.func @_pw_affine_conv_stats_kernel(%arg0: i32, %arg1: memref<256x128xf32, #tpu.memory_space<vmem>>, %arg2: memref<1x128xf32, #tpu.memory_space<vmem>>, %arg3: memref<1x128xf32, #tpu.memory_space<vmem>>, %arg4: memref<128x128xbf16, #tpu.memory_space<vmem>>, %arg5: memref<256x128xf32, #tpu.memory_space<vmem>>, %arg6: memref<1x2x128xf32, #tpu.memory_space<vmem>>) attributes {dimension_semantics = [#tpu.dimension_semantics<parallel>], iteration_bounds = array<i64: 2>, scalar_prefetch = 0 : i64, scratch_operands = 0 : i64, tpu.core_type = #tpu.core_type<tc>, window_params = [{transform_indices = @transform_0, window_bounds = array<i64: 256, 128>}, {pipeline_mode = #tpu.pipeline_mode<synchronous>, transform_indices = @transform_1, window_bounds = array<i64: 1, 128>}, {pipeline_mode = #tpu.pipeline_mode<synchronous>, transform_indices = @transform_2, window_bounds = array<i64: 1, 128>}, {pipeline_mode = #tpu.pipeline_mode<synchronous>, transform_indices = @transform_3, window_bounds = array<i64: 128, 128>}, {transform_indices = @transform_4, window_bounds = array<i64: 256, 128>}, {transform_indices = @transform_5, window_bounds = array<i64: 1, 2, 128>}]} {
    %c0 = arith.constant 0 : index
    %c0_0 = arith.constant 0 : index
    %0 = vector.load %arg1[%c0, %c0_0] : memref<256x128xf32, #tpu.memory_space<vmem>>, vector<256x128xf32>
    %c0_1 = arith.constant 0 : index
    %c0_2 = arith.constant 0 : index
    %1 = vector.load %arg2[%c0_1, %c0_2] : memref<1x128xf32, #tpu.memory_space<vmem>>, vector<1x128xf32>
    %2 = vector.broadcast %1 : vector<1x128xf32> to vector<256x128xf32>
    %3 = arith.mulf %0, %2 : vector<256x128xf32>
    %c0_3 = arith.constant 0 : index
    %c0_4 = arith.constant 0 : index
    %4 = vector.load %arg3[%c0_3, %c0_4] : memref<1x128xf32, #tpu.memory_space<vmem>>, vector<1x128xf32>
    %5 = vector.broadcast %4 : vector<1x128xf32> to vector<256x128xf32>
    %6 = arith.addf %3, %5 : vector<256x128xf32>
    %cst = arith.constant 0.000000e+00 : f32
    %cst_5 = arith.constant 6.000000e+00 : f32
    %7 = vector.broadcast %cst : f32 to vector<256x128xf32>
    %8 = arith.maximumf %7, %6 : vector<256x128xf32>
    %9 = vector.broadcast %cst_5 : f32 to vector<256x128xf32>
    %10 = arith.minimumf %9, %8 : vector<256x128xf32>
    %11 = arith.truncf %10 : vector<256x128xf32> to vector<256x128xbf16>
    %c0_6 = arith.constant 0 : index
    %c0_7 = arith.constant 0 : index
    %12 = vector.load %arg4[%c0_6, %c0_7] : memref<128x128xbf16, #tpu.memory_space<vmem>>, vector<128x128xbf16>
    %cst_8 = arith.constant dense<0.000000e+00> : vector<256x128xf32>
    %13 = tpu.matmul %11, %12, %cst_8 {dimension_numbers = #tpu.dot_dimension_numbers<[1], [0], [0], [1], [0, 0, 1, 1], [], []>} : vector<256x128xbf16>, vector<128x128xbf16>, vector<256x128xf32> -> vector<256x128xf32>
    %c0_9 = arith.constant 0 : index
    %c0_10 = arith.constant 0 : index
    %14 = vector.load %arg5[%c0_9, %c0_10] : memref<256x128xf32, #tpu.memory_space<vmem>>, vector<256x128xf32>
    tpu.vector_store %arg5[%c0_9, %c0_10], %13 {strides = array<i32>} : memref<256x128xf32, #tpu.memory_space<vmem>>, vector<256x128xf32>,
    %cst_11 = arith.constant dense<0.000000e+00> : vector<128xf32>
    %15 = vector.multi_reduction <add>, %13, %cst_11 [0] : vector<256x128xf32> to vector<128xf32>
    %16 = vector.shape_cast %15 : vector<128xf32> to vector<1x128xf32>
    %17 = arith.mulf %13, %13 : vector<256x128xf32>
    %cst_12 = arith.constant dense<0.000000e+00> : vector<128xf32>
    %18 = vector.multi_reduction <add>, %17, %cst_12 [0] : vector<256x128xf32> to vector<128xf32>
    %19 = vector.shape_cast %18 : vector<128xf32> to vector<1x128xf32>
    %20 = tpu.concatenate %16, %19 in 0 : vector<1x128xf32>, vector<1x128xf32> -> vector<2x128xf32>
    %c0_13 = arith.constant 0 : index
    %c0_14 = arith.constant 0 : index
    %c0_15 = arith.constant 0 : index
    %21 = vector.load %arg6[%c0_13, %c0_14, %c0_15] : memref<1x2x128xf32, #tpu.memory_space<vmem>>, vector<1x2x128xf32>
    %22 = vector.shape_cast %21 : vector<1x2x128xf32> to vector<2x128xf32>
    %23 = vector.shape_cast %20 : vector<2x128xf32> to vector<1x2x128xf32>
    tpu.vector_store %arg6[%c0_13, %c0_14, %c0_15], %23 {strides = array<i32>} : memref<1x2x128xf32, #tpu.memory_space<vmem>>, vector<1x2x128xf32>,
    return
  }
  func.func @transform_0(%arg0: i32) -> (i32, i32) {
    %c0_i32 = arith.constant 0 : i32
    %c0_i32_0 = arith.constant 0 : i32
    return %arg0, %c0_i32 : i32, i32
  }
  func.func @transform_1(%arg0: i32) -> (i32, i32) {
    %c0_i32 = arith.constant 0 : i32
    %c0_i32_0 = arith.constant 0 : i32
    %c0_i32_1 = arith.constant 0 : i32
    return %c0_i32, %c0_i32_0 : i32, i32
  }
  func.func @transform_2(%arg0: i32) -> (i32, i32) {
    %c0_i32 = arith.constant 0 : i32
    %c0_i32_0 = arith.constant 0 : i32
    %c0_i32_1 = arith.constant 0 : i32
    return %c0_i32, %c0_i32_0 : i32, i32
  }
  func.func @transform_3(%arg0: i32) -> (i32, i32) {
    %c0_i32 = arith.constant 0 : i32
    %c0_i32_0 = arith.constant 0 : i32
    %c0_i32_1 = arith.constant 0 : i32
    return %c0_i32, %c0_i32_0 : i32, i32
  }
  func.func @transform_4(%arg0: i32) -> (i32, i32) {
    %c0_i32 = arith.constant 0 : i32
    %c0_i32_0 = arith.constant 0 : i32
    return %arg0, %c0_i32 : i32, i32
  }
  func.func @transform_5(%arg0: i32) -> (i32, i32, i32) {
    %c0_i32 = arith.constant 0 : i32
    %c0_i32_0 = arith.constant 0 : i32
    %c0_i32_1 = arith.constant 0 : i32
    return %arg0, %c0_i32, %c0_i32_0 : i32, i32, i32
  }
}

module attributes {stable_mosaic.version = 11 : i64} {
  func.func @_bn_apply_kernel(%arg0: i32, %arg1: memref<256x128xf32, #tpu.memory_space<vmem>>, %arg2: memref<1x128xf32, #tpu.memory_space<vmem>>, %arg3: memref<1x128xf32, #tpu.memory_space<vmem>>, %arg4: memref<256x128xf32, #tpu.memory_space<vmem>>, %arg5: memref<256x128xf32, #tpu.memory_space<vmem>>) attributes {dimension_semantics = [#tpu.dimension_semantics<parallel>], iteration_bounds = array<i64: 2>, scalar_prefetch = 0 : i64, scratch_operands = 0 : i64, tpu.core_type = #tpu.core_type<tc>, window_params = [{transform_indices = @transform_0, window_bounds = array<i64: 256, 128>}, {pipeline_mode = #tpu.pipeline_mode<synchronous>, transform_indices = @transform_1, window_bounds = array<i64: 1, 128>}, {pipeline_mode = #tpu.pipeline_mode<synchronous>, transform_indices = @transform_2, window_bounds = array<i64: 1, 128>}, {transform_indices = @transform_3, window_bounds = array<i64: 256, 128>}, {transform_indices = @transform_4, window_bounds = array<i64: 256, 128>}]} {
    %c0 = arith.constant 0 : index
    %c0_0 = arith.constant 0 : index
    %0 = vector.load %arg1[%c0, %c0_0] : memref<256x128xf32, #tpu.memory_space<vmem>>, vector<256x128xf32>
    %c0_1 = arith.constant 0 : index
    %c0_2 = arith.constant 0 : index
    %1 = vector.load %arg2[%c0_1, %c0_2] : memref<1x128xf32, #tpu.memory_space<vmem>>, vector<1x128xf32>
    %2 = vector.broadcast %1 : vector<1x128xf32> to vector<256x128xf32>
    %3 = arith.mulf %0, %2 : vector<256x128xf32>
    %c0_3 = arith.constant 0 : index
    %c0_4 = arith.constant 0 : index
    %4 = vector.load %arg3[%c0_3, %c0_4] : memref<1x128xf32, #tpu.memory_space<vmem>>, vector<1x128xf32>
    %5 = vector.broadcast %4 : vector<1x128xf32> to vector<256x128xf32>
    %6 = arith.addf %3, %5 : vector<256x128xf32>
    %c0_5 = arith.constant 0 : index
    %c0_6 = arith.constant 0 : index
    %7 = vector.load %arg4[%c0_5, %c0_6] : memref<256x128xf32, #tpu.memory_space<vmem>>, vector<256x128xf32>
    %8 = arith.addf %6, %7 : vector<256x128xf32>
    %c0_7 = arith.constant 0 : index
    %c0_8 = arith.constant 0 : index
    %9 = vector.load %arg5[%c0_7, %c0_8] : memref<256x128xf32, #tpu.memory_space<vmem>>, vector<256x128xf32>
    tpu.vector_store %arg5[%c0_7, %c0_8], %8 {strides = array<i32>} : memref<256x128xf32, #tpu.memory_space<vmem>>, vector<256x128xf32>,
    return
  }
  func.func @transform_0(%arg0: i32) -> (i32, i32) {
    %c0_i32 = arith.constant 0 : i32
    %c0_i32_0 = arith.constant 0 : i32
    return %arg0, %c0_i32 : i32, i32
  }
  func.func @transform_1(%arg0: i32) -> (i32, i32) {
    %c0_i32 = arith.constant 0 : i32
    %c0_i32_0 = arith.constant 0 : i32
    %c0_i32_1 = arith.constant 0 : i32
    return %c0_i32, %c0_i32_0 : i32, i32
  }
  func.func @transform_2(%arg0: i32) -> (i32, i32) {
    %c0_i32 = arith.constant 0 : i32
    %c0_i32_0 = arith.constant 0 : i32
    %c0_i32_1 = arith.constant 0 : i32
    return %c0_i32, %c0_i32_0 : i32, i32
  }
  func.func @transform_3(%arg0: i32) -> (i32, i32) {
    %c0_i32 = arith.constant 0 : i32
    %c0_i32_0 = arith.constant 0 : i32
    return %arg0, %c0_i32 : i32, i32
  }
  func.func @transform_4(%arg0: i32) -> (i32, i32) {
    %c0_i32 = arith.constant 0 : i32
    %c0_i32_0 = arith.constant 0 : i32
    return %arg0, %c0_i32 : i32, i32
  }
}

</mosaic_0001>

<llo_original>
// kernel: inverted_residual.4
$region0: #{inverted_residual.4}
  #allocation0 [shape = 'u32[]', space=smem, size = 0x4, offset = 0x4, fixed_abs, tag = 'smem constant byte address 0x4 - core index']
  #allocation1 [shape = 'u32[72,128]{1,0:T(1,128)}', space=vmem, size = 0x9000, scoped, tag = 'internal scratch']
  %s0 = inlined_call_operand.vmem [shape: f32[512,4], index: 0, kind: input, shape index: {}]
  %s1 = inlined_call_operand.vmem [shape: bf16[4,128], index: 1, kind: input, shape index: {}]
  %s2 = inlined_call_operand.vmem [shape: f32[512,128], index: 2, kind: output, shape index: {0}]
  %s3 = inlined_call_operand.vmem [shape: f32[2,2,128], index: 3, kind: output, shape index: {1}]
  %4 = xla_tuple %s2, %s3
  %s5 = sld [smem:[#allocation0]]
  $region49: #{inverted_residual.4} parent=0
    _
  %s7 = ssub.s32 1, %s5
  %s8 = scalar_select 0, %s7, %s5
  loop: start=0, step=1, limit=4
  $region2: #{inverted_residual.4} parent=0 // loop_pre_header
    _
  $region3: #{inverted_residual.4} parent=0 // loop_header
    %s10 = sphi 0, %s14
    %p11 = scmp.ge.s32.totalorder %s10, 4
    %s20 = sphi 0, %s22
    %s23 = sphi 0, %s20
    %s24 = sphi 0, %s23
    %s40 = sphi 0, %s24
    %s44 = sphi 0, %s44
    %s46 = sphi 0, %s44
    %s47 = sphi 0, %s46
    %s61 = sphi 0, %s47
    %s67 = sphi 0, %s69
    %s70 = sphi 0, %s67
    %s71 = sphi 0, %s70
    %s87 = sphi 0, %s71
    %s93 = sphi 0, %s95
    %s96 = sphi 0, %s93
    %s97 = sphi 0, %s96
    %s113 = sphi 0, %s97
  $region4: #{inverted_residual.4} parent=0 // loop_header_branch
    %13 = sbr.rel (%p11) target = $region8
  $region5: #{inverted_residual.4} parent=0 // loop_body
    %s15 = ssub.s32 %s10, 1
    %s16 = ssub.s32 %s10, 2
    %s17 = sadd.s32 %s10, 1
    %s18 = ssub.s32 %s10, %s17
    %p19 = scmp.eq.s32.totalorder %s18, 0
    %s21 = sadd.s32 %s20, 1
    %s22 = scalar_select %p19, %s20, %s21
    %p25 = pneg %p19
    %p26 = scmp.eq.s32.totalorder %s10, 1
    %p27 = por %p25, %p26
    %p28 = scmp.ne.s32.totalorder %s20, %s23
    %p29 = scmp.eq.s32.totalorder %s10, 0
    %p30 = por %p28, %p29
    %p31 = scmp.ne.s32.totalorder %s20, %s23
    %p32 = scmp.eq.s32.totalorder %s15, 1
    %p33 = por %p31, %p32
    %p34 = scmp.ne.s32.totalorder %s23, %s24
    %p35 = scmp.eq.s32.totalorder %s15, 0
    %p36 = por %p34, %p35
    %p37 = scmp.ne.s32.totalorder %s23, %s24
    %p38 = scmp.eq.s32.totalorder %s16, 1
    %p39 = por %p37, %p38
    %p41 = scmp.ne.s32.totalorder %s24, %s40
    %p42 = scmp.eq.s32.totalorder %s16, 0
    %p43 = por %p41, %p42
    %s45 = sadd.s32 %s44, 1
    %p48 = scmp.eq.s32.totalorder %s10, 1
    %p49 = scmp.ne.s32.totalorder %s44, %s46
    %p50 = scmp.eq.s32.totalorder %s10, 0
    %p51 = por %p49, %p50
    %p52 = scmp.ne.s32.totalorder %s44, %s46
    %p53 = scmp.eq.s32.totalorder %s15, 1
    %p54 = por %p52, %p53
    %p55 = scmp.ne.s32.totalorder %s46, %s47
    %p56 = scmp.eq.s32.totalorder %s15, 0
    %p57 = por %p55, %p56
    %p58 = scmp.ne.s32.totalorder %s46, %s47
    %p59 = scmp.eq.s32.totalorder %s16, 1
    %p60 = por %p58, %p59
    %p62 = scmp.ne.s32.totalorder %s47, %s61
    %p63 = scmp.eq.s32.totalorder %s16, 0
    %p64 = por %p62, %p63
    %s65 = ssub.s32 %s10, %s17
    %p66 = scmp.eq.s32.totalorder %s65, 0
    %s68 = sadd.s32 %s67, 1
    %s69 = scalar_select %p66, %s67, %s68
    %p72 = pneg %p66
    %p73 = scmp.eq.s32.totalorder %s10, 1
    %p74 = por %p72, %p73
    %p75 = scmp.ne.s32.totalorder %s67, %s70
    %p76 = scmp.eq.s32.totalorder %s10, 0
    %p77 = por %p75, %p76
    %p78 = scmp.ne.s32.totalorder %s67, %s70
    %p79 = scmp.eq.s32.totalorder %s15, 1
    %p80 = por %p78, %p79
    %p81 = scmp.ne.s32.totalorder %s70, %s71
    %p82 = scmp.eq.s32.totalorder %s15, 0
    %p83 = por %p81, %p82
    %p84 = scmp.ne.s32.totalorder %s70, %s71
    %p85 = scmp.eq.s32.totalorder %s16, 1
    %p86 = por %p84, %p85
    %p88 = scmp.ne.s32.totalorder %s71, %s87
    %p89 = scmp.eq.s32.totalorder %s16, 0
    %p90 = por %p88, %p89
    %s91 = ssub.s32 %s10, %s17
    %p92 = scmp.eq.s32.totalorder %s91, 0
    %s94 = sadd.s32 %s93, 1
    %s95 = scalar_select %p92, %s93, %s94
    %p98 = pneg %p92
    %p99 = scmp.eq.s32.totalorder %s10, 1
    %p100 = por %p98, %p99
    %p101 = scmp.ne.s32.totalorder %s93, %s96
    %p102 = scmp.eq.s32.totalorder %s10, 0
    %p103 = por %p101, %p102
    %p104 = scmp.ne.s32.totalorder %s93, %s96
    %p105 = scmp.eq.s32.totalorder %s15, 1
    %p106 = por %p104, %p105
    %p107 = scmp.ne.s32.totalorder %s96, %s97
    %p108 = scmp.eq.s32.totalorder %s15, 0
    %p109 = por %p107, %p108
    %p110 = scmp.ne.s32.totalorder %s96, %s97
    %p111 = scmp.eq.s32.totalorder %s16, 1
    %p112 = por %p110, %p111
    %p114 = scmp.ne.s32.totalorder %s97, %s113
    %p115 = scmp.eq.s32.totalorder %s16, 0
    %p116 = por %p114, %p115
    %p117 = scmp.le.s32.totalorder 1, %s10
    %p118 = scmp.lt.s32.totalorder %s10, 3
    %p119 = pnand %p117, %p118
    %p120 = pneg %p119
    // Predicated region
    $region9: #{inverted_residual.4} parent=5 // pred_check
      _
    $region10: #{inverted_residual.4} parent=5 // pred_check_branch
      %122 = sbr.rel (%p119) target = $region12
    $region11: #{inverted_residual.4} parent=5 // pred_region
      %s123 = ssub.s32 %s10, 1
      // Predicated region
      $region13: #{inverted_residual.4} parent=11 // pred_check
        %p124 = pneg %p57
      $region14: #{inverted_residual.4} parent=11 // pred_check_branch
        %126 = sbr.rel (%p124) target = $region16
      $region15: #{inverted_residual.4} parent=11 // pred_region
        _
      $region16: #{inverted_residual.4} parent=11 // pred_fallthru
        _
    $region12: #{inverted_residual.4} parent=5 // pred_fallthru
      _
    %p127 = scmp.lt.s32.totalorder %s10, 2
    // Predicated region
    $region17: #{inverted_residual.4} parent=5 // pred_check
      %p128 = pneg %p127
    $region18: #{inverted_residual.4} parent=5 // pred_check_branch
      %130 = sbr.rel (%p128) target = $region20
    $region19: #{inverted_residual.4} parent=5 // pred_region
      // Predicated region
      $region21: #{inverted_residual.4} parent=19 // pred_check
        %p131 = pneg %p30
      $region22: #{inverted_residual.4} parent=19 // pred_check_branch
        %133 = sbr.rel (%p131) target = $region24
      $region23: #{inverted_residual.4} parent=19 // pred_region
        %s134 = smul.u32 32, %s10
        %p135 = scmp.lt.s32.totalorder %s134, 63
        %s136 = scalar_select %p135, %s134, 63
        %s137 = smul.addr %s136, 8
        %s138 = scalar_lea.vmem %s0, %s137
        %s139 = smul.u32 32, %s10
      $region24: #{inverted_residual.4} parent=19 // pred_fallthru
        _
    $region20: #{inverted_residual.4} parent=5 // pred_fallthru
      _
    %p140 = scmp.le.s32.totalorder 1, %s10
    %p141 = scmp.lt.s32.totalorder %s10, 3
    %p142 = pnand %p140, %p141
    %p143 = pneg %p142
    // Predicated region
    $region25: #{inverted_residual.4} parent=5 // pred_check
      _
    $region26: #{inverted_residual.4} parent=5 // pred_check_branch
      %145 = sbr.rel (%p142) target = $region28
    $region27: #{inverted_residual.4} parent=5 // pred_region
      %s146 = ssub.s32 %s10, 1
      %s147 = smul.u32 32, %s15
      %p148 = scmp.lt.s32.totalorder %s147, 63
      %s149 = scalar_select %p148, %s147, 63
      %s150 = smul.addr %s149, 8
      %s151 = scalar_lea.vmem %s0, %s150
      %p152 = pneg %p36
      %p153 = pneg %p33
      %p154 = pneg %p57
      %p155 = pneg %p54
      %p156 = pneg %p83
      %p157 = pneg %p80
      %s158 = smul.u32 32, %s15
      %p159 = scmp.lt.s32.totalorder %s158, 63
      %s160 = scalar_select %p159, %s158, 63
      %s161 = smul.addr %s160, 8
      %s162 = scalar_lea.vmem %s2, %s161
      %p163 = pneg %p109
      %p164 = pneg %p106
      %p165 = scmp.lt.s32.totalorder %s15, 1
      %s166 = scalar_select %p165, %s15, 1
      %s167 = smul.addr %s166, 2
      %s168 = scalar_lea.vmem %s3, %s167
      %s169 = smul.u32 32, %s15
      %p170 = scmp.lt.s32.totalorder %s169, 63
      %s171 = scalar_select %p170, %s169, 63
      %s172 = smul.addr %s171, 8
      %s173 = scalar_lea.vmem %s0, %s172
      %s174 = smul.u32 32, %s15
      %s175 = smul.u32 32, %s15
      %p176 = scmp.lt.s32.totalorder %s175, 63
      %s177 = scalar_select %p176, %s175, 63
      %s178 = smul.addr %s177, 8
      %s179 = scalar_lea.vmem %s2, %s178
      %s180 = smul.u32 32, %s15
      %p181 = scmp.lt.s32.totalorder %s15, 1
      %s182 = scalar_select %p181, %s15, 1
      %s183 = smul.addr %s182, 2
      %s184 = scalar_lea.vmem %s3, %s183
      %v186 = vld [vmem:[%s173] sm:$0xff]
      %v187 = vld [vmem:[%s173 + $0x8] sm:$0xff]
      %v188 = vld [vmem:[%s173 + $0x10] sm:$0xff]
      %v189 = vld [vmem:[%s173 + $0x18] sm:$0xff]
      %v190 = vld [vmem:[%s173 + $0x20] sm:$0xff]
      %v191 = vld [vmem:[%s173 + $0x28] sm:$0xff]
      %v192 = vld [vmem:[%s173 + $0x30] sm:$0xff]
      %v193 = vld [vmem:[%s173 + $0x38] sm:$0xff]
      %v194 = vld [vmem:[%s173 + $0x40] sm:$0xff]
      %v195 = vld [vmem:[%s173 + $0x48] sm:$0xff]
      %v196 = vld [vmem:[%s173 + $0x50] sm:$0xff]
      %v197 = vld [vmem:[%s173 + $0x58] sm:$0xff]
      %v198 = vld [vmem:[%s173 + $0x60] sm:$0xff]
      %v199 = vld [vmem:[%s173 + $0x68] sm:$0xff]
      %v200 = vld [vmem:[%s173 + $0x70] sm:$0xff]
      %v201 = vld [vmem:[%s173 + $0x78] sm:$0xff]
      %v202 = vld [vmem:[%s173 + $0x80] sm:$0xff]
      %v203 = vld [vmem:[%s173 + $0x88] sm:$0xff]
      %v204 = vld [vmem:[%s173 + $0x90] sm:$0xff]
      %v205 = vld [vmem:[%s173 + $0x98] sm:$0xff]
      %v206 = vld [vmem:[%s173 + $0xa0] sm:$0xff]
      %v207 = vld [vmem:[%s173 + $0xa8] sm:$0xff]
      %v208 = vld [vmem:[%s173 + $0xb0] sm:$0xff]
      %v209 = vld [vmem:[%s173 + $0xb8] sm:$0xff]
      %v210 = vld [vmem:[%s173 + $0xc0] sm:$0xff]
      %v211 = vld [vmem:[%s173 + $0xc8] sm:$0xff]
      %v212 = vld [vmem:[%s173 + $0xd0] sm:$0xff]
      %v213 = vld [vmem:[%s173 + $0xd8] sm:$0xff]
      %v214 = vld [vmem:[%s173 + $0xe0] sm:$0xff]
      %v215 = vld [vmem:[%s173 + $0xe8] sm:$0xff]
      %v216 = vld [vmem:[%s173 + $0xf0] sm:$0xff]
      %v217 = vld [vmem:[%s173 + $0xf8] sm:$0xff]
      %v218 = vpack.c.bf16 %v187, %v186
      %v219 = vpack.c.bf16 %v189, %v188
      %v220 = vpack.c.bf16 %v191, %v190
      %v221 = vpack.c.bf16 %v193, %v192
      %v222 = vpack.c.bf16 %v195, %v194
      %v223 = vpack.c.bf16 %v197, %v196
      %v224 = vpack.c.bf16 %v199, %v198
      %v225 = vpack.c.bf16 %v201, %v200
      %v226 = vpack.c.bf16 %v203, %v202
      %v227 = vpack.c.bf16 %v205, %v204
      %v228 = vpack.c.bf16 %v207, %v206
      %v229 = vpack.c.bf16 %v209, %v208
      %v230 = vpack.c.bf16 %v211, %v210
      %v231 = vpack.c.bf16 %v213, %v212
      %v232 = vpack.c.bf16 %v215, %v214
      %v233 = vpack.c.bf16 %v217, %v216
      %v234 = vld [vmem:[%s1] sm:$0x3]
      %vm235 = vcmask 31744
      %v237 = vsel %vm235, %v218, 0
      %v240 = vsel %vm235, %v219, 0
      %v243 = vsel %vm235, %v220, 0
      %v246 = vsel %vm235, %v221, 0
      %v249 = vsel %vm235, %v222, 0
      %v252 = vsel %vm235, %v223, 0
      %v255 = vsel %vm235, %v224, 0
      %v258 = vsel %vm235, %v225, 0
      %v261 = vsel %vm235, %v226, 0
      %v264 = vsel %vm235, %v227, 0
      %v267 = vsel %vm235, %v228, 0
      %v270 = vsel %vm235, %v229, 0
      %v273 = vsel %vm235, %v230, 0
      %v276 = vsel %vm235, %v231, 0
      %v279 = vsel %vm235, %v232, 0
      %v282 = vsel %vm235, %v233, 0
      %vm284 = vcmask 1041408
      %v286 = vsel %vm284, %v234, 0
      %288 = vmatpush.bf16.msra.mxu0 0
      %289 = vmatpush.bf16.msra.mxu0 0
      %290 = vmatpush.bf16.msra.mxu0 0
      %291 = vmatpush.bf16.msra.mxu0 0
      %292 = vmatpush.bf16.msra.mxu0 0
      %293 = vmatpush.bf16.msra.mxu0 0
      %294 = vmatpush.bf16.msra.mxu0 0
      %295 = vmatpush.bf16.msra.mxu0 %v286
      %296 = vmatmul.bf16.gmra.mxu0 %v237
      %v297 = vpop.f32.mrf.mxu0
      %v298 = vadd.f32 0.0, %v297
      %v299 = vpop.f32.mrf.mxu0
      %v300 = vadd.f32 0.0, %v299
      %301 = vmatmul.bf16.gmra.mxu0 %v240
      %v302 = vpop.f32.mrf.mxu0
      %v303 = vadd.f32 0.0, %v302
      %v304 = vpop.f32.mrf.mxu0
      %v305 = vadd.f32 0.0, %v304
      %306 = vmatmul.bf16.gmra.mxu0 %v243
      %v307 = vpop.f32.mrf.mxu0
      %v308 = vadd.f32 0.0, %v307
      %v309 = vpop.f32.mrf.mxu0
      %v310 = vadd.f32 0.0, %v309
      %311 = vmatmul.bf16.gmra.mxu0 %v246
      %v312 = vpop.f32.mrf.mxu0
      %v313 = vadd.f32 0.0, %v312
      %v314 = vpop.f32.mrf.mxu0
      %v315 = vadd.f32 0.0, %v314
      %316 = vmatmul.bf16.gmra.mxu0 %v249
      %v317 = vpop.f32.mrf.mxu0
      %v318 = vadd.f32 0.0, %v317
      %v319 = vpop.f32.mrf.mxu0
      %v320 = vadd.f32 0.0, %v319
      %321 = vmatmul.bf16.gmra.mxu0 %v252
      %v322 = vpop.f32.mrf.mxu0
      %v323 = vadd.f32 0.0, %v322
      %v324 = vpop.f32.mrf.mxu0
      %v325 = vadd.f32 0.0, %v324
      %326 = vmatmul.bf16.gmra.mxu0 %v255
      %v327 = vpop.f32.mrf.mxu0
      %v328 = vadd.f32 0.0, %v327
      %v329 = vpop.f32.mrf.mxu0
      %v330 = vadd.f32 0.0, %v329
      %331 = vmatmul.bf16.gmra.mxu0 %v258
      %v332 = vpop.f32.mrf.mxu0
      %v333 = vadd.f32 0.0, %v332
      %v334 = vpop.f32.mrf.mxu0
      %v335 = vadd.f32 0.0, %v334
      %336 = vmatmul.bf16.gmra.mxu0 %v261
      %v337 = vpop.f32.mrf.mxu0
      %v338 = vadd.f32 0.0, %v337
      %v339 = vpop.f32.mrf.mxu0
      %v340 = vadd.f32 0.0, %v339
      %341 = vmatmul.bf16.gmra.mxu0 %v264
      %v342 = vpop.f32.mrf.mxu0
      %v343 = vadd.f32 0.0, %v342
      %v344 = vpop.f32.mrf.mxu0
      %v345 = vadd.f32 0.0, %v344
      %346 = vmatmul.bf16.gmra.mxu0 %v267
      %v347 = vpop.f32.mrf.mxu0
      %v348 = vadd.f32 0.0, %v347
      %v349 = vpop.f32.mrf.mxu0
      %v350 = vadd.f32 0.0, %v349
      %351 = vmatmul.bf16.gmra.mxu0 %v270
      %v352 = vpop.f32.mrf.mxu0
      %v353 = vadd.f32 0.0, %v352
      %v354 = vpop.f32.mrf.mxu0
      %v355 = vadd.f32 0.0, %v354
      %356 = vmatmul.bf16.gmra.mxu0 %v273
      %v357 = vpop.f32.mrf.mxu0
      %v358 = vadd.f32 0.0, %v357
      %v359 = vpop.f32.mrf.mxu0
      %v360 = vadd.f32 0.0, %v359
      %361 = vmatmul.bf16.gmra.mxu0 %v276
      %v362 = vpop.f32.mrf.mxu0
      %v363 = vadd.f32 0.0, %v362
      %v364 = vpop.f32.mrf.mxu0
      %v365 = vadd.f32 0.0, %v364
      %366 = vmatmul.bf16.gmra.mxu0 %v279
      %v367 = vpop.f32.mrf.mxu0
      %v368 = vadd.f32 0.0, %v367
      %v369 = vpop.f32.mrf.mxu0
      %v370 = vadd.f32 0.0, %v369
      %371 = vmatmul.bf16.gmra.mxu0 %v282
      %v372 = vpop.f32.mrf.mxu0
      %v373 = vadd.f32 0.0, %v372
      %v374 = vpop.f32.mrf.mxu0
      %v375 = vadd.f32 0.0, %v374
      %376 = vdwg.mxu0
      %377 = vst [vmem:[%s179] sm:$0xff] %v298
      %378 = vst [vmem:[%s179 + $0x8] sm:$0xff] %v300
      %379 = vst [vmem:[%s179 + $0x10] sm:$0xff] %v303
      %380 = vst [vmem:[%s179 + $0x18] sm:$0xff] %v305
      %381 = vst [vmem:[%s179 + $0x20] sm:$0xff] %v308
      %382 = vst [vmem:[%s179 + $0x28] sm:$0xff] %v310
      %383 = vst [vmem:[%s179 + $0x30] sm:$0xff] %v313
      %384 = vst [vmem:[%s179 + $0x38] sm:$0xff] %v315
      %385 = vst [vmem:[%s179 + $0x40] sm:$0xff] %v318
      %386 = vst [vmem:[%s179 + $0x48] sm:$0xff] %v320
      %387 = vst [vmem:[%s179 + $0x50] sm:$0xff] %v323
      %388 = vst [vmem:[%s179 + $0x58] sm:$0xff] %v325
      %389 = vst [vmem:[%s179 + $0x60] sm:$0xff] %v328
      %390 = vst [vmem:[%s179 + $0x68] sm:$0xff] %v330
      %391 = vst [vmem:[%s179 + $0x70] sm:$0xff] %v333
      %392 = vst [vmem:[%s179 + $0x78] sm:$0xff] %v335
      %393 = vst [vmem:[%s179 + $0x80] sm:$0xff] %v338
      %394 = vst [vmem:[%s179 + $0x88] sm:$0xff] %v340
      %395 = vst [vmem:[%s179 + $0x90] sm:$0xff] %v343
      %396 = vst [vmem:[%s179 + $0x98] sm:$0xff] %v345
      %397 = vst [vmem:[%s179 + $0xa0] sm:$0xff] %v348
      %398 = vst [vmem:[%s179 + $0xa8] sm:$0xff] %v350
      %399 = vst [vmem:[%s179 + $0xb0] sm:$0xff] %v353
      %400 = vst [vmem:[%s179 + $0xb8] sm:$0xff] %v355
      %401 = vst [vmem:[%s179 + $0xc0] sm:$0xff] %v358
      %402 = vst [vmem:[%s179 + $0xc8] sm:$0xff] %v360
      %403 = vst [vmem:[%s179 + $0xd0] sm:$0xff] %v363
      %404 = vst [vmem:[%s179 + $0xd8] sm:$0xff] %v365
      %405 = vst [vmem:[%s179 + $0xe0] sm:$0xff] %v368
      %406 = vst [vmem:[%s179 + $0xe8] sm:$0xff] %v370
      %407 = vst [vmem:[%s179 + $0xf0] sm:$0xff] %v373
      %408 = vst [vmem:[%s179 + $0xf8] sm:$0xff] %v375
      %v409 = vadd.f32 %v298, %v300
      %v410 = vadd.f32 %v409, %v303
      %v411 = vadd.f32 %v410, %v305
      %v412 = vadd.f32 %v411, %v308
      %v413 = vadd.f32 %v412, %v310
      %v414 = vadd.f32 %v413, %v313
      %v415 = vadd.f32 %v414, %v315
      %v416 = vadd.f32 %v415, %v318
      %v417 = vadd.f32 %v416, %v320
      %v418 = vadd.f32 %v417, %v323
      %v419 = vadd.f32 %v418, %v325
      %v420 = vadd.f32 %v419, %v328
      %v421 = vadd.f32 %v420, %v330
      %v422 = vadd.f32 %v421, %v333
      %v423 = vadd.f32 %v422, %v335
      %v424 = vadd.f32 %v423, %v338
      %v425 = vadd.f32 %v424, %v340
      %v426 = vadd.f32 %v425, %v343
      %v427 = vadd.f32 %v426, %v345
      %v428 = vadd.f32 %v427, %v348
      %v429 = vadd.f32 %v428, %v350
      %v430 = vadd.f32 %v429, %v353
      %v431 = vadd.f32 %v430, %v355
      %v432 = vadd.f32 %v431, %v358
      %v433 = vadd.f32 %v432, %v360
      %v434 = vadd.f32 %v433, %v363
      %v435 = vadd.f32 %v434, %v365
      %v436 = vadd.f32 %v435, %v368
      %v437 = vadd.f32 %v436, %v370
      %v438 = vadd.f32 %v437, %v373
      %v439 = vadd.f32 %v438, %v375
      %v440 = vrot.slane %v439, 4
      %v441 = vadd.f32 %v439, %v440
      %v442 = vrot.slane %v441, 2
      %v443 = vadd.f32 %v441, %v442
      %v444 = vrot.slane %v443, 1
      %v445 = vadd.f32 %v443, %v444
      %v446 = vmul.f32 %v298, %v298
      %v447 = vmul.f32 %v300, %v300
      %v448 = vmul.f32 %v303, %v303
      %v449 = vmul.f32 %v305, %v305
      %v450 = vmul.f32 %v308, %v308
      %v451 = vmul.f32 %v310, %v310
      %v452 = vmul.f32 %v313, %v313
      %v453 = vmul.f32 %v315, %v315
      %v454 = vmul.f32 %v318, %v318
      %v455 = vmul.f32 %v320, %v320
      %v456 = vmul.f32 %v323, %v323
      %v457 = vmul.f32 %v325, %v325
      %v458 = vmul.f32 %v328, %v328
      %v459 = vmul.f32 %v330, %v330
      %v460 = vmul.f32 %v333, %v333
      %v461 = vmul.f32 %v335, %v335
      %v462 = vmul.f32 %v338, %v338
      %v463 = vmul.f32 %v340, %v340
      %v464 = vmul.f32 %v343, %v343
      %v465 = vmul.f32 %v345, %v345
      %v466 = vmul.f32 %v348, %v348
      %v467 = vmul.f32 %v350, %v350
      %v468 = vmul.f32 %v353, %v353
      %v469 = vmul.f32 %v355, %v355
      %v470 = vmul.f32 %v358, %v358
      %v471 = vmul.f32 %v360, %v360
      %v472 = vmul.f32 %v363, %v363
      %v473 = vmul.f32 %v365, %v365
      %v474 = vmul.f32 %v368, %v368
      %v475 = vmul.f32 %v370, %v370
      %v476 = vmul.f32 %v373, %v373
      %v477 = vmul.f32 %v375, %v375
      %v478 = vadd.f32 %v446, %v447
      %v479 = vadd.f32 %v478, %v448
      %v480 = vadd.f32 %v479, %v449
      %v481 = vadd.f32 %v480, %v450
      %v482 = vadd.f32 %v481, %v451
      %v483 = vadd.f32 %v482, %v452
      %v484 = vadd.f32 %v483, %v453
      %v485 = vadd.f32 %v484, %v454
      %v486 = vadd.f32 %v485, %v455
      %v487 = vadd.f32 %v486, %v456
      %v488 = vadd.f32 %v487, %v457
      %v489 = vadd.f32 %v488, %v458
      %v490 = vadd.f32 %v489, %v459
      %v491 = vadd.f32 %v490, %v460
      %v492 = vadd.f32 %v491, %v461
      %v493 = vadd.f32 %v492, %v462
      %v494 = vadd.f32 %v493, %v463
      %v495 = vadd.f32 %v494, %v464
      %v496 = vadd.f32 %v495, %v465
      %v497 = vadd.f32 %v496, %v466
      %v498 = vadd.f32 %v497, %v467
      %v499 = vadd.f32 %v498, %v468
      %v500 = vadd.f32 %v499, %v469
      %v501 = vadd.f32 %v500, %v470
      %v502 = vadd.f32 %v501, %v471
      %v503 = vadd.f32 %v502, %v472
      %v504 = vadd.f32 %v503, %v473
      %v505 = vadd.f32 %v504, %v474
      %v506 = vadd.f32 %v505, %v475
      %v507 = vadd.f32 %v506, %v476
      %v508 = vadd.f32 %v507, %v477
      %v509 = vrot.slane %v508, 4
      %v510 = vadd.f32 %v508, %v509
      %v511 = vrot.slane %v510, 2
      %v512 = vadd.f32 %v510, %v511
      %v513 = vrot.slane %v512, 1
      %v514 = vadd.f32 %v512, %v513
      %vm515 = vcmask 1040384
      %v516 = vsel %vm515, %v445, %v514
      %517 = vst [vmem:[%s184] sm:$0x3] %v516
      %s518 = smul.u32 32, %s15
      %p519 = scmp.lt.s32.totalorder %s518, 63
      %s520 = scalar_select %p519, %s518, 63
      %s521 = smul.addr %s520, 8
      %s522 = scalar_lea.vmem %s2, %s521
      %p523 = scmp.lt.s32.totalorder %s15, 1
      %s524 = scalar_select %p523, %s15, 1
      %s525 = smul.addr %s524, 2
      %s526 = scalar_lea.vmem %s3, %s525
      // Predicated region
      $region29: #{inverted_residual.4} parent=27 // pred_check
        %p527 = pneg %p80
      $region30: #{inverted_residual.4} parent=27 // pred_check_branch
        %529 = sbr.rel (%p527) target = $region32
      $region31: #{inverted_residual.4} parent=27 // pred_region
        %s530 = smul.u32 32, %s15
      $region32: #{inverted_residual.4} parent=27 // pred_fallthru
        _
      // Predicated region
      $region33: #{inverted_residual.4} parent=27 // pred_check
        %p531 = pneg %p106
      $region34: #{inverted_residual.4} parent=27 // pred_check_branch
        %533 = sbr.rel (%p531) target = $region36
      $region35: #{inverted_residual.4} parent=27 // pred_region
        _
      $region36: #{inverted_residual.4} parent=27 // pred_fallthru
        _
    $region28: #{inverted_residual.4} parent=5 // pred_fallthru
      _
    %p534 = scmp.le.s32.totalorder 2, %s10
    // Predicated region
    $region37: #{inverted_residual.4} parent=5 // pred_check
      %p535 = pneg %p534
    $region38: #{inverted_residual.4} parent=5 // pred_check_branch
      %537 = sbr.rel (%p535) target = $region40
    $region39: #{inverted_residual.4} parent=5 // pred_region
      %s538 = ssub.s32 %s10, 2
      // Predicated region
      $region41: #{inverted_residual.4} parent=39 // pred_check
        %p539 = pneg %p86
      $region42: #{inverted_residual.4} parent=39 // pred_check_branch
        %541 = sbr.rel (%p539) target = $region44
      $region43: #{inverted_residual.4} parent=39 // pred_region
        %s542 = smul.u32 32, %s16
        %p543 = scmp.lt.s32.totalorder %s542, 63
        %s544 = scalar_select %p543, %s542, 63
        %s545 = smul.addr %s544, 8
        %s546 = scalar_lea.vmem %s2, %s545
      $region44: #{inverted_residual.4} parent=39 // pred_fallthru
        _
      // Predicated region
      $region45: #{inverted_residual.4} parent=39 // pred_check
        %p547 = pneg %p112
      $region46: #{inverted_residual.4} parent=39 // pred_check_branch
        %549 = sbr.rel (%p547) target = $region48
      $region47: #{inverted_residual.4} parent=39 // pred_region
        %p550 = scmp.lt.s32.totalorder %s16, 1
        %s551 = scalar_select %p550, %s16, 1
        %s552 = smul.addr %s551, 2
        %s553 = scalar_lea.vmem %s3, %s552
      $region48: #{inverted_residual.4} parent=39 // pred_fallthru
        _
    $region40: #{inverted_residual.4} parent=5 // pred_fallthru
      _
  $region6: #{inverted_residual.4} parent=0 // loop_footer
    %s14 = sadd.s32 1, %s10
  $region7: #{inverted_residual.4} parent=0 // loop_footer_branch
    %9 = sbr.rel target = $region3
  $region8: #{inverted_residual.4} parent=0 // loop_exit
    _

// kernel: inverted_residual.6
$region0: #{inverted_residual.6}
  #allocation0 [shape = 'u32[]', space=smem, size = 0x4, offset = 0x4, fixed_abs, tag = 'smem constant byte address 0x4 - core index']
  #allocation1 [shape = 'u32[72,128]{1,0:T(1,128)}', space=vmem, size = 0x9000, scoped, tag = 'internal scratch']
  %s0 = inlined_call_operand.vmem [shape: f32[512,128], index: 0, kind: input, shape index: {}]
  %s1 = inlined_call_operand.vmem [shape: f32[1,128], index: 1, kind: input, shape index: {}]
  %s2 = inlined_call_operand.vmem [shape: f32[1,128], index: 2, kind: input, shape index: {}]
  %s3 = inlined_call_operand.vmem [shape: bf16[128,128], index: 3, kind: input, shape index: {}]
  %s4 = inlined_call_operand.vmem [shape: f32[512,128], index: 4, kind: output, shape index: {0}]
  %s5 = inlined_call_operand.vmem [shape: f32[2,2,128], index: 5, kind: output, shape index: {1}]
  %6 = xla_tuple %s4, %s5
  %s7 = sld [smem:[#allocation0]]
  $region57: #{inverted_residual.6} parent=0
    _
  %s9 = ssub.s32 1, %s7
  %s10 = scalar_select 0, %s9, %s7
  loop: start=0, step=1, limit=4
  $region2: #{inverted_residual.6} parent=0 // loop_pre_header
    _
  $region3: #{inverted_residual.6} parent=0 // loop_header
    %s12 = sphi 0, %s16
    %p13 = scmp.ge.s32.totalorder %s12, 4
    %s22 = sphi 0, %s24
    %s25 = sphi 0, %s22
    %s26 = sphi 0, %s25
    %s42 = sphi 0, %s26
    %s46 = sphi 0, %s46
    %s48 = sphi 0, %s46
    %s49 = sphi 0, %s48
    %s63 = sphi 0, %s49
    %s67 = sphi 0, %s67
    %s69 = sphi 0, %s67
    %s70 = sphi 0, %s69
    %s84 = sphi 0, %s70
    %s88 = sphi 0, %s88
    %s90 = sphi 0, %s88
    %s91 = sphi 0, %s90
    %s105 = sphi 0, %s91
    %s111 = sphi 0, %s113
    %s114 = sphi 0, %s111
    %s115 = sphi 0, %s114
    %s131 = sphi 0, %s115
    %s137 = sphi 0, %s139
    %s140 = sphi 0, %s137
    %s141 = sphi 0, %s140
    %s157 = sphi 0, %s141
  $region4: #{inverted_residual.6} parent=0 // loop_header_branch
    %15 = sbr.rel (%p13) target = $region8
  $region5: #{inverted_residual.6} parent=0 // loop_body
    %s17 = ssub.s32 %s12, 1
    %s18 = ssub.s32 %s12, 2
    %s19 = sadd.s32 %s12, 1
    %s20 = ssub.s32 %s12, %s19
    %p21 = scmp.eq.s32.totalorder %s20, 0
    %s23 = sadd.s32 %s22, 1
    %s24 = scalar_select %p21, %s22, %s23
    %p27 = pneg %p21
    %p28 = scmp.eq.s32.totalorder %s12, 1
    %p29 = por %p27, %p28
    %p30 = scmp.ne.s32.totalorder %s22, %s25
    %p31 = scmp.eq.s32.totalorder %s12, 0
    %p32 = por %p30, %p31
    %p33 = scmp.ne.s32.totalorder %s22, %s25
    %p34 = scmp.eq.s32.totalorder %s17, 1
    %p35 = por %p33, %p34
    %p36 = scmp.ne.s32.totalorder %s25, %s26
    %p37 = scmp.eq.s32.totalorder %s17, 0
    %p38 = por %p36, %p37
    %p39 = scmp.ne.s32.totalorder %s25, %s26
    %p40 = scmp.eq.s32.totalorder %s18, 1
    %p41 = por %p39, %p40
    %p43 = scmp.ne.s32.totalorder %s26, %s42
    %p44 = scmp.eq.s32.totalorder %s18, 0
    %p45 = por %p43, %p44
    %s47 = sadd.s32 %s46, 1
    %p50 = scmp.eq.s32.totalorder %s12, 1
    %p51 = scmp.ne.s32.totalorder %s46, %s48
    %p52 = scmp.eq.s32.totalorder %s12, 0
    %p53 = por %p51, %p52
    %p54 = scmp.ne.s32.totalorder %s46, %s48
    %p55 = scmp.eq.s32.totalorder %s17, 1
    %p56 = por %p54, %p55
    %p57 = scmp.ne.s32.totalorder %s48, %s49
    %p58 = scmp.eq.s32.totalorder %s17, 0
    %p59 = por %p57, %p58
    %p60 = scmp.ne.s32.totalorder %s48, %s49
    %p61 = scmp.eq.s32.totalorder %s18, 1
    %p62 = por %p60, %p61
    %p64 = scmp.ne.s32.totalorder %s49, %s63
    %p65 = scmp.eq.s32.totalorder %s18, 0
    %p66 = por %p64, %p65
    %s68 = sadd.s32 %s67, 1
    %p71 = scmp.eq.s32.totalorder %s12, 1
    %p72 = scmp.ne.s32.totalorder %s67, %s69
    %p73 = scmp.eq.s32.totalorder %s12, 0
    %p74 = por %p72, %p73
    %p75 = scmp.ne.s32.totalorder %s67, %s69
    %p76 = scmp.eq.s32.totalorder %s17, 1
    %p77 = por %p75, %p76
    %p78 = scmp.ne.s32.totalorder %s69, %s70
    %p79 = scmp.eq.s32.totalorder %s17, 0
    %p80 = por %p78, %p79
    %p81 = scmp.ne.s32.totalorder %s69, %s70
    %p82 = scmp.eq.s32.totalorder %s18, 1
    %p83 = por %p81, %p82
    %p85 = scmp.ne.s32.totalorder %s70, %s84
    %p86 = scmp.eq.s32.totalorder %s18, 0
    %p87 = por %p85, %p86
    %s89 = sadd.s32 %s88, 1
    %p92 = scmp.eq.s32.totalorder %s12, 1
    %p93 = scmp.ne.s32.totalorder %s88, %s90
    %p94 = scmp.eq.s32.totalorder %s12, 0
    %p95 = por %p93, %p94
    %p96 = scmp.ne.s32.totalorder %s88, %s90
    %p97 = scmp.eq.s32.totalorder %s17, 1
    %p98 = por %p96, %p97
    %p99 = scmp.ne.s32.totalorder %s90, %s91
    %p100 = scmp.eq.s32.totalorder %s17, 0
    %p101 = por %p99, %p100
    %p102 = scmp.ne.s32.totalorder %s90, %s91
    %p103 = scmp.eq.s32.totalorder %s18, 1
    %p104 = por %p102, %p103
    %p106 = scmp.ne.s32.totalorder %s91, %s105
    %p107 = scmp.eq.s32.totalorder %s18, 0
    %p108 = por %p106, %p107
    %s109 = ssub.s32 %s12, %s19
    %p110 = scmp.eq.s32.totalorder %s109, 0
    %s112 = sadd.s32 %s111, 1
    %s113 = scalar_select %p110, %s111, %s112
    %p116 = pneg %p110
    %p117 = scmp.eq.s32.totalorder %s12, 1
    %p118 = por %p116, %p117
    %p119 = scmp.ne.s32.totalorder %s111, %s114
    %p120 = scmp.eq.s32.totalorder %s12, 0
    %p121 = por %p119, %p120
    %p122 = scmp.ne.s32.totalorder %s111, %s114
    %p123 = scmp.eq.s32.totalorder %s17, 1
    %p124 = por %p122, %p123
    %p125 = scmp.ne.s32.totalorder %s114, %s115
    %p126 = scmp.eq.s32.totalorder %s17, 0
    %p127 = por %p125, %p126
    %p128 = scmp.ne.s32.totalorder %s114, %s115
    %p129 = scmp.eq.s32.totalorder %s18, 1
    %p130 = por %p128, %p129
    %p132 = scmp.ne.s32.totalorder %s115, %s131
    %p133 = scmp.eq.s32.totalorder %s18, 0
    %p134 = por %p132, %p133
    %s135 = ssub.s32 %s12, %s19
    %p136 = scmp.eq.s32.totalorder %s135, 0
    %s138 = sadd.s32 %s137, 1
    %s139 = scalar_select %p136, %s137, %s138
    %p142 = pneg %p136
    %p143 = scmp.eq.s32.totalorder %s12, 1
    %p144 = por %p142, %p143
    %p145 = scmp.ne.s32.totalorder %s137, %s140
    %p146 = scmp.eq.s32.totalorder %s12, 0
    %p147 = por %p145, %p146
    %p148 = scmp.ne.s32.totalorder %s137, %s140
    %p149 = scmp.eq.s32.totalorder %s17, 1
    %p150 = por %p148, %p149
    %p151 = scmp.ne.s32.totalorder %s140, %s141
    %p152 = scmp.eq.s32.totalorder %s17, 0
    %p153 = por %p151, %p152
    %p154 = scmp.ne.s32.totalorder %s140, %s141
    %p155 = scmp.eq.s32.totalorder %s18, 1
    %p156 = por %p154, %p155
    %p158 = scmp.ne.s32.totalorder %s141, %s157
    %p159 = scmp.eq.s32.totalorder %s18, 0
    %p160 = por %p158, %p159
    %p161 = scmp.le.s32.totalorder 1, %s12
    %p162 = scmp.lt.s32.totalorder %s12, 3
    %p163 = pnand %p161, %p162
    %p164 = pneg %p163
    // Predicated region
    $region9: #{inverted_residual.6} parent=5 // pred_check
      _
    $region10: #{inverted_residual.6} parent=5 // pred_check_branch
      %166 = sbr.rel (%p163) target = $region12
    $region11: #{inverted_residual.6} parent=5 // pred_region
      %s167 = ssub.s32 %s12, 1
      // Predicated region
      $region13: #{inverted_residual.6} parent=11 // pred_check
        %p168 = pneg %p59
      $region14: #{inverted_residual.6} parent=11 // pred_check_branch
        %170 = sbr.rel (%p168) target = $region16
      $region15: #{inverted_residual.6} parent=11 // pred_region
        _
      $region16: #{inverted_residual.6} parent=11 // pred_fallthru
        _
      // Predicated region
      $region17: #{inverted_residual.6} parent=11 // pred_check
        %p171 = pneg %p80
      $region18: #{inverted_residual.6} parent=11 // pred_check_branch
        %173 = sbr.rel (%p171) target = $region20
      $region19: #{inverted_residual.6} parent=11 // pred_region
        _
      $region20: #{inverted_residual.6} parent=11 // pred_fallthru
        _
      // Predicated region
      $region21: #{inverted_residual.6} parent=11 // pred_check
        %p174 = pneg %p101
      $region22: #{inverted_residual.6} parent=11 // pred_check_branch
        %176 = sbr.rel (%p174) target = $region24
      $region23: #{inverted_residual.6} parent=11 // pred_region
        _
      $region24: #{inverted_residual.6} parent=11 // pred_fallthru
        _
    $region12: #{inverted_residual.6} parent=5 // pred_fallthru
      _
    %p177 = scmp.lt.s32.totalorder %s12, 2
    // Predicated region
    $region25: #{inverted_residual.6} parent=5 // pred_check
      %p178 = pneg %p177
    $region26: #{inverted_residual.6} parent=5 // pred_check_branch
      %180 = sbr.rel (%p178) target = $region28
    $region27: #{inverted_residual.6} parent=5 // pred_region
      // Predicated region
      $region29: #{inverted_residual.6} parent=27 // pred_check
        %p181 = pneg %p32
      $region30: #{inverted_residual.6} parent=27 // pred_check_branch
        %183 = sbr.rel (%p181) target = $region32
      $region31: #{inverted_residual.6} parent=27 // pred_region
        %s184 = smul.u32 32, %s12
        %p185 = scmp.lt.s32.totalorder %s184, 63
        %s186 = scalar_select %p185, %s184, 63
        %s187 = smul.addr %s186, 8
        %s188 = scalar_lea.vmem %s0, %s187
        %s189 = smul.u32 32, %s12
      $region32: #{inverted_residual.6} parent=27 // pred_fallthru
        _
    $region28: #{inverted_residual.6} parent=5 // pred_fallthru
      _
    %p190 = scmp.le.s32.totalorder 1, %s12
    %p191 = scmp.lt.s32.totalorder %s12, 3
    %p192 = pnand %p190, %p191
    %p193 = pneg %p192
    // Predicated region
    $region33: #{inverted_residual.6} parent=5 // pred_check
      _
    $region34: #{inverted_residual.6} parent=5 // pred_check_branch
      %195 = sbr.rel (%p192) target = $region36
    $region35: #{inverted_residual.6} parent=5 // pred_region
      %s196 = ssub.s32 %s12, 1
      %s197 = smul.u32 32, %s17
      %p198 = scmp.lt.s32.totalorder %s197, 63
      %s199 = scalar_select %p198, %s197, 63
      %s200 = smul.addr %s199, 8
      %s201 = scalar_lea.vmem %s0, %s200
      %p202 = pneg %p38
      %p203 = pneg %p35
      %p204 = pneg %p59
      %p205 = pneg %p56
      %p206 = pneg %p80
      %p207 = pneg %p77
      %p208 = pneg %p101
      %p209 = pneg %p98
      %p210 = pneg %p127
      %p211 = pneg %p124
      %s212 = smul.u32 32, %s17
      %p213 = scmp.lt.s32.totalorder %s212, 63
      %s214 = scalar_select %p213, %s212, 63
      %s215 = smul.addr %s214, 8
      %s216 = scalar_lea.vmem %s4, %s215
      %p217 = pneg %p153
      %p218 = pneg %p150
      %p219 = scmp.lt.s32.totalorder %s17, 1
      %s220 = scalar_select %p219, %s17, 1
      %s221 = smul.addr %s220, 2
      %s222 = scalar_lea.vmem %s5, %s221
      %s223 = smul.u32 32, %s17
      %p224 = scmp.lt.s32.totalorder %s223, 63
      %s225 = scalar_select %p224, %s223, 63
      %s226 = smul.addr %s225, 8
      %s227 = scalar_lea.vmem %s0, %s226
      %s228 = smul.u32 32, %s17
      %s229 = smul.u32 32, %s17
      %p230 = scmp.lt.s32.totalorder %s229, 63
      %s231 = scalar_select %p230, %s229, 63
      %s232 = smul.addr %s231, 8
      %s233 = scalar_lea.vmem %s4, %s232
      %s234 = smul.u32 32, %s17
      %p235 = scmp.lt.s32.totalorder %s17, 1
      %s236 = scalar_select %p235, %s17, 1
      %s237 = smul.addr %s236, 2
      %s238 = scalar_lea.vmem %s5, %s237
      %v239 = vld [vmem:[%s227] sm:$0xff]
      %v240 = vld [vmem:[%s227 + $0x8] sm:$0xff]
      %v241 = vld [vmem:[%s227 + $0x10] sm:$0xff]
      %v242 = vld [vmem:[%s227 + $0x18] sm:$0xff]
      %v243 = vld [vmem:[%s227 + $0x20] sm:$0xff]
      %v244 = vld [vmem:[%s227 + $0x28] sm:$0xff]
      %v245 = vld [vmem:[%s227 + $0x30] sm:$0xff]
      %v246 = vld [vmem:[%s227 + $0x38] sm:$0xff]
      %v247 = vld [vmem:[%s227 + $0x40] sm:$0xff]
      %v248 = vld [vmem:[%s227 + $0x48] sm:$0xff]
      %v249 = vld [vmem:[%s227 + $0x50] sm:$0xff]
      %v250 = vld [vmem:[%s227 + $0x58] sm:$0xff]
      %v251 = vld [vmem:[%s227 + $0x60] sm:$0xff]
      %v252 = vld [vmem:[%s227 + $0x68] sm:$0xff]
      %v253 = vld [vmem:[%s227 + $0x70] sm:$0xff]
      %v254 = vld [vmem:[%s227 + $0x78] sm:$0xff]
      %v255 = vld [vmem:[%s227 + $0x80] sm:$0xff]
      %v256 = vld [vmem:[%s227 + $0x88] sm:$0xff]
      %v257 = vld [vmem:[%s227 + $0x90] sm:$0xff]
      %v258 = vld [vmem:[%s227 + $0x98] sm:$0xff]
      %v259 = vld [vmem:[%s227 + $0xa0] sm:$0xff]
      %v260 = vld [vmem:[%s227 + $0xa8] sm:$0xff]
      %v261 = vld [vmem:[%s227 + $0xb0] sm:$0xff]
      %v262 = vld [vmem:[%s227 + $0xb8] sm:$0xff]
      %v263 = vld [vmem:[%s227 + $0xc0] sm:$0xff]
      %v264 = vld [vmem:[%s227 + $0xc8] sm:$0xff]
      %v265 = vld [vmem:[%s227 + $0xd0] sm:$0xff]
      %v266 = vld [vmem:[%s227 + $0xd8] sm:$0xff]
      %v267 = vld [vmem:[%s227 + $0xe0] sm:$0xff]
      %v268 = vld [vmem:[%s227 + $0xe8] sm:$0xff]
      %v269 = vld [vmem:[%s227 + $0xf0] sm:$0xff]
      %v270 = vld [vmem:[%s227 + $0xf8] sm:$0xff]
      %v271 = vld [vmem:[%s1] sm:$0x1]
      %v273 = vperm.slane %v271, 0
      %v275 = vmul.f32 %v239, %v273
      %v276 = vmul.f32 %v240, %v273
      %v277 = vmul.f32 %v241, %v273
      %v278 = vmul.f32 %v242, %v273
      %v279 = vmul.f32 %v243, %v273
      %v280 = vmul.f32 %v244, %v273
      %v281 = vmul.f32 %v245, %v273
      %v282 = vmul.f32 %v246, %v273
      %v283 = vmul.f32 %v247, %v273
      %v284 = vmul.f32 %v248, %v273
      %v285 = vmul.f32 %v249, %v273
      %v286 = vmul.f32 %v250, %v273
      %v287 = vmul.f32 %v251, %v273
      %v288 = vmul.f32 %v252, %v273
      %v289 = vmul.f32 %v253, %v273
      %v290 = vmul.f32 %v254, %v273
      %v291 = vmul.f32 %v255, %v273
      %v292 = vmul.f32 %v256, %v273
      %v293 = vmul.f32 %v257, %v273
      %v294 = vmul.f32 %v258, %v273
      %v295 = vmul.f32 %v259, %v273
      %v296 = vmul.f32 %v260, %v273
      %v297 = vmul.f32 %v261, %v273
      %v298 = vmul.f32 %v262, %v273
      %v299 = vmul.f32 %v263, %v273
      %v300 = vmul.f32 %v264, %v273
      %v301 = vmul.f32 %v265, %v273
      %v302 = vmul.f32 %v266, %v273
      %v303 = vmul.f32 %v267, %v273
      %v304 = vmul.f32 %v268, %v273
      %v305 = vmul.f32 %v269, %v273
      %v306 = vmul.f32 %v270, %v273
      %v307 = vld [vmem:[%s2] sm:$0x1]
      %v309 = vperm.slane %v307, 0
      %v311 = vadd.f32 %v275, %v309
      %v312 = vadd.f32 %v276, %v309
      %v313 = vadd.f32 %v277, %v309
      %v314 = vadd.f32 %v278, %v309
      %v315 = vadd.f32 %v279, %v309
      %v316 = vadd.f32 %v280, %v309
      %v317 = vadd.f32 %v281, %v309
      %v318 = vadd.f32 %v282, %v309
      %v319 = vadd.f32 %v283, %v309
      %v320 = vadd.f32 %v284, %v309
      %v321 = vadd.f32 %v285, %v309
      %v322 = vadd.f32 %v286, %v309
      %v323 = vadd.f32 %v287, %v309
      %v324 = vadd.f32 %v288, %v309
      %v325 = vadd.f32 %v289, %v309
      %v326 = vadd.f32 %v290, %v309
      %v327 = vadd.f32 %v291, %v309
      %v328 = vadd.f32 %v292, %v309
      %v329 = vadd.f32 %v293, %v309
      %v330 = vadd.f32 %v294, %v309
      %v331 = vadd.f32 %v295, %v309
      %v332 = vadd.f32 %v296, %v309
      %v333 = vadd.f32 %v297, %v309
      %v334 = vadd.f32 %v298, %v309
      %v335 = vadd.f32 %v299, %v309
      %v336 = vadd.f32 %v300, %v309
      %v337 = vadd.f32 %v301, %v309
      %v338 = vadd.f32 %v302, %v309
      %v339 = vadd.f32 %v303, %v309
      %v340 = vadd.f32 %v304, %v309
      %v341 = vadd.f32 %v305, %v309
      %v342 = vadd.f32 %v306, %v309
      %v343 = vmax.f32 %v311, 0.0
      %v344 = vmax.f32 %v312, 0.0
      %v345 = vmax.f32 %v313, 0.0
      %v346 = vmax.f32 %v314, 0.0
      %v347 = vmax.f32 %v315, 0.0
      %v348 = vmax.f32 %v316, 0.0
      %v349 = vmax.f32 %v317, 0.0
      %v350 = vmax.f32 %v318, 0.0
      %v351 = vmax.f32 %v319, 0.0
      %v352 = vmax.f32 %v320, 0.0
      %v353 = vmax.f32 %v321, 0.0
      %v354 = vmax.f32 %v322, 0.0
      %v355 = vmax.f32 %v323, 0.0
      %v356 = vmax.f32 %v324, 0.0
      %v357 = vmax.f32 %v325, 0.0
      %v358 = vmax.f32 %v326, 0.0
      %v359 = vmax.f32 %v327, 0.0
      %v360 = vmax.f32 %v328, 0.0
      %v361 = vmax.f32 %v329, 0.0
      %v362 = vmax.f32 %v330, 0.0
      %v363 = vmax.f32 %v331, 0.0
      %v364 = vmax.f32 %v332, 0.0
      %v365 = vmax.f32 %v333, 0.0
      %v366 = vmax.f32 %v334, 0.0
      %v367 = vmax.f32 %v335, 0.0
      %v368 = vmax.f32 %v336, 0.0
      %v369 = vmax.f32 %v337, 0.0
      %v370 = vmax.f32 %v338, 0.0
      %v371 = vmax.f32 %v339, 0.0
      %v372 = vmax.f32 %v340, 0.0
      %v373 = vmax.f32 %v341, 0.0
      %v374 = vmax.f32 %v342, 0.0
      %v375 = vmin.f32 %v343, 6.0
      %v376 = vmin.f32 %v344, 6.0
      %v377 = vmin.f32 %v345, 6.0
      %v378 = vmin.f32 %v346, 6.0
      %v379 = vmin.f32 %v347, 6.0
      %v380 = vmin.f32 %v348, 6.0
      %v381 = vmin.f32 %v349, 6.0
      %v382 = vmin.f32 %v350, 6.0
      %v383 = vmin.f32 %v351, 6.0
      %v384 = vmin.f32 %v352, 6.0
      %v385 = vmin.f32 %v353, 6.0
      %v386 = vmin.f32 %v354, 6.0
      %v387 = vmin.f32 %v355, 6.0
      %v388 = vmin.f32 %v356, 6.0
      %v389 = vmin.f32 %v357, 6.0
      %v390 = vmin.f32 %v358, 6.0
      %v391 = vmin.f32 %v359, 6.0
      %v392 = vmin.f32 %v360, 6.0
      %v393 = vmin.f32 %v361, 6.0
      %v394 = vmin.f32 %v362, 6.0
      %v395 = vmin.f32 %v363, 6.0
      %v396 = vmin.f32 %v364, 6.0
      %v397 = vmin.f32 %v365, 6.0
      %v398 = vmin.f32 %v366, 6.0
      %v399 = vmin.f32 %v367, 6.0
      %v400 = vmin.f32 %v368, 6.0
      %v401 = vmin.f32 %v369, 6.0
      %v402 = vmin.f32 %v370, 6.0
      %v403 = vmin.f32 %v371, 6.0
      %v404 = vmin.f32 %v372, 6.0
      %v405 = vmin.f32 %v373, 6.0
      %v406 = vmin.f32 %v374, 6.0
      %v407 = vpack.c.bf16 %v376, %v375
      %v408 = vpack.c.bf16 %v378, %v377
      %v409 = vpack.c.bf16 %v380, %v379
      %v410 = vpack.c.bf16 %v382, %v381
      %v411 = vpack.c.bf16 %v384, %v383
      %v412 = vpack.c.bf16 %v386, %v385
      %v413 = vpack.c.bf16 %v388, %v387
      %v414 = vpack.c.bf16 %v390, %v389
      %v415 = vpack.c.bf16 %v392, %v391
      %v416 = vpack.c.bf16 %v394, %v393
      %v417 = vpack.c.bf16 %v396, %v395
      %v418 = vpack.c.bf16 %v398, %v397
      %v419 = vpack.c.bf16 %v400, %v399
      %v420 = vpack.c.bf16 %v402, %v401
      %v421 = vpack.c.bf16 %v404, %v403
      %v422 = vpack.c.bf16 %v406, %v405
      %v423 = vld [vmem:[%s3] sm:$0xf]
      %v424 = vld [vmem:[%s3 + $0x4] sm:$0xf]
      %v425 = vld [vmem:[%s3 + $0x8] sm:$0xf]
      %v426 = vld [vmem:[%s3 + $0xc] sm:$0xf]
      %v427 = vld [vmem:[%s3 + $0x10] sm:$0xf]
      %v428 = vld [vmem:[%s3 + $0x14] sm:$0xf]
      %v429 = vld [vmem:[%s3 + $0x18] sm:$0xf]
      %v430 = vld [vmem:[%s3 + $0x1c] sm:$0xf]
      %v431 = vld [vmem:[%s3 + $0x20] sm:$0xf]
      %v432 = vld [vmem:[%s3 + $0x24] sm:$0xf]
      %v433 = vld [vmem:[%s3 + $0x28] sm:$0xf]
      %v434 = vld [vmem:[%s3 + $0x2c] sm:$0xf]
      %v435 = vld [vmem:[%s3 + $0x30] sm:$0xf]
      %v436 = vld [vmem:[%s3 + $0x34] sm:$0xf]
      %v437 = vld [vmem:[%s3 + $0x38] sm:$0xf]
      %v438 = vld [vmem:[%s3 + $0x3c] sm:$0xf]
      %v455 = vunpack.c.l.b16 %v423
      %v456 = vunpack.c.l.b16 %v424
      %v457 = vunpack.c.l.b16 %v425
      %v458 = vunpack.c.l.b16 %v426
      %v459 = vunpack.c.l.b16 %v427
      %v460 = vunpack.c.l.b16 %v428
      %v461 = vunpack.c.l.b16 %v429
      %v462 = vunpack.c.l.b16 %v430
      %v463 = vunpack.c.l.b16 %v431
      %v464 = vunpack.c.l.b16 %v432
      %v465 = vunpack.c.l.b16 %v433
      %v466 = vunpack.c.l.b16 %v434
      %v467 = vunpack.c.l.b16 %v435
      %v468 = vunpack.c.l.b16 %v436
      %v469 = vunpack.c.l.b16 %v437
      %v470 = vunpack.c.l.b16 %v438
      %v471 = vpack.c.b16 %v456, %v455
      %v472 = vpack.c.b16 %v458, %v457
      %v473 = vpack.c.b16 %v460, %v459
      %v474 = vpack.c.b16 %v462, %v461
      %v475 = vpack.c.b16 %v464, %v463
      %v476 = vpack.c.b16 %v466, %v465
      %v477 = vpack.c.b16 %v468, %v467
      %v478 = vpack.c.b16 %v470, %v469
      %487 = vmatpush.bf16.msra.mxu0 %v478
      %488 = vmatpush.bf16.msra.mxu0 %v477
      %489 = vmatpush.bf16.msra.mxu0 %v476
      %490 = vmatpush.bf16.msra.mxu0 %v475
      %491 = vmatpush.bf16.msra.mxu0 %v474
      %492 = vmatpush.bf16.msra.mxu0 %v473
      %493 = vmatpush.bf16.msra.mxu0 %v472
      %494 = vmatpush.bf16.msra.mxu0 %v471
      %495 = vmatmul.bf16.gmra.mxu0 %v407
      %v496 = vpop.f32.mrf.mxu0
      %v497 = vadd.f32 0.0, %v496
      %v498 = vpop.f32.mrf.mxu0
      %v499 = vadd.f32 0.0, %v498
      %500 = vmatmul.bf16.gmra.mxu0 %v408
      %v501 = vpop.f32.mrf.mxu0
      %v502 = vadd.f32 0.0, %v501
      %v503 = vpop.f32.mrf.mxu0
      %v504 = vadd.f32 0.0, %v503
      %505 = vmatmul.bf16.gmra.mxu0 %v409
      %v506 = vpop.f32.mrf.mxu0
      %v507 = vadd.f32 0.0, %v506
      %v508 = vpop.f32.mrf.mxu0
      %v509 = vadd.f32 0.0, %v508
      %510 = vmatmul.bf16.gmra.mxu0 %v410
      %v511 = vpop.f32.mrf.mxu0
      %v512 = vadd.f32 0.0, %v511
      %v513 = vpop.f32.mrf.mxu0
      %v514 = vadd.f32 0.0, %v513
      %515 = vmatmul.bf16.gmra.mxu0 %v411
      %v516 = vpop.f32.mrf.mxu0
      %v517 = vadd.f32 0.0, %v516
      %v518 = vpop.f32.mrf.mxu0
      %v519 = vadd.f32 0.0, %v518
      %520 = vmatmul.bf16.gmra.mxu0 %v412
      %v521 = vpop.f32.mrf.mxu0
      %v522 = vadd.f32 0.0, %v521
      %v523 = vpop.f32.mrf.mxu0
      %v524 = vadd.f32 0.0, %v523
      %525 = vmatmul.bf16.gmra.mxu0 %v413
      %v526 = vpop.f32.mrf.mxu0
      %v527 = vadd.f32 0.0, %v526
      %v528 = vpop.f32.mrf.mxu0
      %v529 = vadd.f32 0.0, %v528
      %530 = vmatmul.bf16.gmra.mxu0 %v414
      %v531 = vpop.f32.mrf.mxu0
      %v532 = vadd.f32 0.0, %v531
      %v533 = vpop.f32.mrf.mxu0
      %v534 = vadd.f32 0.0, %v533
      %535 = vmatmul.bf16.gmra.mxu0 %v415
      %v536 = vpop.f32.mrf.mxu0
      %v537 = vadd.f32 0.0, %v536
      %v538 = vpop.f32.mrf.mxu0
      %v539 = vadd.f32 0.0, %v538
      %540 = vmatmul.bf16.gmra.mxu0 %v416
      %v541 = vpop.f32.mrf.mxu0
      %v542 = vadd.f32 0.0, %v541
      %v543 = vpop.f32.mrf.mxu0
      %v544 = vadd.f32 0.0, %v543
      %545 = vmatmul.bf16.gmra.mxu0 %v417
      %v546 = vpop.f32.mrf.mxu0
      %v547 = vadd.f32 0.0, %v546
      %v548 = vpop.f32.mrf.mxu0
      %v549 = vadd.f32 0.0, %v548
      %550 = vmatmul.bf16.gmra.mxu0 %v418
      %v551 = vpop.f32.mrf.mxu0
      %v552 = vadd.f32 0.0, %v551
      %v553 = vpop.f32.mrf.mxu0
      %v554 = vadd.f32 0.0, %v553
      %555 = vmatmul.bf16.gmra.mxu0 %v419
      %v556 = vpop.f32.mrf.mxu0
      %v557 = vadd.f32 0.0, %v556
      %v558 = vpop.f32.mrf.mxu0
      %v559 = vadd.f32 0.0, %v558
      %560 = vmatmul.bf16.gmra.mxu0 %v420
      %v561 = vpop.f32.mrf.mxu0
      %v562 = vadd.f32 0.0, %v561
      %v563 = vpop.f32.mrf.mxu0
      %v564 = vadd.f32 0.0, %v563
      %565 = vmatmul.bf16.gmra.mxu0 %v421
      %v566 = vpop.f32.mrf.mxu0
      %v567 = vadd.f32 0.0, %v566
      %v568 = vpop.f32.mrf.mxu0
      %v569 = vadd.f32 0.0, %v568
      %570 = vmatmul.bf16.gmra.mxu0 %v422
      %v571 = vpop.f32.mrf.mxu0
      %v572 = vadd.f32 0.0, %v571
      %v573 = vpop.f32.mrf.mxu0
      %v574 = vadd.f32 0.0, %v573
      %575 = vdwg.mxu0
      %576 = vst [vmem:[%s233] sm:$0xff] %v497
      %577 = vst [vmem:[%s233 + $0x8] sm:$0xff] %v499
      %578 = vst [vmem:[%s233 + $0x10] sm:$0xff] %v502
      %579 = vst [vmem:[%s233 + $0x18] sm:$0xff] %v504
      %580 = vst [vmem:[%s233 + $0x20] sm:$0xff] %v507
      %581 = vst [vmem:[%s233 + $0x28] sm:$0xff] %v509
      %582 = vst [vmem:[%s233 + $0x30] sm:$0xff] %v512
      %583 = vst [vmem:[%s233 + $0x38] sm:$0xff] %v514
      %584 = vst [vmem:[%s233 + $0x40] sm:$0xff] %v517
      %585 = vst [vmem:[%s233 + $0x48] sm:$0xff] %v519
      %586 = vst [vmem:[%s233 + $0x50] sm:$0xff] %v522
      %587 = vst [vmem:[%s233 + $0x58] sm:$0xff] %v524
      %588 = vst [vmem:[%s233 + $0x60] sm:$0xff] %v527
      %589 = vst [vmem:[%s233 + $0x68] sm:$0xff] %v529
      %590 = vst [vmem:[%s233 + $0x70] sm:$0xff] %v532
      %591 = vst [vmem:[%s233 + $0x78] sm:$0xff] %v534
      %592 = vst [vmem:[%s233 + $0x80] sm:$0xff] %v537
      %593 = vst [vmem:[%s233 + $0x88] sm:$0xff] %v539
      %594 = vst [vmem:[%s233 + $0x90] sm:$0xff] %v542
      %595 = vst [vmem:[%s233 + $0x98] sm:$0xff] %v544
      %596 = vst [vmem:[%s233 + $0xa0] sm:$0xff] %v547
      %597 = vst [vmem:[%s233 + $0xa8] sm:$0xff] %v549
      %598 = vst [vmem:[%s233 + $0xb0] sm:$0xff] %v552
      %599 = vst [vmem:[%s233 + $0xb8] sm:$0xff] %v554
      %600 = vst [vmem:[%s233 + $0xc0] sm:$0xff] %v557
      %601 = vst [vmem:[%s233 + $0xc8] sm:$0xff] %v559
      %602 = vst [vmem:[%s233 + $0xd0] sm:$0xff] %v562
      %603 = vst [vmem:[%s233 + $0xd8] sm:$0xff] %v564
      %604 = vst [vmem:[%s233 + $0xe0] sm:$0xff] %v567
      %605 = vst [vmem:[%s233 + $0xe8] sm:$0xff] %v569
      %606 = vst [vmem:[%s233 + $0xf0] sm:$0xff] %v572
      %607 = vst [vmem:[%s233 + $0xf8] sm:$0xff] %v574
      %v608 = vadd.f32 %v497, %v499
      %v609 = vadd.f32 %v608, %v502
      %v610 = vadd.f32 %v609, %v504
      %v611 = vadd.f32 %v610, %v507
      %v612 = vadd.f32 %v611, %v509
      %v613 = vadd.f32 %v612, %v512
      %v614 = vadd.f32 %v613, %v514
      %v615 = vadd.f32 %v614, %v517
      %v616 = vadd.f32 %v615, %v519
      %v617 = vadd.f32 %v616, %v522
      %v618 = vadd.f32 %v617, %v524
      %v619 = vadd.f32 %v618, %v527
      %v620 = vadd.f32 %v619, %v529
      %v621 = vadd.f32 %v620, %v532
      %v622 = vadd.f32 %v621, %v534
      %v623 = vadd.f32 %v622, %v537
      %v624 = vadd.f32 %v623, %v539
      %v625 = vadd.f32 %v624, %v542
      %v626 = vadd.f32 %v625, %v544
      %v627 = vadd.f32 %v626, %v547
      %v628 = vadd.f32 %v627, %v549
      %v629 = vadd.f32 %v628, %v552
      %v630 = vadd.f32 %v629, %v554
      %v631 = vadd.f32 %v630, %v557
      %v632 = vadd.f32 %v631, %v559
      %v633 = vadd.f32 %v632, %v562
      %v634 = vadd.f32 %v633, %v564
      %v635 = vadd.f32 %v634, %v567
      %v636 = vadd.f32 %v635, %v569
      %v637 = vadd.f32 %v636, %v572
      %v638 = vadd.f32 %v637, %v574
      %v639 = vrot.slane %v638, 4
      %v640 = vadd.f32 %v638, %v639
      %v641 = vrot.slane %v640, 2
      %v642 = vadd.f32 %v640, %v641
      %v643 = vrot.slane %v642, 1
      %v644 = vadd.f32 %v642, %v643
      %v645 = vmul.f32 %v497, %v497
      %v646 = vmul.f32 %v499, %v499
      %v647 = vmul.f32 %v502, %v502
      %v648 = vmul.f32 %v504, %v504
      %v649 = vmul.f32 %v507, %v507
      %v650 = vmul.f32 %v509, %v509
      %v651 = vmul.f32 %v512, %v512
      %v652 = vmul.f32 %v514, %v514
      %v653 = vmul.f32 %v517, %v517
      %v654 = vmul.f32 %v519, %v519
      %v655 = vmul.f32 %v522, %v522
      %v656 = vmul.f32 %v524, %v524
      %v657 = vmul.f32 %v527, %v527
      %v658 = vmul.f32 %v529, %v529
      %v659 = vmul.f32 %v532, %v532
      %v660 = vmul.f32 %v534, %v534
      %v661 = vmul.f32 %v537, %v537
      %v662 = vmul.f32 %v539, %v539
      %v663 = vmul.f32 %v542, %v542
      %v664 = vmul.f32 %v544, %v544
      %v665 = vmul.f32 %v547, %v547
      %v666 = vmul.f32 %v549, %v549
      %v667 = vmul.f32 %v552, %v552
      %v668 = vmul.f32 %v554, %v554
      %v669 = vmul.f32 %v557, %v557
      %v670 = vmul.f32 %v559, %v559
      %v671 = vmul.f32 %v562, %v562
      %v672 = vmul.f32 %v564, %v564
      %v673 = vmul.f32 %v567, %v567
      %v674 = vmul.f32 %v569, %v569
      %v675 = vmul.f32 %v572, %v572
      %v676 = vmul.f32 %v574, %v574
      %v677 = vadd.f32 %v645, %v646
      %v678 = vadd.f32 %v677, %v647
      %v679 = vadd.f32 %v678, %v648
      %v680 = vadd.f32 %v679, %v649
      %v681 = vadd.f32 %v680, %v650
      %v682 = vadd.f32 %v681, %v651
      %v683 = vadd.f32 %v682, %v652
      %v684 = vadd.f32 %v683, %v653
      %v685 = vadd.f32 %v684, %v654
      %v686 = vadd.f32 %v685, %v655
      %v687 = vadd.f32 %v686, %v656
      %v688 = vadd.f32 %v687, %v657
      %v689 = vadd.f32 %v688, %v658
      %v690 = vadd.f32 %v689, %v659
      %v691 = vadd.f32 %v690, %v660
      %v692 = vadd.f32 %v691, %v661
      %v693 = vadd.f32 %v692, %v662
      %v694 = vadd.f32 %v693, %v663
      %v695 = vadd.f32 %v694, %v664
      %v696 = vadd.f32 %v695, %v665
      %v697 = vadd.f32 %v696, %v666
      %v698 = vadd.f32 %v697, %v667
      %v699 = vadd.f32 %v698, %v668
      %v700 = vadd.f32 %v699, %v669
      %v701 = vadd.f32 %v700, %v670
      %v702 = vadd.f32 %v701, %v671
      %v703 = vadd.f32 %v702, %v672
      %v704 = vadd.f32 %v703, %v673
      %v705 = vadd.f32 %v704, %v674
      %v706 = vadd.f32 %v705, %v675
      %v707 = vadd.f32 %v706, %v676
      %v708 = vrot.slane %v707, 4
      %v709 = vadd.f32 %v707, %v708
      %v710 = vrot.slane %v709, 2
      %v711 = vadd.f32 %v709, %v710
      %v712 = vrot.slane %v711, 1
      %v713 = vadd.f32 %v711, %v712
      %vm714 = vcmask 1040384
      %v715 = vsel %vm714, %v644, %v713
      %716 = vst [vmem:[%s238] sm:$0x3] %v715
      %s717 = smul.u32 32, %s17
      %p718 = scmp.lt.s32.totalorder %s717, 63
      %s719 = scalar_select %p718, %s717, 63
      %s720 = smul.addr %s719, 8
      %s721 = scalar_lea.vmem %s4, %s720
      %p722 = scmp.lt.s32.totalorder %s17, 1
      %s723 = scalar_select %p722, %s17, 1
      %s724 = smul.addr %s723, 2
      %s725 = scalar_lea.vmem %s5, %s724
      // Predicated region
      $region37: #{inverted_residual.6} parent=35 // pred_check
        %p726 = pneg %p124
      $region38: #{inverted_residual.6} parent=35 // pred_check_branch
        %728 = sbr.rel (%p726) target = $region40
      $region39: #{inverted_residual.6} parent=35 // pred_region
        %s729 = smul.u32 32, %s17
      $region40: #{inverted_residual.6} parent=35 // pred_fallthru
        _
      // Predicated region
      $region41: #{inverted_residual.6} parent=35 // pred_check
        %p730 = pneg %p150
      $region42: #{inverted_residual.6} parent=35 // pred_check_branch
        %732 = sbr.rel (%p730) target = $region44
      $region43: #{inverted_residual.6} parent=35 // pred_region
        _
      $region44: #{inverted_residual.6} parent=35 // pred_fallthru
        _
    $region36: #{inverted_residual.6} parent=5 // pred_fallthru
      _
    %p733 = scmp.le.s32.totalorder 2, %s12
    // Predicated region
    $region45: #{inverted_residual.6} parent=5 // pred_check
      %p734 = pneg %p733
    $region46: #{inverted_residual.6} parent=5 // pred_check_branch
      %736 = sbr.rel (%p734) target = $region48
    $region47: #{inverted_residual.6} parent=5 // pred_region
      %s737 = ssub.s32 %s12, 2
      // Predicated region
      $region49: #{inverted_residual.6} parent=47 // pred_check
        %p738 = pneg %p130
      $region50: #{inverted_residual.6} parent=47 // pred_check_branch
        %740 = sbr.rel (%p738) target = $region52
      $region51: #{inverted_residual.6} parent=47 // pred_region
        %s741 = smul.u32 32, %s18
        %p742 = scmp.lt.s32.totalorder %s741, 63
        %s743 = scalar_select %p742, %s741, 63
        %s744 = smul.addr %s743, 8
        %s745 = scalar_lea.vmem %s4, %s744
      $region52: #{inverted_residual.6} parent=47 // pred_fallthru
        _
      // Predicated region
      $region53: #{inverted_residual.6} parent=47 // pred_check
        %p746 = pneg %p156
      $region54: #{inverted_residual.6} parent=47 // pred_check_branch
        %748 = sbr.rel (%p746) target = $region56
      $region55: #{inverted_residual.6} parent=47 // pred_region
        %p749 = scmp.lt.s32.totalorder %s18, 1
        %s750 = scalar_select %p749, %s18, 1
        %s751 = smul.addr %s750, 2
        %s752 = scalar_lea.vmem %s5, %s751
      $region56: #{inverted_residual.6} parent=47 // pred_fallthru
        _
    $region48: #{inverted_residual.6} parent=5 // pred_fallthru
      _
  $region6: #{inverted_residual.6} parent=0 // loop_footer
    %s16 = sadd.s32 1, %s12
  $region7: #{inverted_residual.6} parent=0 // loop_footer_branch
    %11 = sbr.rel target = $region3
  $region8: #{inverted_residual.6} parent=0 // loop_exit
    _

// kernel: inverted_residual.7
$region0: #{inverted_residual.7}
  #allocation0 [shape = 'u32[]', space=smem, size = 0x4, offset = 0x4, fixed_abs, tag = 'smem constant byte address 0x4 - core index']
  #allocation1 [shape = 'u32[72,128]{1,0:T(1,128)}', space=vmem, size = 0x9000, scoped, tag = 'internal scratch']
  %s0 = inlined_call_operand.vmem [shape: f32[512,128], index: 0, kind: input, shape index: {}]
  %s1 = inlined_call_operand.vmem [shape: f32[1,128], index: 1, kind: input, shape index: {}]
  %s2 = inlined_call_operand.vmem [shape: f32[1,128], index: 2, kind: input, shape index: {}]
  %s3 = inlined_call_operand.vmem [shape: f32[512,128], index: 3, kind: input, shape index: {}]
  %s4 = inlined_call_operand.vmem [shape: f32[512,128], index: 4, kind: output, shape index: {}]
  %s5 = sld [smem:[#allocation0]]
  $region49: #{inverted_residual.7} parent=0
    _
  %s7 = ssub.s32 1, %s5
  %s8 = scalar_select 0, %s7, %s5
  loop: start=0, step=1, limit=4
  $region2: #{inverted_residual.7} parent=0 // loop_pre_header
    _
  $region3: #{inverted_residual.7} parent=0 // loop_header
    %s10 = sphi 0, %s14
    %p11 = scmp.ge.s32.totalorder %s10, 4
    %s20 = sphi 0, %s22
    %s23 = sphi 0, %s20
    %s24 = sphi 0, %s23
    %s40 = sphi 0, %s24
    %s44 = sphi 0, %s44
    %s46 = sphi 0, %s44
    %s47 = sphi 0, %s46
    %s61 = sphi 0, %s47
    %s65 = sphi 0, %s65
    %s67 = sphi 0, %s65
    %s68 = sphi 0, %s67
    %s82 = sphi 0, %s68
    %s88 = sphi 0, %s90
    %s91 = sphi 0, %s88
    %s92 = sphi 0, %s91
    %s108 = sphi 0, %s92
    %s114 = sphi 0, %s116
    %s117 = sphi 0, %s114
    %s118 = sphi 0, %s117
    %s134 = sphi 0, %s118
  $region4: #{inverted_residual.7} parent=0 // loop_header_branch
    %13 = sbr.rel (%p11) target = $region8
  $region5: #{inverted_residual.7} parent=0 // loop_body
    %s15 = ssub.s32 %s10, 1
    %s16 = ssub.s32 %s10, 2
    %s17 = sadd.s32 %s10, 1
    %s18 = ssub.s32 %s10, %s17
    %p19 = scmp.eq.s32.totalorder %s18, 0
    %s21 = sadd.s32 %s20, 1
    %s22 = scalar_select %p19, %s20, %s21
    %p25 = pneg %p19
    %p26 = scmp.eq.s32.totalorder %s10, 1
    %p27 = por %p25, %p26
    %p28 = scmp.ne.s32.totalorder %s20, %s23
    %p29 = scmp.eq.s32.totalorder %s10, 0
    %p30 = por %p28, %p29
    %p31 = scmp.ne.s32.totalorder %s20, %s23
    %p32 = scmp.eq.s32.totalorder %s15, 1
    %p33 = por %p31, %p32
    %p34 = scmp.ne.s32.totalorder %s23, %s24
    %p35 = scmp.eq.s32.totalorder %s15, 0
    %p36 = por %p34, %p35
    %p37 = scmp.ne.s32.totalorder %s23, %s24
    %p38 = scmp.eq.s32.totalorder %s16, 1
    %p39 = por %p37, %p38
    %p41 = scmp.ne.s32.totalorder %s24, %s40
    %p42 = scmp.eq.s32.totalorder %s16, 0
    %p43 = por %p41, %p42
    %s45 = sadd.s32 %s44, 1
    %p48 = scmp.eq.s32.totalorder %s10, 1
    %p49 = scmp.ne.s32.totalorder %s44, %s46
    %p50 = scmp.eq.s32.totalorder %s10, 0
    %p51 = por %p49, %p50
    %p52 = scmp.ne.s32.totalorder %s44, %s46
    %p53 = scmp.eq.s32.totalorder %s15, 1
    %p54 = por %p52, %p53
    %p55 = scmp.ne.s32.totalorder %s46, %s47
    %p56 = scmp.eq.s32.totalorder %s15, 0
    %p57 = por %p55, %p56
    %p58 = scmp.ne.s32.totalorder %s46, %s47
    %p59 = scmp.eq.s32.totalorder %s16, 1
    %p60 = por %p58, %p59
    %p62 = scmp.ne.s32.totalorder %s47, %s61
    %p63 = scmp.eq.s32.totalorder %s16, 0
    %p64 = por %p62, %p63
    %s66 = sadd.s32 %s65, 1
    %p69 = scmp.eq.s32.totalorder %s10, 1
    %p70 = scmp.ne.s32.totalorder %s65, %s67
    %p71 = scmp.eq.s32.totalorder %s10, 0
    %p72 = por %p70, %p71
    %p73 = scmp.ne.s32.totalorder %s65, %s67
    %p74 = scmp.eq.s32.totalorder %s15, 1
    %p75 = por %p73, %p74
    %p76 = scmp.ne.s32.totalorder %s67, %s68
    %p77 = scmp.eq.s32.totalorder %s15, 0
    %p78 = por %p76, %p77
    %p79 = scmp.ne.s32.totalorder %s67, %s68
    %p80 = scmp.eq.s32.totalorder %s16, 1
    %p81 = por %p79, %p80
    %p83 = scmp.ne.s32.totalorder %s68, %s82
    %p84 = scmp.eq.s32.totalorder %s16, 0
    %p85 = por %p83, %p84
    %s86 = ssub.s32 %s10, %s17
    %p87 = scmp.eq.s32.totalorder %s86, 0
    %s89 = sadd.s32 %s88, 1
    %s90 = scalar_select %p87, %s88, %s89
    %p93 = pneg %p87
    %p94 = scmp.eq.s32.totalorder %s10, 1
    %p95 = por %p93, %p94
    %p96 = scmp.ne.s32.totalorder %s88, %s91
    %p97 = scmp.eq.s32.totalorder %s10, 0
    %p98 = por %p96, %p97
    %p99 = scmp.ne.s32.totalorder %s88, %s91
    %p100 = scmp.eq.s32.totalorder %s15, 1
    %p101 = por %p99, %p100
    %p102 = scmp.ne.s32.totalorder %s91, %s92
    %p103 = scmp.eq.s32.totalorder %s15, 0
    %p104 = por %p102, %p103
    %p105 = scmp.ne.s32.totalorder %s91, %s92
    %p106 = scmp.eq.s32.totalorder %s16, 1
    %p107 = por %p105, %p106
    %p109 = scmp.ne.s32.totalorder %s92, %s108
    %p110 = scmp.eq.s32.totalorder %s16, 0
    %p111 = por %p109, %p110
    %s112 = ssub.s32 %s10, %s17
    %p113 = scmp.eq.s32.totalorder %s112, 0
    %s115 = sadd.s32 %s114, 1
    %s116 = scalar_select %p113, %s114, %s115
    %p119 = pneg %p113
    %p120 = scmp.eq.s32.totalorder %s10, 1
    %p121 = por %p119, %p120
    %p122 = scmp.ne.s32.totalorder %s114, %s117
    %p123 = scmp.eq.s32.totalorder %s10, 0
    %p124 = por %p122, %p123
    %p125 = scmp.ne.s32.totalorder %s114, %s117
    %p126 = scmp.eq.s32.totalorder %s15, 1
    %p127 = por %p125, %p126
    %p128 = scmp.ne.s32.totalorder %s117, %s118
    %p129 = scmp.eq.s32.totalorder %s15, 0
    %p130 = por %p128, %p129
    %p131 = scmp.ne.s32.totalorder %s117, %s118
    %p132 = scmp.eq.s32.totalorder %s16, 1
    %p133 = por %p131, %p132
    %p135 = scmp.ne.s32.totalorder %s118, %s134
    %p136 = scmp.eq.s32.totalorder %s16, 0
    %p137 = por %p135, %p136
    %p138 = scmp.le.s32.totalorder 1, %s10
    %p139 = scmp.lt.s32.totalorder %s10, 3
    %p140 = pnand %p138, %p139
    %p141 = pneg %p140
    // Predicated region
    $region9: #{inverted_residual.7} parent=5 // pred_check
      _
    $region10: #{inverted_residual.7} parent=5 // pred_check_branch
      %143 = sbr.rel (%p140) target = $region12
    $region11: #{inverted_residual.7} parent=5 // pred_region
      %s144 = ssub.s32 %s10, 1
      // Predicated region
      $region13: #{inverted_residual.7} parent=11 // pred_check
        %p145 = pneg %p57
      $region14: #{inverted_residual.7} parent=11 // pred_check_branch
        %147 = sbr.rel (%p145) target = $region16
      $region15: #{inverted_residual.7} parent=11 // pred_region
        _
      $region16: #{inverted_residual.7} parent=11 // pred_fallthru
        _
      // Predicated region
      $region17: #{inverted_residual.7} parent=11 // pred_check
        %p148 = pneg %p78
      $region18: #{inverted_residual.7} parent=11 // pred_check_branch
        %150 = sbr.rel (%p148) target = $region20
      $region19: #{inverted_residual.7} parent=11 // pred_region
        _
      $region20: #{inverted_residual.7} parent=11 // pred_fallthru
        _
    $region12: #{inverted_residual.7} parent=5 // pred_fallthru
      _
    %p151 = scmp.lt.s32.totalorder %s10, 2
    // Predicated region
    $region21: #{inverted_residual.7} parent=5 // pred_check
      %p152 = pneg %p151
    $region22: #{inverted_residual.7} parent=5 // pred_check_branch
      %154 = sbr.rel (%p152) target = $region24
    $region23: #{inverted_residual.7} parent=5 // pred_region
      // Predicated region
      $region25: #{inverted_residual.7} parent=23 // pred_check
        %p155 = pneg %p30
      $region26: #{inverted_residual.7} parent=23 // pred_check_branch
        %157 = sbr.rel (%p155) target = $region28
      $region27: #{inverted_residual.7} parent=23 // pred_region
        %s158 = smul.u32 32, %s10
        %p159 = scmp.lt.s32.totalorder %s158, 63
        %s160 = scalar_select %p159, %s158, 63
        %s161 = smul.addr %s160, 8
        %s162 = scalar_lea.vmem %s0, %s161
        %s163 = smul.u32 32, %s10
      $region28: #{inverted_residual.7} parent=23 // pred_fallthru
        _
      // Predicated region
      $region29: #{inverted_residual.7} parent=23 // pred_check
        %p164 = pneg %p98
      $region30: #{inverted_residual.7} parent=23 // pred_check_branch
        %166 = sbr.rel (%p164) target = $region32
      $region31: #{inverted_residual.7} parent=23 // pred_region
        %s167 = smul.u32 32, %s10
        %p168 = scmp.lt.s32.totalorder %s167, 63
        %s169 = scalar_select %p168, %s167, 63
        %s170 = smul.addr %s169, 8
        %s171 = scalar_lea.vmem %s3, %s170
        %s172 = smul.u32 32, %s10
      $region32: #{inverted_residual.7} parent=23 // pred_fallthru
        _
    $region24: #{inverted_residual.7} parent=5 // pred_fallthru
      _
    %p173 = scmp.le.s32.totalorder 1, %s10
    %p174 = scmp.lt.s32.totalorder %s10, 3
    %p175 = pnand %p173, %p174
    %p176 = pneg %p175
    // Predicated region
    $region33: #{inverted_residual.7} parent=5 // pred_check
      _
    $region34: #{inverted_residual.7} parent=5 // pred_check_branch
      %178 = sbr.rel (%p175) target = $region36
    $region35: #{inverted_residual.7} parent=5 // pred_region
      %s179 = ssub.s32 %s10, 1
      %s180 = smul.u32 32, %s15
      %p181 = scmp.lt.s32.totalorder %s180, 63
      %s182 = scalar_select %p181, %s180, 63
      %s183 = smul.addr %s182, 8
      %s184 = scalar_lea.vmem %s0, %s183
      %p185 = pneg %p36
      %p186 = pneg %p33
      %p187 = pneg %p57
      %p188 = pneg %p54
      %p189 = pneg %p78
      %p190 = pneg %p75
      %s191 = smul.u32 32, %s15
      %p192 = scmp.lt.s32.totalorder %s191, 63
      %s193 = scalar_select %p192, %s191, 63
      %s194 = smul.addr %s193, 8
      %s195 = scalar_lea.vmem %s3, %s194
      %p196 = pneg %p104
      %p197 = pneg %p101
      %p198 = pneg %p130
      %p199 = pneg %p127
      %s200 = smul.u32 32, %s15
      %p201 = scmp.lt.s32.totalorder %s200, 63
      %s202 = scalar_select %p201, %s200, 63
      %s203 = smul.addr %s202, 8
      %s204 = scalar_lea.vmem %s4, %s203
      %s205 = smul.u32 32, %s15
      %p206 = scmp.lt.s32.totalorder %s205, 63
      %s207 = scalar_select %p206, %s205, 63
      %s208 = smul.addr %s207, 8
      %s209 = scalar_lea.vmem %s0, %s208
      %s210 = smul.u32 32, %s15
      %s211 = smul.u32 32, %s15
      %p212 = scmp.lt.s32.totalorder %s211, 63
      %s213 = scalar_select %p212, %s211, 63
      %s214 = smul.addr %s213, 8
      %s215 = scalar_lea.vmem %s3, %s214
      %s216 = smul.u32 32, %s15
      %s217 = smul.u32 32, %s15
      %p218 = scmp.lt.s32.totalorder %s217, 63
      %s219 = scalar_select %p218, %s217, 63
      %s220 = smul.addr %s219, 8
      %s221 = scalar_lea.vmem %s4, %s220
      %s222 = smul.u32 32, %s15
      %v223 = vld [vmem:[%s209] sm:$0xff]
      %v224 = vld [vmem:[%s209 + $0x8] sm:$0xff]
      %v225 = vld [vmem:[%s209 + $0x10] sm:$0xff]
      %v226 = vld [vmem:[%s209 + $0x18] sm:$0xff]
      %v227 = vld [vmem:[%s209 + $0x20] sm:$0xff]
      %v228 = vld [vmem:[%s209 + $0x28] sm:$0xff]
      %v229 = vld [vmem:[%s209 + $0x30] sm:$0xff]
      %v230 = vld [vmem:[%s209 + $0x38] sm:$0xff]
      %v231 = vld [vmem:[%s209 + $0x40] sm:$0xff]
      %v232 = vld [vmem:[%s209 + $0x48] sm:$0xff]
      %v233 = vld [vmem:[%s209 + $0x50] sm:$0xff]
      %v234 = vld [vmem:[%s209 + $0x58] sm:$0xff]
      %v235 = vld [vmem:[%s209 + $0x60] sm:$0xff]
      %v236 = vld [vmem:[%s209 + $0x68] sm:$0xff]
      %v237 = vld [vmem:[%s209 + $0x70] sm:$0xff]
      %v238 = vld [vmem:[%s209 + $0x78] sm:$0xff]
      %v239 = vld [vmem:[%s209 + $0x80] sm:$0xff]
      %v240 = vld [vmem:[%s209 + $0x88] sm:$0xff]
      %v241 = vld [vmem:[%s209 + $0x90] sm:$0xff]
      %v242 = vld [vmem:[%s209 + $0x98] sm:$0xff]
      %v243 = vld [vmem:[%s209 + $0xa0] sm:$0xff]
      %v244 = vld [vmem:[%s209 + $0xa8] sm:$0xff]
      %v245 = vld [vmem:[%s209 + $0xb0] sm:$0xff]
      %v246 = vld [vmem:[%s209 + $0xb8] sm:$0xff]
      %v247 = vld [vmem:[%s209 + $0xc0] sm:$0xff]
      %v248 = vld [vmem:[%s209 + $0xc8] sm:$0xff]
      %v249 = vld [vmem:[%s209 + $0xd0] sm:$0xff]
      %v250 = vld [vmem:[%s209 + $0xd8] sm:$0xff]
      %v251 = vld [vmem:[%s209 + $0xe0] sm:$0xff]
      %v252 = vld [vmem:[%s209 + $0xe8] sm:$0xff]
      %v253 = vld [vmem:[%s209 + $0xf0] sm:$0xff]
      %v254 = vld [vmem:[%s209 + $0xf8] sm:$0xff]
      %v255 = vld [vmem:[%s1] sm:$0x1]
      %v257 = vperm.slane %v255, 0
      %v259 = vmul.f32 %v223, %v257
      %v260 = vmul.f32 %v224, %v257
      %v261 = vmul.f32 %v225, %v257
      %v262 = vmul.f32 %v226, %v257
      %v263 = vmul.f32 %v227, %v257
      %v264 = vmul.f32 %v228, %v257
      %v265 = vmul.f32 %v229, %v257
      %v266 = vmul.f32 %v230, %v257
      %v267 = vmul.f32 %v231, %v257
      %v268 = vmul.f32 %v232, %v257
      %v269 = vmul.f32 %v233, %v257
      %v270 = vmul.f32 %v234, %v257
      %v271 = vmul.f32 %v235, %v257
      %v272 = vmul.f32 %v236, %v257
      %v273 = vmul.f32 %v237, %v257
      %v274 = vmul.f32 %v238, %v257
      %v275 = vmul.f32 %v239, %v257
      %v276 = vmul.f32 %v240, %v257
      %v277 = vmul.f32 %v241, %v257
      %v278 = vmul.f32 %v242, %v257
      %v279 = vmul.f32 %v243, %v257
      %v280 = vmul.f32 %v244, %v257
      %v281 = vmul.f32 %v245, %v257
      %v282 = vmul.f32 %v246, %v257
      %v283 = vmul.f32 %v247, %v257
      %v284 = vmul.f32 %v248, %v257
      %v285 = vmul.f32 %v249, %v257
      %v286 = vmul.f32 %v250, %v257
      %v287 = vmul.f32 %v251, %v257
      %v288 = vmul.f32 %v252, %v257
      %v289 = vmul.f32 %v253, %v257
      %v290 = vmul.f32 %v254, %v257
      %v291 = vld [vmem:[%s2] sm:$0x1]
      %v293 = vperm.slane %v291, 0
      %v295 = vadd.f32 %v259, %v293
      %v296 = vadd.f32 %v260, %v293
      %v297 = vadd.f32 %v261, %v293
      %v298 = vadd.f32 %v262, %v293
      %v299 = vadd.f32 %v263, %v293
      %v300 = vadd.f32 %v264, %v293
      %v301 = vadd.f32 %v265, %v293
      %v302 = vadd.f32 %v266, %v293
      %v303 = vadd.f32 %v267, %v293
      %v304 = vadd.f32 %v268, %v293
      %v305 = vadd.f32 %v269, %v293
      %v306 = vadd.f32 %v270, %v293
      %v307 = vadd.f32 %v271, %v293
      %v308 = vadd.f32 %v272, %v293
      %v309 = vadd.f32 %v273, %v293
      %v310 = vadd.f32 %v274, %v293
      %v311 = vadd.f32 %v275, %v293
      %v312 = vadd.f32 %v276, %v293
      %v313 = vadd.f32 %v277, %v293
      %v314 = vadd.f32 %v278, %v293
      %v315 = vadd.f32 %v279, %v293
      %v316 = vadd.f32 %v280, %v293
      %v317 = vadd.f32 %v281, %v293
      %v318 = vadd.f32 %v282, %v293
      %v319 = vadd.f32 %v283, %v293
      %v320 = vadd.f32 %v284, %v293
      %v321 = vadd.f32 %v285, %v293
      %v322 = vadd.f32 %v286, %v293
      %v323 = vadd.f32 %v287, %v293
      %v324 = vadd.f32 %v288, %v293
      %v325 = vadd.f32 %v289, %v293
      %v326 = vadd.f32 %v290, %v293
      %v327 = vld [vmem:[%s215] sm:$0xff]
      %v328 = vld [vmem:[%s215 + $0x8] sm:$0xff]
      %v329 = vld [vmem:[%s215 + $0x10] sm:$0xff]
      %v330 = vld [vmem:[%s215 + $0x18] sm:$0xff]
      %v331 = vld [vmem:[%s215 + $0x20] sm:$0xff]
      %v332 = vld [vmem:[%s215 + $0x28] sm:$0xff]
      %v333 = vld [vmem:[%s215 + $0x30] sm:$0xff]
      %v334 = vld [vmem:[%s215 + $0x38] sm:$0xff]
      %v335 = vld [vmem:[%s215 + $0x40] sm:$0xff]
      %v336 = vld [vmem:[%s215 + $0x48] sm:$0xff]
      %v337 = vld [vmem:[%s215 + $0x50] sm:$0xff]
      %v338 = vld [vmem:[%s215 + $0x58] sm:$0xff]
      %v339 = vld [vmem:[%s215 + $0x60] sm:$0xff]
      %v340 = vld [vmem:[%s215 + $0x68] sm:$0xff]
      %v341 = vld [vmem:[%s215 + $0x70] sm:$0xff]
      %v342 = vld [vmem:[%s215 + $0x78] sm:$0xff]
      %v343 = vld [vmem:[%s215 + $0x80] sm:$0xff]
      %v344 = vld [vmem:[%s215 + $0x88] sm:$0xff]
      %v345 = vld [vmem:[%s215 + $0x90] sm:$0xff]
      %v346 = vld [vmem:[%s215 + $0x98] sm:$0xff]
      %v347 = vld [vmem:[%s215 + $0xa0] sm:$0xff]
      %v348 = vld [vmem:[%s215 + $0xa8] sm:$0xff]
      %v349 = vld [vmem:[%s215 + $0xb0] sm:$0xff]
      %v350 = vld [vmem:[%s215 + $0xb8] sm:$0xff]
      %v351 = vld [vmem:[%s215 + $0xc0] sm:$0xff]
      %v352 = vld [vmem:[%s215 + $0xc8] sm:$0xff]
      %v353 = vld [vmem:[%s215 + $0xd0] sm:$0xff]
      %v354 = vld [vmem:[%s215 + $0xd8] sm:$0xff]
      %v355 = vld [vmem:[%s215 + $0xe0] sm:$0xff]
      %v356 = vld [vmem:[%s215 + $0xe8] sm:$0xff]
      %v357 = vld [vmem:[%s215 + $0xf0] sm:$0xff]
      %v358 = vld [vmem:[%s215 + $0xf8] sm:$0xff]
      %v359 = vadd.f32 %v295, %v327
      %v360 = vadd.f32 %v296, %v328
      %v361 = vadd.f32 %v297, %v329
      %v362 = vadd.f32 %v298, %v330
      %v363 = vadd.f32 %v299, %v331
      %v364 = vadd.f32 %v300, %v332
      %v365 = vadd.f32 %v301, %v333
      %v366 = vadd.f32 %v302, %v334
      %v367 = vadd.f32 %v303, %v335
      %v368 = vadd.f32 %v304, %v336
      %v369 = vadd.f32 %v305, %v337
      %v370 = vadd.f32 %v306, %v338
      %v371 = vadd.f32 %v307, %v339
      %v372 = vadd.f32 %v308, %v340
      %v373 = vadd.f32 %v309, %v341
      %v374 = vadd.f32 %v310, %v342
      %v375 = vadd.f32 %v311, %v343
      %v376 = vadd.f32 %v312, %v344
      %v377 = vadd.f32 %v313, %v345
      %v378 = vadd.f32 %v314, %v346
      %v379 = vadd.f32 %v315, %v347
      %v380 = vadd.f32 %v316, %v348
      %v381 = vadd.f32 %v317, %v349
      %v382 = vadd.f32 %v318, %v350
      %v383 = vadd.f32 %v319, %v351
      %v384 = vadd.f32 %v320, %v352
      %v385 = vadd.f32 %v321, %v353
      %v386 = vadd.f32 %v322, %v354
      %v387 = vadd.f32 %v323, %v355
      %v388 = vadd.f32 %v324, %v356
      %v389 = vadd.f32 %v325, %v357
      %v390 = vadd.f32 %v326, %v358
      %391 = vst [vmem:[%s221] sm:$0xff] %v359
      %392 = vst [vmem:[%s221 + $0x8] sm:$0xff] %v360
      %393 = vst [vmem:[%s221 + $0x10] sm:$0xff] %v361
      %394 = vst [vmem:[%s221 + $0x18] sm:$0xff] %v362
      %395 = vst [vmem:[%s221 + $0x20] sm:$0xff] %v363
      %396 = vst [vmem:[%s221 + $0x28] sm:$0xff] %v364
      %397 = vst [vmem:[%s221 + $0x30] sm:$0xff] %v365
      %398 = vst [vmem:[%s221 + $0x38] sm:$0xff] %v366
      %399 = vst [vmem:[%s221 + $0x40] sm:$0xff] %v367
      %400 = vst [vmem:[%s221 + $0x48] sm:$0xff] %v368
      %401 = vst [vmem:[%s221 + $0x50] sm:$0xff] %v369
      %402 = vst [vmem:[%s221 + $0x58] sm:$0xff] %v370
      %403 = vst [vmem:[%s221 + $0x60] sm:$0xff] %v371
      %404 = vst [vmem:[%s221 + $0x68] sm:$0xff] %v372
      %405 = vst [vmem:[%s221 + $0x70] sm:$0xff] %v373
      %406 = vst [vmem:[%s221 + $0x78] sm:$0xff] %v374
      %407 = vst [vmem:[%s221 + $0x80] sm:$0xff] %v375
      %408 = vst [vmem:[%s221 + $0x88] sm:$0xff] %v376
      %409 = vst [vmem:[%s221 + $0x90] sm:$0xff] %v377
      %410 = vst [vmem:[%s221 + $0x98] sm:$0xff] %v378
      %411 = vst [vmem:[%s221 + $0xa0] sm:$0xff] %v379
      %412 = vst [vmem:[%s221 + $0xa8] sm:$0xff] %v380
      %413 = vst [vmem:[%s221 + $0xb0] sm:$0xff] %v381
      %414 = vst [vmem:[%s221 + $0xb8] sm:$0xff] %v382
      %415 = vst [vmem:[%s221 + $0xc0] sm:$0xff] %v383
      %416 = vst [vmem:[%s221 + $0xc8] sm:$0xff] %v384
      %417 = vst [vmem:[%s221 + $0xd0] sm:$0xff] %v385
      %418 = vst [vmem:[%s221 + $0xd8] sm:$0xff] %v386
      %419 = vst [vmem:[%s221 + $0xe0] sm:$0xff] %v387
      %420 = vst [vmem:[%s221 + $0xe8] sm:$0xff] %v388
      %421 = vst [vmem:[%s221 + $0xf0] sm:$0xff] %v389
      %422 = vst [vmem:[%s221 + $0xf8] sm:$0xff] %v390
      %s423 = smul.u32 32, %s15
      %p424 = scmp.lt.s32.totalorder %s423, 63
      %s425 = scalar_select %p424, %s423, 63
      %s426 = smul.addr %s425, 8
      %s427 = scalar_lea.vmem %s4, %s426
      // Predicated region
      $region37: #{inverted_residual.7} parent=35 // pred_check
        %p428 = pneg %p127
      $region38: #{inverted_residual.7} parent=35 // pred_check_branch
        %430 = sbr.rel (%p428) target = $region40
      $region39: #{inverted_residual.7} parent=35 // pred_region
        %s431 = smul.u32 32, %s15
      $region40: #{inverted_residual.7} parent=35 // pred_fallthru
        _
    $region36: #{inverted_residual.7} parent=5 // pred_fallthru
      _
    %p432 = scmp.le.s32.totalorder 2, %s10
    // Predicated region
    $region41: #{inverted_residual.7} parent=5 // pred_check
      %p433 = pneg %p432
    $region42: #{inverted_residual.7} parent=5 // pred_check_branch
      %435 = sbr.rel (%p433) target = $region44
    $region43: #{inverted_residual.7} parent=5 // pred_region
      %s436 = ssub.s32 %s10, 2
      // Predicated region
      $region45: #{inverted_residual.7} parent=43 // pred_check
        %p437 = pneg %p133
      $region46: #{inverted_residual.7} parent=43 // pred_check_branch
        %439 = sbr.rel (%p437) target = $region48
      $region47: #{inverted_residual.7} parent=43 // pred_region
        %s440 = smul.u32 32, %s16
        %p441 = scmp.lt.s32.totalorder %s440, 63
        %s442 = scalar_select %p441, %s440, 63
        %s443 = smul.addr %s442, 8
        %s444 = scalar_lea.vmem %s4, %s443
      $region48: #{inverted_residual.7} parent=43 // pred_fallthru
        _
    $region44: #{inverted_residual.7} parent=5 // pred_fallthru
      _
  $region6: #{inverted_residual.7} parent=0 // loop_footer
    %s14 = sadd.s32 1, %s10
  $region7: #{inverted_residual.7} parent=0 // loop_footer_branch
    %9 = sbr.rel target = $region3
  $region8: #{inverted_residual.7} parent=0 // loop_exit
    _

// kernel: inverted_residual.5
$region0: #{inverted_residual.5}
  #allocation0 [shape = 'u32[]', space=smem, size = 0x4, offset = 0x4, fixed_abs, tag = 'smem constant byte address 0x4 - core index']
  #allocation1 [shape = 'u32[72,128]{1,0:T(1,128)}', space=vmem, size = 0x9000, scoped, tag = 'internal scratch']
  %s0 = inlined_call_operand.vmem [shape: f32[2,16,16,128], index: 0, kind: input, shape index: {}]
  %s1 = inlined_call_operand.vmem [shape: f32[3,3,128], index: 1, kind: input, shape index: {}]
  %s2 = inlined_call_operand.vmem [shape: f32[1,128], index: 2, kind: input, shape index: {}]
  %s3 = inlined_call_operand.vmem [shape: f32[1,128], index: 3, kind: input, shape index: {}]
  %s4 = inlined_call_operand.vmem [shape: f32[2,16,16,128], index: 4, kind: output, shape index: {0}]
  %s5 = inlined_call_operand.vmem [shape: f32[2,2,128], index: 5, kind: output, shape index: {1}]
  %6 = xla_tuple %s4, %s5
  %s7 = sld [smem:[#allocation0]]
  $region57: #{inverted_residual.5} parent=0
    _
  %s9 = ssub.s32 1, %s7
  %s10 = scalar_select 0, %s9, %s7
  loop: start=0, step=1, limit=4
  $region2: #{inverted_residual.5} parent=0 // loop_pre_header
    _
  $region3: #{inverted_residual.5} parent=0 // loop_header
    %s12 = sphi 0, %s16
    %p13 = scmp.ge.s32.totalorder %s12, 4
    %s22 = sphi 0, %s24
    %s25 = sphi 0, %s22
    %s26 = sphi 0, %s25
    %s42 = sphi 0, %s26
    %s46 = sphi 0, %s46
    %s48 = sphi 0, %s46
    %s49 = sphi 0, %s48
    %s63 = sphi 0, %s49
    %s67 = sphi 0, %s67
    %s69 = sphi 0, %s67
    %s70 = sphi 0, %s69
    %s84 = sphi 0, %s70
    %s88 = sphi 0, %s88
    %s90 = sphi 0, %s88
    %s91 = sphi 0, %s90
    %s105 = sphi 0, %s91
    %s111 = sphi 0, %s113
    %s114 = sphi 0, %s111
    %s115 = sphi 0, %s114
    %s131 = sphi 0, %s115
    %s137 = sphi 0, %s139
    %s140 = sphi 0, %s137
    %s141 = sphi 0, %s140
    %s157 = sphi 0, %s141
  $region4: #{inverted_residual.5} parent=0 // loop_header_branch
    %15 = sbr.rel (%p13) target = $region8
  $region5: #{inverted_residual.5} parent=0 // loop_body
    %s17 = ssub.s32 %s12, 1
    %s18 = ssub.s32 %s12, 2
    %s19 = sadd.s32 %s12, 1
    %s20 = ssub.s32 %s12, %s19
    %p21 = scmp.eq.s32.totalorder %s20, 0
    %s23 = sadd.s32 %s22, 1
    %s24 = scalar_select %p21, %s22, %s23
    %p27 = pneg %p21
    %p28 = scmp.eq.s32.totalorder %s12, 1
    %p29 = por %p27, %p28
    %p30 = scmp.ne.s32.totalorder %s22, %s25
    %p31 = scmp.eq.s32.totalorder %s12, 0
    %p32 = por %p30, %p31
    %p33 = scmp.ne.s32.totalorder %s22, %s25
    %p34 = scmp.eq.s32.totalorder %s17, 1
    %p35 = por %p33, %p34
    %p36 = scmp.ne.s32.totalorder %s25, %s26
    %p37 = scmp.eq.s32.totalorder %s17, 0
    %p38 = por %p36, %p37
    %p39 = scmp.ne.s32.totalorder %s25, %s26
    %p40 = scmp.eq.s32.totalorder %s18, 1
    %p41 = por %p39, %p40
    %p43 = scmp.ne.s32.totalorder %s26, %s42
    %p44 = scmp.eq.s32.totalorder %s18, 0
    %p45 = por %p43, %p44
    %s47 = sadd.s32 %s46, 1
    %p50 = scmp.eq.s32.totalorder %s12, 1
    %p51 = scmp.ne.s32.totalorder %s46, %s48
    %p52 = scmp.eq.s32.totalorder %s12, 0
    %p53 = por %p51, %p52
    %p54 = scmp.ne.s32.totalorder %s46, %s48
    %p55 = scmp.eq.s32.totalorder %s17, 1
    %p56 = por %p54, %p55
    %p57 = scmp.ne.s32.totalorder %s48, %s49
    %p58 = scmp.eq.s32.totalorder %s17, 0
    %p59 = por %p57, %p58
    %p60 = scmp.ne.s32.totalorder %s48, %s49
    %p61 = scmp.eq.s32.totalorder %s18, 1
    %p62 = por %p60, %p61
    %p64 = scmp.ne.s32.totalorder %s49, %s63
    %p65 = scmp.eq.s32.totalorder %s18, 0
    %p66 = por %p64, %p65
    %s68 = sadd.s32 %s67, 1
    %p71 = scmp.eq.s32.totalorder %s12, 1
    %p72 = scmp.ne.s32.totalorder %s67, %s69
    %p73 = scmp.eq.s32.totalorder %s12, 0
    %p74 = por %p72, %p73
    %p75 = scmp.ne.s32.totalorder %s67, %s69
    %p76 = scmp.eq.s32.totalorder %s17, 1
    %p77 = por %p75, %p76
    %p78 = scmp.ne.s32.totalorder %s69, %s70
    %p79 = scmp.eq.s32.totalorder %s17, 0
    %p80 = por %p78, %p79
    %p81 = scmp.ne.s32.totalorder %s69, %s70
    %p82 = scmp.eq.s32.totalorder %s18, 1
    %p83 = por %p81, %p82
    %p85 = scmp.ne.s32.totalorder %s70, %s84
    %p86 = scmp.eq.s32.totalorder %s18, 0
    %p87 = por %p85, %p86
    %s89 = sadd.s32 %s88, 1
    %p92 = scmp.eq.s32.totalorder %s12, 1
    %p93 = scmp.ne.s32.totalorder %s88, %s90
    %p94 = scmp.eq.s32.totalorder %s12, 0
    %p95 = por %p93, %p94
    %p96 = scmp.ne.s32.totalorder %s88, %s90
    %p97 = scmp.eq.s32.totalorder %s17, 1
    %p98 = por %p96, %p97
    %p99 = scmp.ne.s32.totalorder %s90, %s91
    %p100 = scmp.eq.s32.totalorder %s17, 0
    %p101 = por %p99, %p100
    %p102 = scmp.ne.s32.totalorder %s90, %s91
    %p103 = scmp.eq.s32.totalorder %s18, 1
    %p104 = por %p102, %p103
    %p106 = scmp.ne.s32.totalorder %s91, %s105
    %p107 = scmp.eq.s32.totalorder %s18, 0
    %p108 = por %p106, %p107
    %s109 = ssub.s32 %s12, %s19
    %p110 = scmp.eq.s32.totalorder %s109, 0
    %s112 = sadd.s32 %s111, 1
    %s113 = scalar_select %p110, %s111, %s112
    %p116 = pneg %p110
    %p117 = scmp.eq.s32.totalorder %s12, 1
    %p118 = por %p116, %p117
    %p119 = scmp.ne.s32.totalorder %s111, %s114
    %p120 = scmp.eq.s32.totalorder %s12, 0
    %p121 = por %p119, %p120
    %p122 = scmp.ne.s32.totalorder %s111, %s114
    %p123 = scmp.eq.s32.totalorder %s17, 1
    %p124 = por %p122, %p123
    %p125 = scmp.ne.s32.totalorder %s114, %s115
    %p126 = scmp.eq.s32.totalorder %s17, 0
    %p127 = por %p125, %p126
    %p128 = scmp.ne.s32.totalorder %s114, %s115
    %p129 = scmp.eq.s32.totalorder %s18, 1
    %p130 = por %p128, %p129
    %p132 = scmp.ne.s32.totalorder %s115, %s131
    %p133 = scmp.eq.s32.totalorder %s18, 0
    %p134 = por %p132, %p133
    %s135 = ssub.s32 %s12, %s19
    %p136 = scmp.eq.s32.totalorder %s135, 0
    %s138 = sadd.s32 %s137, 1
    %s139 = scalar_select %p136, %s137, %s138
    %p142 = pneg %p136
    %p143 = scmp.eq.s32.totalorder %s12, 1
    %p144 = por %p142, %p143
    %p145 = scmp.ne.s32.totalorder %s137, %s140
    %p146 = scmp.eq.s32.totalorder %s12, 0
    %p147 = por %p145, %p146
    %p148 = scmp.ne.s32.totalorder %s137, %s140
    %p149 = scmp.eq.s32.totalorder %s17, 1
    %p150 = por %p148, %p149
    %p151 = scmp.ne.s32.totalorder %s140, %s141
    %p152 = scmp.eq.s32.totalorder %s17, 0
    %p153 = por %p151, %p152
    %p154 = scmp.ne.s32.totalorder %s140, %s141
    %p155 = scmp.eq.s32.totalorder %s18, 1
    %p156 = por %p154, %p155
    %p158 = scmp.ne.s32.totalorder %s141, %s157
    %p159 = scmp.eq.s32.totalorder %s18, 0
    %p160 = por %p158, %p159
    %p161 = scmp.le.s32.totalorder 1, %s12
    %p162 = scmp.lt.s32.totalorder %s12, 3
    %p163 = pnand %p161, %p162
    %p164 = pneg %p163
    // Predicated region
    $region9: #{inverted_residual.5} parent=5 // pred_check
      _
    $region10: #{inverted_residual.5} parent=5 // pred_check_branch
      %166 = sbr.rel (%p163) target = $region12
    $region11: #{inverted_residual.5} parent=5 // pred_region
      %s167 = ssub.s32 %s12, 1
      // Predicated region
      $region13: #{inverted_residual.5} parent=11 // pred_check
        %p168 = pneg %p59
      $region14: #{inverted_residual.5} parent=11 // pred_check_branch
        %170 = sbr.rel (%p168) target = $region16
      $region15: #{inverted_residual.5} parent=11 // pred_region
        _
      $region16: #{inverted_residual.5} parent=11 // pred_fallthru
        _
      // Predicated region
      $region17: #{inverted_residual.5} parent=11 // pred_check
        %p171 = pneg %p80
      $region18: #{inverted_residual.5} parent=11 // pred_check_branch
        %173 = sbr.rel (%p171) target = $region20
      $region19: #{inverted_residual.5} parent=11 // pred_region
        _
      $region20: #{inverted_residual.5} parent=11 // pred_fallthru
        _
      // Predicated region
      $region21: #{inverted_residual.5} parent=11 // pred_check
        %p174 = pneg %p101
      $region22: #{inverted_residual.5} parent=11 // pred_check_branch
        %176 = sbr.rel (%p174) target = $region24
      $region23: #{inverted_residual.5} parent=11 // pred_region
        _
      $region24: #{inverted_residual.5} parent=11 // pred_fallthru
        _
    $region12: #{inverted_residual.5} parent=5 // pred_fallthru
      _
    %p177 = scmp.lt.s32.totalorder %s12, 2
    // Predicated region
    $region25: #{inverted_residual.5} parent=5 // pred_check
      %p178 = pneg %p177
    $region26: #{inverted_residual.5} parent=5 // pred_check_branch
      %180 = sbr.rel (%p178) target = $region28
    $region27: #{inverted_residual.5} parent=5 // pred_region
      // Predicated region
      $region29: #{inverted_residual.5} parent=27 // pred_check
        %p181 = pneg %p32
      $region30: #{inverted_residual.5} parent=27 // pred_check_branch
        %183 = sbr.rel (%p181) target = $region32
      $region31: #{inverted_residual.5} parent=27 // pred_region
        %p184 = scmp.lt.s32.totalorder %s12, 1
        %s185 = scalar_select %p184, %s12, 1
        %s186 = smul.addr %s185, 32
        %s187 = smul.addr %s186, 8
        %s188 = scalar_lea.vmem %s0, %s187
      $region32: #{inverted_residual.5} parent=27 // pred_fallthru
        _
    $region28: #{inverted_residual.5} parent=5 // pred_fallthru
      _
    %p189 = scmp.le.s32.totalorder 1, %s12
    %p190 = scmp.lt.s32.totalorder %s12, 3
    %p191 = pnand %p189, %p190
    %p192 = pneg %p191
    // Predicated region
    $region33: #{inverted_residual.5} parent=5 // pred_check
      _
    $region34: #{inverted_residual.5} parent=5 // pred_check_branch
      %194 = sbr.rel (%p191) target = $region36
    $region35: #{inverted_residual.5} parent=5 // pred_region
      %s195 = ssub.s32 %s12, 1
      %p196 = scmp.lt.s32.totalorder %s17, 1
      %s197 = scalar_select %p196, %s17, 1
      %s198 = smul.addr %s197, 32
      %s199 = smul.addr %s198, 8
      %s200 = scalar_lea.vmem %s0, %s199
      %p201 = pneg %p38
      %p202 = pneg %p35
      %p203 = pneg %p59
      %p204 = pneg %p56
      %p205 = pneg %p80
      %p206 = pneg %p77
      %p207 = pneg %p101
      %p208 = pneg %p98
      %p209 = pneg %p127
      %p210 = pneg %p124
      %p211 = scmp.lt.s32.totalorder %s17, 1
      %s212 = scalar_select %p211, %s17, 1
      %s213 = smul.addr %s212, 32
      %s214 = smul.addr %s213, 8
      %s215 = scalar_lea.vmem %s4, %s214
      %p216 = pneg %p153
      %p217 = pneg %p150
      %p218 = scmp.lt.s32.totalorder %s17, 1
      %s219 = scalar_select %p218, %s17, 1
      %s220 = smul.addr %s219, 2
      %s221 = scalar_lea.vmem %s5, %s220
      %p222 = scmp.lt.s32.totalorder %s17, 1
      %s223 = scalar_select %p222, %s17, 1
      %s224 = smul.addr %s223, 32
      %s225 = smul.addr %s224, 8
      %s226 = scalar_lea.vmem %s0, %s225
      %p227 = scmp.lt.s32.totalorder %s17, 1
      %s228 = scalar_select %p227, %s17, 1
      %s229 = smul.addr %s228, 32
      %s230 = smul.addr %s229, 8
      %s231 = scalar_lea.vmem %s4, %s230
      %p232 = scmp.lt.s32.totalorder %s17, 1
      %s233 = scalar_select %p232, %s17, 1
      %s234 = smul.addr %s233, 2
      %s235 = scalar_lea.vmem %s5, %s234
      %v236 = vld [vmem:[%s226] sm:$0xff]
      %v237 = vld [vmem:[%s226 + $0x8] sm:$0xff]
      %v238 = vld [vmem:[%s226 + $0x10] sm:$0xff]
      %v239 = vld [vmem:[%s226 + $0x18] sm:$0xff]
      %v240 = vld [vmem:[%s226 + $0x20] sm:$0xff]
      %v241 = vld [vmem:[%s226 + $0x28] sm:$0xff]
      %v242 = vld [vmem:[%s226 + $0x30] sm:$0xff]
      %v243 = vld [vmem:[%s226 + $0x38] sm:$0xff]
      %v244 = vld [vmem:[%s226 + $0x40] sm:$0xff]
      %v245 = vld [vmem:[%s226 + $0x48] sm:$0xff]
      %v246 = vld [vmem:[%s226 + $0x50] sm:$0xff]
      %v247 = vld [vmem:[%s226 + $0x58] sm:$0xff]
      %v248 = vld [vmem:[%s226 + $0x60] sm:$0xff]
      %v249 = vld [vmem:[%s226 + $0x68] sm:$0xff]
      %v250 = vld [vmem:[%s226 + $0x70] sm:$0xff]
      %v251 = vld [vmem:[%s226 + $0x78] sm:$0xff]
      %v252 = vld [vmem:[%s226 + $0x80] sm:$0xff]
      %v253 = vld [vmem:[%s226 + $0x88] sm:$0xff]
      %v254 = vld [vmem:[%s226 + $0x90] sm:$0xff]
      %v255 = vld [vmem:[%s226 + $0x98] sm:$0xff]
      %v256 = vld [vmem:[%s226 + $0xa0] sm:$0xff]
      %v257 = vld [vmem:[%s226 + $0xa8] sm:$0xff]
      %v258 = vld [vmem:[%s226 + $0xb0] sm:$0xff]
      %v259 = vld [vmem:[%s226 + $0xb8] sm:$0xff]
      %v260 = vld [vmem:[%s226 + $0xc0] sm:$0xff]
      %v261 = vld [vmem:[%s226 + $0xc8] sm:$0xff]
      %v262 = vld [vmem:[%s226 + $0xd0] sm:$0xff]
      %v263 = vld [vmem:[%s226 + $0xd8] sm:$0xff]
      %v264 = vld [vmem:[%s226 + $0xe0] sm:$0xff]
      %v265 = vld [vmem:[%s226 + $0xe8] sm:$0xff]
      %v266 = vld [vmem:[%s226 + $0xf0] sm:$0xff]
      %v267 = vld [vmem:[%s226 + $0xf8] sm:$0xff]
      %v268 = vld [vmem:[%s2] sm:$0x1]
      %v269 = vld [vmem:[%s3] sm:$0x1]
      %v271 = vperm.slane %v268, 0
      %v273 = vmul.f32 %v236, %v271
      %v274 = vmul.f32 %v237, %v271
      %v275 = vmul.f32 %v238, %v271
      %v276 = vmul.f32 %v239, %v271
      %v277 = vmul.f32 %v240, %v271
      %v278 = vmul.f32 %v241, %v271
      %v279 = vmul.f32 %v242, %v271
      %v280 = vmul.f32 %v243, %v271
      %v281 = vmul.f32 %v244, %v271
      %v282 = vmul.f32 %v245, %v271
      %v283 = vmul.f32 %v246, %v271
      %v284 = vmul.f32 %v247, %v271
      %v285 = vmul.f32 %v248, %v271
      %v286 = vmul.f32 %v249, %v271
      %v287 = vmul.f32 %v250, %v271
      %v288 = vmul.f32 %v251, %v271
      %v289 = vmul.f32 %v252, %v271
      %v290 = vmul.f32 %v253, %v271
      %v291 = vmul.f32 %v254, %v271
      %v292 = vmul.f32 %v255, %v271
      %v293 = vmul.f32 %v256, %v271
      %v294 = vmul.f32 %v257, %v271
      %v295 = vmul.f32 %v258, %v271
      %v296 = vmul.f32 %v259, %v271
      %v297 = vmul.f32 %v260, %v271
      %v298 = vmul.f32 %v261, %v271
      %v299 = vmul.f32 %v262, %v271
      %v300 = vmul.f32 %v263, %v271
      %v301 = vmul.f32 %v264, %v271
      %v302 = vmul.f32 %v265, %v271
      %v303 = vmul.f32 %v266, %v271
      %v304 = vmul.f32 %v267, %v271
      %v306 = vperm.slane %v269, 0
      %v308 = vadd.f32 %v273, %v306
      %v309 = vadd.f32 %v274, %v306
      %v310 = vadd.f32 %v275, %v306
      %v311 = vadd.f32 %v276, %v306
      %v312 = vadd.f32 %v277, %v306
      %v313 = vadd.f32 %v278, %v306
      %v314 = vadd.f32 %v279, %v306
      %v315 = vadd.f32 %v280, %v306
      %v316 = vadd.f32 %v281, %v306
      %v317 = vadd.f32 %v282, %v306
      %v318 = vadd.f32 %v283, %v306
      %v319 = vadd.f32 %v284, %v306
      %v320 = vadd.f32 %v285, %v306
      %v321 = vadd.f32 %v286, %v306
      %v322 = vadd.f32 %v287, %v306
      %v323 = vadd.f32 %v288, %v306
      %v324 = vadd.f32 %v289, %v306
      %v325 = vadd.f32 %v290, %v306
      %v326 = vadd.f32 %v291, %v306
      %v327 = vadd.f32 %v292, %v306
      %v328 = vadd.f32 %v293, %v306
      %v329 = vadd.f32 %v294, %v306
      %v330 = vadd.f32 %v295, %v306
      %v331 = vadd.f32 %v296, %v306
      %v332 = vadd.f32 %v297, %v306
      %v333 = vadd.f32 %v298, %v306
      %v334 = vadd.f32 %v299, %v306
      %v335 = vadd.f32 %v300, %v306
      %v336 = vadd.f32 %v301, %v306
      %v337 = vadd.f32 %v302, %v306
      %v338 = vadd.f32 %v303, %v306
      %v339 = vadd.f32 %v304, %v306
      %v340 = vmax.f32 %v308, 0.0
      %v341 = vmax.f32 %v309, 0.0
      %v342 = vmax.f32 %v310, 0.0
      %v343 = vmax.f32 %v311, 0.0
      %v344 = vmax.f32 %v312, 0.0
      %v345 = vmax.f32 %v313, 0.0
      %v346 = vmax.f32 %v314, 0.0
      %v347 = vmax.f32 %v315, 0.0
      %v348 = vmax.f32 %v316, 0.0
      %v349 = vmax.f32 %v317, 0.0
      %v350 = vmax.f32 %v318, 0.0
      %v351 = vmax.f32 %v319, 0.0
      %v352 = vmax.f32 %v320, 0.0
      %v353 = vmax.f32 %v321, 0.0
      %v354 = vmax.f32 %v322, 0.0
      %v355 = vmax.f32 %v323, 0.0
      %v356 = vmax.f32 %v324, 0.0
      %v357 = vmax.f32 %v325, 0.0
      %v358 = vmax.f32 %v326, 0.0
      %v359 = vmax.f32 %v327, 0.0
      %v360 = vmax.f32 %v328, 0.0
      %v361 = vmax.f32 %v329, 0.0
      %v362 = vmax.f32 %v330, 0.0
      %v363 = vmax.f32 %v331, 0.0
      %v364 = vmax.f32 %v332, 0.0
      %v365 = vmax.f32 %v333, 0.0
      %v366 = vmax.f32 %v334, 0.0
      %v367 = vmax.f32 %v335, 0.0
      %v368 = vmax.f32 %v336, 0.0
      %v369 = vmax.f32 %v337, 0.0
      %v370 = vmax.f32 %v338, 0.0
      %v371 = vmax.f32 %v339, 0.0
      %v372 = vmin.f32 %v340, 6.0
      %v373 = vmin.f32 %v341, 6.0
      %v374 = vmin.f32 %v342, 6.0
      %v375 = vmin.f32 %v343, 6.0
      %v376 = vmin.f32 %v344, 6.0
      %v377 = vmin.f32 %v345, 6.0
      %v378 = vmin.f32 %v346, 6.0
      %v379 = vmin.f32 %v347, 6.0
      %v380 = vmin.f32 %v348, 6.0
      %v381 = vmin.f32 %v349, 6.0
      %v382 = vmin.f32 %v350, 6.0
      %v383 = vmin.f32 %v351, 6.0
      %v384 = vmin.f32 %v352, 6.0
      %v385 = vmin.f32 %v353, 6.0
      %v386 = vmin.f32 %v354, 6.0
      %v387 = vmin.f32 %v355, 6.0
      %v388 = vmin.f32 %v356, 6.0
      %v389 = vmin.f32 %v357, 6.0
      %v390 = vmin.f32 %v358, 6.0
      %v391 = vmin.f32 %v359, 6.0
      %v392 = vmin.f32 %v360, 6.0
      %v393 = vmin.f32 %v361, 6.0
      %v394 = vmin.f32 %v362, 6.0
      %v395 = vmin.f32 %v363, 6.0
      %v396 = vmin.f32 %v364, 6.0
      %v397 = vmin.f32 %v365, 6.0
      %v398 = vmin.f32 %v366, 6.0
      %v399 = vmin.f32 %v367, 6.0
      %v400 = vmin.f32 %v368, 6.0
      %v401 = vmin.f32 %v369, 6.0
      %v402 = vmin.f32 %v370, 6.0
      %v403 = vmin.f32 %v371, 6.0
      %vm437 = vcmask 1040384
      %v438 = vrot.slane 0.0, 7
      %v439 = vsel %vm437, %v438, %v438
      %v440 = vrot.slane %v372, 7
      %v441 = vrot.slane %v373, 7
      %v442 = vsel %vm437, %v440, %v441
      %v443 = vrot.slane %v374, 7
      %v444 = vrot.slane %v375, 7
      %v445 = vsel %vm437, %v443, %v444
      %v446 = vrot.slane %v376, 7
      %v447 = vrot.slane %v377, 7
      %v448 = vsel %vm437, %v446, %v447
      %v449 = vrot.slane %v378, 7
      %v450 = vrot.slane %v379, 7
      %v451 = vsel %vm437, %v449, %v450
      %v452 = vrot.slane %v380, 7
      %v453 = vrot.slane %v381, 7
      %v454 = vsel %vm437, %v452, %v453
      %v455 = vrot.slane %v382, 7
      %v456 = vrot.slane %v383, 7
      %v457 = vsel %vm437, %v455, %v456
      %v458 = vrot.slane %v384, 7
      %v459 = vrot.slane %v385, 7
      %v460 = vsel %vm437, %v458, %v459
      %v461 = vrot.slane %v386, 7
      %v462 = vrot.slane %v387, 7
      %v463 = vsel %vm437, %v461, %v462
      %v464 = vrot.slane %v388, 7
      %v465 = vrot.slane %v389, 7
      %v466 = vsel %vm437, %v464, %v465
      %v467 = vrot.slane %v390, 7
      %v468 = vrot.slane %v391, 7
      %v469 = vsel %vm437, %v467, %v468
      %v470 = vrot.slane %v392, 7
      %v471 = vrot.slane %v393, 7
      %v472 = vsel %vm437, %v470, %v471
      %v473 = vrot.slane %v394, 7
      %v474 = vrot.slane %v395, 7
      %v475 = vsel %vm437, %v473, %v474
      %v476 = vrot.slane %v396, 7
      %v477 = vrot.slane %v397, 7
      %v478 = vsel %vm437, %v476, %v477
      %v479 = vrot.slane %v398, 7
      %v480 = vrot.slane %v399, 7
      %v481 = vsel %vm437, %v479, %v480
      %v482 = vrot.slane %v400, 7
      %v483 = vrot.slane %v401, 7
      %v484 = vsel %vm437, %v482, %v483
      %v485 = vrot.slane %v402, 7
      %v486 = vrot.slane %v403, 7
      %v487 = vsel %vm437, %v485, %v486
      %v538 = vsel %vm437, 0.0, %v438
      %v539 = vsel %vm437, 0.0, %v440
      %v540 = vsel %vm437, 0.0, %v443
      %v541 = vsel %vm437, 0.0, %v446
      %v542 = vsel %vm437, 0.0, %v449
      %v543 = vsel %vm437, 0.0, %v452
      %v544 = vsel %vm437, 0.0, %v455
      %v545 = vsel %vm437, 0.0, %v458
      %v546 = vsel %vm437, 0.0, %v461
      %v547 = vsel %vm437, 0.0, %v464
      %v548 = vsel %vm437, 0.0, %v467
      %v549 = vsel %vm437, 0.0, %v470
      %v550 = vsel %vm437, 0.0, %v473
      %v551 = vsel %vm437, 0.0, %v476
      %v552 = vsel %vm437, 0.0, %v479
      %v553 = vsel %vm437, 0.0, %v482
      %v554 = vsel %vm437, 0.0, %v485
      %v555 = vsel %vm437, %v438, 0.0
      %v556 = vsel %vm437, %v441, 0.0
      %v557 = vsel %vm437, %v444, 0.0
      %v558 = vsel %vm437, %v447, 0.0
      %v559 = vsel %vm437, %v450, 0.0
      %v560 = vsel %vm437, %v453, 0.0
      %v561 = vsel %vm437, %v456, 0.0
      %v562 = vsel %vm437, %v459, 0.0
      %v563 = vsel %vm437, %v462, 0.0
      %v564 = vsel %vm437, %v465, 0.0
      %v565 = vsel %vm437, %v468, 0.0
      %v566 = vsel %vm437, %v471, 0.0
      %v567 = vsel %vm437, %v474, 0.0
      %v568 = vsel %vm437, %v477, 0.0
      %v569 = vsel %vm437, %v480, 0.0
      %v570 = vsel %vm437, %v483, 0.0
      %v571 = vsel %vm437, %v486, 0.0
      %v572 = vld [vmem:[%s1] sm:$0x7]
      %v573 = vld [vmem:[%s1 + $0x4] sm:$0x7]
      %v574 = vld [vmem:[%s1 + $0x8] sm:$0x7]
      %v575 = vperm.slane %v572, 0
      %v576 = vmul.f32 %v538, %v575
      %v577 = vmul.f32 %v439, %v575
      %v578 = vmul.f32 %v539, %v575
      %v579 = vmul.f32 %v442, %v575
      %v580 = vmul.f32 %v540, %v575
      %v581 = vmul.f32 %v445, %v575
      %v582 = vmul.f32 %v541, %v575
      %v583 = vmul.f32 %v448, %v575
      %v584 = vmul.f32 %v542, %v575
      %v585 = vmul.f32 %v451, %v575
      %v586 = vmul.f32 %v543, %v575
      %v587 = vmul.f32 %v454, %v575
      %v588 = vmul.f32 %v544, %v575
      %v589 = vmul.f32 %v457, %v575
      %v590 = vmul.f32 %v545, %v575
      %v591 = vmul.f32 %v460, %v575
      %v592 = vmul.f32 %v546, %v575
      %v593 = vmul.f32 %v463, %v575
      %v594 = vmul.f32 %v547, %v575
      %v595 = vmul.f32 %v466, %v575
      %v596 = vmul.f32 %v548, %v575
      %v597 = vmul.f32 %v469, %v575
      %v598 = vmul.f32 %v549, %v575
      %v599 = vmul.f32 %v472, %v575
      %v600 = vmul.f32 %v550, %v575
      %v601 = vmul.f32 %v475, %v575
      %v602 = vmul.f32 %v551, %v575
      %v603 = vmul.f32 %v478, %v575
      %v604 = vmul.f32 %v552, %v575
      %v605 = vmul.f32 %v481, %v575
      %v606 = vmul.f32 %v553, %v575
      %v607 = vmul.f32 %v484, %v575
      %v608 = vperm.slane %v572, 1
      %v609 = vmul.f32 %v538, %v608
      %v610 = vmul.f32 %v439, %v608
      %v611 = vmul.f32 %v555, %v608
      %v612 = vmul.f32 %v539, %v608
      %v613 = vmul.f32 %v442, %v608
      %v614 = vmul.f32 %v556, %v608
      %v615 = vmul.f32 %v540, %v608
      %v616 = vmul.f32 %v445, %v608
      %v617 = vmul.f32 %v557, %v608
      %v618 = vmul.f32 %v541, %v608
      %v619 = vmul.f32 %v448, %v608
      %v620 = vmul.f32 %v558, %v608
      %v621 = vmul.f32 %v542, %v608
      %v622 = vmul.f32 %v451, %v608
      %v623 = vmul.f32 %v559, %v608
      %v624 = vmul.f32 %v543, %v608
      %v625 = vmul.f32 %v454, %v608
      %v626 = vmul.f32 %v560, %v608
      %v627 = vmul.f32 %v544, %v608
      %v628 = vmul.f32 %v457, %v608
      %v629 = vmul.f32 %v561, %v608
      %v630 = vmul.f32 %v545, %v608
      %v631 = vmul.f32 %v460, %v608
      %v632 = vmul.f32 %v562, %v608
      %v633 = vmul.f32 %v546, %v608
      %v634 = vmul.f32 %v463, %v608
      %v635 = vmul.f32 %v563, %v608
      %v636 = vmul.f32 %v547, %v608
      %v637 = vmul.f32 %v466, %v608
      %v638 = vmul.f32 %v564, %v608
      %v639 = vmul.f32 %v548, %v608
      %v640 = vmul.f32 %v469, %v608
      %v641 = vmul.f32 %v565, %v608
      %v642 = vmul.f32 %v549, %v608
      %v643 = vmul.f32 %v472, %v608
      %v644 = vmul.f32 %v566, %v608
      %v645 = vmul.f32 %v550, %v608
      %v646 = vmul.f32 %v475, %v608
      %v647 = vmul.f32 %v567, %v608
      %v648 = vmul.f32 %v551, %v608
      %v649 = vmul.f32 %v478, %v608
      %v650 = vmul.f32 %v568, %v608
      %v651 = vmul.f32 %v552, %v608
      %v652 = vmul.f32 %v481, %v608
      %v653 = vmul.f32 %v569, %v608
      %v654 = vmul.f32 %v553, %v608
      %v655 = vmul.f32 %v484, %v608
      %v656 = vmul.f32 %v570, %v608
      %vm705 = vcmask 1046528
      %v706 = vrot.slane %v609, 1
      %v707 = vrot.slane %v610, 1
      %v708 = vsel %vm705, %v706, %v707
      %v709 = vrot.slane %v611, 1
      %v710 = vsel %vm705, %v707, %v709
      %v711 = vrot.slane %v612, 1
      %v712 = vrot.slane %v613, 1
      %v713 = vsel %vm705, %v711, %v712
      %v714 = vrot.slane %v614, 1
      %v715 = vsel %vm705, %v712, %v714
      %v716 = vrot.slane %v615, 1
      %v717 = vrot.slane %v616, 1
      %v718 = vsel %vm705, %v716, %v717
      %v719 = vrot.slane %v617, 1
      %v720 = vsel %vm705, %v717, %v719
      %v721 = vrot.slane %v618, 1
      %v722 = vrot.slane %v619, 1
      %v723 = vsel %vm705, %v721, %v722
      %v724 = vrot.slane %v620, 1
      %v725 = vsel %vm705, %v722, %v724
      %v726 = vrot.slane %v621, 1
      %v727 = vrot.slane %v622, 1
      %v728 = vsel %vm705, %v726, %v727
      %v729 = vrot.slane %v623, 1
      %v730 = vsel %vm705, %v727, %v729
      %v731 = vrot.slane %v624, 1
      %v732 = vrot.slane %v625, 1
      %v733 = vsel %vm705, %v731, %v732
      %v734 = vrot.slane %v626, 1
      %v735 = vsel %vm705, %v732, %v734
      %v736 = vrot.slane %v627, 1
      %v737 = vrot.slane %v628, 1
      %v738 = vsel %vm705, %v736, %v737
      %v739 = vrot.slane %v629, 1
      %v740 = vsel %vm705, %v737, %v739
      %v741 = vrot.slane %v630, 1
      %v742 = vrot.slane %v631, 1
      %v743 = vsel %vm705, %v741, %v742
      %v744 = vrot.slane %v632, 1
      %v745 = vsel %vm705, %v742, %v744
      %v746 = vrot.slane %v633, 1
      %v747 = vrot.slane %v634, 1
      %v748 = vsel %vm705, %v746, %v747
      %v749 = vrot.slane %v635, 1
      %v750 = vsel %vm705, %v747, %v749
      %v751 = vrot.slane %v636, 1
      %v752 = vrot.slane %v637, 1
      %v753 = vsel %vm705, %v751, %v752
      %v754 = vrot.slane %v638, 1
      %v755 = vsel %vm705, %v752, %v754
      %v756 = vrot.slane %v639, 1
      %v757 = vrot.slane %v640, 1
      %v758 = vsel %vm705, %v756, %v757
      %v759 = vrot.slane %v641, 1
      %v760 = vsel %vm705, %v757, %v759
      %v761 = vrot.slane %v642, 1
      %v762 = vrot.slane %v643, 1
      %v763 = vsel %vm705, %v761, %v762
      %v764 = vrot.slane %v644, 1
      %v765 = vsel %vm705, %v762, %v764
      %v766 = vrot.slane %v645, 1
      %v767 = vrot.slane %v646, 1
      %v768 = vsel %vm705, %v766, %v767
      %v769 = vrot.slane %v647, 1
      %v770 = vsel %vm705, %v767, %v769
      %v771 = vrot.slane %v648, 1
      %v772 = vrot.slane %v649, 1
      %v773 = vsel %vm705, %v771, %v772
      %v774 = vrot.slane %v650, 1
      %v775 = vsel %vm705, %v772, %v774
      %v776 = vrot.slane %v651, 1
      %v777 = vrot.slane %v652, 1
      %v778 = vsel %vm705, %v776, %v777
      %v779 = vrot.slane %v653, 1
      %v780 = vsel %vm705, %v777, %v779
      %v781 = vrot.slane %v654, 1
      %v782 = vrot.slane %v655, 1
      %v783 = vsel %vm705, %v781, %v782
      %v784 = vrot.slane %v656, 1
      %v785 = vsel %vm705, %v782, %v784
      %v818 = vadd.f32 %v576, %v708
      %v819 = vadd.f32 %v577, %v710
      %v820 = vadd.f32 %v578, %v713
      %v821 = vadd.f32 %v579, %v715
      %v822 = vadd.f32 %v580, %v718
      %v823 = vadd.f32 %v581, %v720
      %v824 = vadd.f32 %v582, %v723
      %v825 = vadd.f32 %v583, %v725
      %v826 = vadd.f32 %v584, %v728
      %v827 = vadd.f32 %v585, %v730
      %v828 = vadd.f32 %v586, %v733
      %v829 = vadd.f32 %v587, %v735
      %v830 = vadd.f32 %v588, %v738
      %v831 = vadd.f32 %v589, %v740
      %v832 = vadd.f32 %v590, %v743
      %v833 = vadd.f32 %v591, %v745
      %v834 = vadd.f32 %v592, %v748
      %v835 = vadd.f32 %v593, %v750
      %v836 = vadd.f32 %v594, %v753
      %v837 = vadd.f32 %v595, %v755
      %v838 = vadd.f32 %v596, %v758
      %v839 = vadd.f32 %v597, %v760
      %v840 = vadd.f32 %v598, %v763
      %v841 = vadd.f32 %v599, %v765
      %v842 = vadd.f32 %v600, %v768
      %v843 = vadd.f32 %v601, %v770
      %v844 = vadd.f32 %v602, %v773
      %v845 = vadd.f32 %v603, %v775
      %v846 = vadd.f32 %v604, %v778
      %v847 = vadd.f32 %v605, %v780
      %v848 = vadd.f32 %v606, %v783
      %v849 = vadd.f32 %v607, %v785
      %v850 = vperm.slane %v572, 2
      %v851 = vmul.f32 %v538, %v850
      %v852 = vmul.f32 %v439, %v850
      %v853 = vmul.f32 %v555, %v850
      %v854 = vmul.f32 %v539, %v850
      %v855 = vmul.f32 %v442, %v850
      %v856 = vmul.f32 %v556, %v850
      %v857 = vmul.f32 %v540, %v850
      %v858 = vmul.f32 %v445, %v850
      %v859 = vmul.f32 %v557, %v850
      %v860 = vmul.f32 %v541, %v850
      %v861 = vmul.f32 %v448, %v850
      %v862 = vmul.f32 %v558, %v850
      %v863 = vmul.f32 %v542, %v850
      %v864 = vmul.f32 %v451, %v850
      %v865 = vmul.f32 %v559, %v850
      %v866 = vmul.f32 %v543, %v850
      %v867 = vmul.f32 %v454, %v850
      %v868 = vmul.f32 %v560, %v850
      %v869 = vmul.f32 %v544, %v850
      %v870 = vmul.f32 %v457, %v850
      %v871 = vmul.f32 %v561, %v850
      %v872 = vmul.f32 %v545, %v850
      %v873 = vmul.f32 %v460, %v850
      %v874 = vmul.f32 %v562, %v850
      %v875 = vmul.f32 %v546, %v850
      %v876 = vmul.f32 %v463, %v850
      %v877 = vmul.f32 %v563, %v850
      %v878 = vmul.f32 %v547, %v850
      %v879 = vmul.f32 %v466, %v850
      %v880 = vmul.f32 %v564, %v850
      %v881 = vmul.f32 %v548, %v850
      %v882 = vmul.f32 %v469, %v850
      %v883 = vmul.f32 %v565, %v850
      %v884 = vmul.f32 %v549, %v850
      %v885 = vmul.f32 %v472, %v850
      %v886 = vmul.f32 %v566, %v850
      %v887 = vmul.f32 %v550, %v850
      %v888 = vmul.f32 %v475, %v850
      %v889 = vmul.f32 %v567, %v850
      %v890 = vmul.f32 %v551, %v850
      %v891 = vmul.f32 %v478, %v850
      %v892 = vmul.f32 %v568, %v850
      %v893 = vmul.f32 %v552, %v850
      %v894 = vmul.f32 %v481, %v850
      %v895 = vmul.f32 %v569, %v850
      %v896 = vmul.f32 %v553, %v850
      %v897 = vmul.f32 %v484, %v850
      %v898 = vmul.f32 %v570, %v850
      %vm947 = vcmask 1045504
      %v948 = vrot.slane %v851, 2
      %v949 = vrot.slane %v852, 2
      %v950 = vsel %vm947, %v948, %v949
      %v951 = vrot.slane %v853, 2
      %v952 = vsel %vm947, %v949, %v951
      %v953 = vrot.slane %v854, 2
      %v954 = vrot.slane %v855, 2
      %v955 = vsel %vm947, %v953, %v954
      %v956 = vrot.slane %v856, 2
      %v957 = vsel %vm947, %v954, %v956
      %v958 = vrot.slane %v857, 2
      %v959 = vrot.slane %v858, 2
      %v960 = vsel %vm947, %v958, %v959
      %v961 = vrot.slane %v859, 2
      %v962 = vsel %vm947, %v959, %v961
      %v963 = vrot.slane %v860, 2
      %v964 = vrot.slane %v861, 2
      %v965 = vsel %vm947, %v963, %v964
      %v966 = vrot.slane %v862, 2
      %v967 = vsel %vm947, %v964, %v966
      %v968 = vrot.slane %v863, 2
      %v969 = vrot.slane %v864, 2
      %v970 = vsel %vm947, %v968, %v969
      %v971 = vrot.slane %v865, 2
      %v972 = vsel %vm947, %v969, %v971
      %v973 = vrot.slane %v866, 2
      %v974 = vrot.slane %v867, 2
      %v975 = vsel %vm947, %v973, %v974
      %v976 = vrot.slane %v868, 2
      %v977 = vsel %vm947, %v974, %v976
      %v978 = vrot.slane %v869, 2
      %v979 = vrot.slane %v870, 2
      %v980 = vsel %vm947, %v978, %v979
      %v981 = vrot.slane %v871, 2
      %v982 = vsel %vm947, %v979, %v981
      %v983 = vrot.slane %v872, 2
      %v984 = vrot.slane %v873, 2
      %v985 = vsel %vm947, %v983, %v984
      %v986 = vrot.slane %v874, 2
      %v987 = vsel %vm947, %v984, %v986
      %v988 = vrot.slane %v875, 2
      %v989 = vrot.slane %v876, 2
      %v990 = vsel %vm947, %v988, %v989
      %v991 = vrot.slane %v877, 2
      %v992 = vsel %vm947, %v989, %v991
      %v993 = vrot.slane %v878, 2
      %v994 = vrot.slane %v879, 2
      %v995 = vsel %vm947, %v993, %v994
      %v996 = vrot.slane %v880, 2
      %v997 = vsel %vm947, %v994, %v996
      %v998 = vrot.slane %v881, 2
      %v999 = vrot.slane %v882, 2
      %v1000 = vsel %vm947, %v998, %v999
      %v1001 = vrot.slane %v883, 2
      %v1002 = vsel %vm947, %v999, %v1001
      %v1003 = vrot.slane %v884, 2
      %v1004 = vrot.slane %v885, 2
      %v1005 = vsel %vm947, %v1003, %v1004
      %v1006 = vrot.slane %v886, 2
      %v1007 = vsel %vm947, %v1004, %v1006
      %v1008 = vrot.slane %v887, 2
      %v1009 = vrot.slane %v888, 2
      %v1010 = vsel %vm947, %v1008, %v1009
      %v1011 = vrot.slane %v889, 2
      %v1012 = vsel %vm947, %v1009, %v1011
      %v1013 = vrot.slane %v890, 2
      %v1014 = vrot.slane %v891, 2
      %v1015 = vsel %vm947, %v1013, %v1014
      %v1016 = vrot.slane %v892, 2
      %v1017 = vsel %vm947, %v1014, %v1016
      %v1018 = vrot.slane %v893, 2
      %v1019 = vrot.slane %v894, 2
      %v1020 = vsel %vm947, %v1018, %v1019
      %v1021 = vrot.slane %v895, 2
      %v1022 = vsel %vm947, %v1019, %v1021
      %v1023 = vrot.slane %v896, 2
      %v1024 = vrot.slane %v897, 2
      %v1025 = vsel %vm947, %v1023, %v1024
      %v1026 = vrot.slane %v898, 2
      %v1027 = vsel %vm947, %v1024, %v1026
      %v1060 = vadd.f32 %v818, %v950
      %v1061 = vadd.f32 %v819, %v952
      %v1062 = vadd.f32 %v820, %v955
      %v1063 = vadd.f32 %v821, %v957
      %v1064 = vadd.f32 %v822, %v960
      %v1065 = vadd.f32 %v823, %v962
      %v1066 = vadd.f32 %v824, %v965
      %v1067 = vadd.f32 %v825, %v967
      %v1068 = vadd.f32 %v826, %v970
      %v1069 = vadd.f32 %v827, %v972
      %v1070 = vadd.f32 %v828, %v975
      %v1071 = vadd.f32 %v829, %v977
      %v1072 = vadd.f32 %v830, %v980
      %v1073 = vadd.f32 %v831, %v982
      %v1074 = vadd.f32 %v832, %v985
      %v1075 = vadd.f32 %v833, %v987
      %v1076 = vadd.f32 %v834, %v990
      %v1077 = vadd.f32 %v835, %v992
      %v1078 = vadd.f32 %v836, %v995
      %v1079 = vadd.f32 %v837, %v997
      %v1080 = vadd.f32 %v838, %v1000
      %v1081 = vadd.f32 %v839, %v1002
      %v1082 = vadd.f32 %v840, %v1005
      %v1083 = vadd.f32 %v841, %v1007
      %v1084 = vadd.f32 %v842, %v1010
      %v1085 = vadd.f32 %v843, %v1012
      %v1086 = vadd.f32 %v844, %v1015
      %v1087 = vadd.f32 %v845, %v1017
      %v1088 = vadd.f32 %v846, %v1020
      %v1089 = vadd.f32 %v847, %v1022
      %v1090 = vadd.f32 %v848, %v1025
      %v1091 = vadd.f32 %v849, %v1027
      %v1092 = vperm.slane %v573, 0
      %v1093 = vmul.f32 %v539, %v1092
      %v1094 = vmul.f32 %v442, %v1092
      %v1095 = vmul.f32 %v540, %v1092
      %v1096 = vmul.f32 %v445, %v1092
      %v1097 = vmul.f32 %v541, %v1092
      %v1098 = vmul.f32 %v448, %v1092
      %v1099 = vmul.f32 %v542, %v1092
      %v1100 = vmul.f32 %v451, %v1092
      %v1101 = vmul.f32 %v543, %v1092
      %v1102 = vmul.f32 %v454, %v1092
      %v1103 = vmul.f32 %v544, %v1092
      %v1104 = vmul.f32 %v457, %v1092
      %v1105 = vmul.f32 %v545, %v1092
      %v1106 = vmul.f32 %v460, %v1092
      %v1107 = vmul.f32 %v546, %v1092
      %v1108 = vmul.f32 %v463, %v1092
      %v1109 = vmul.f32 %v547, %v1092
      %v1110 = vmul.f32 %v466, %v1092
      %v1111 = vmul.f32 %v548, %v1092
      %v1112 = vmul.f32 %v469, %v1092
      %v1113 = vmul.f32 %v549, %v1092
      %v1114 = vmul.f32 %v472, %v1092
      %v1115 = vmul.f32 %v550, %v1092
      %v1116 = vmul.f32 %v475, %v1092
      %v1117 = vmul.f32 %v551, %v1092
      %v1118 = vmul.f32 %v478, %v1092
      %v1119 = vmul.f32 %v552, %v1092
      %v1120 = vmul.f32 %v481, %v1092
      %v1121 = vmul.f32 %v553, %v1092
      %v1122 = vmul.f32 %v484, %v1092
      %v1123 = vmul.f32 %v554, %v1092
      %v1124 = vmul.f32 %v487, %v1092
      %v1125 = vadd.f32 %v1060, %v1093
      %v1126 = vadd.f32 %v1061, %v1094
      %v1127 = vadd.f32 %v1062, %v1095
      %v1128 = vadd.f32 %v1063, %v1096
      %v1129 = vadd.f32 %v1064, %v1097
      %v1130 = vadd.f32 %v1065, %v1098
      %v1131 = vadd.f32 %v1066, %v1099
      %v1132 = vadd.f32 %v1067, %v1100
      %v1133 = vadd.f32 %v1068, %v1101
      %v1134 = vadd.f32 %v1069, %v1102
      %v1135 = vadd.f32 %v1070, %v1103
      %v1136 = vadd.f32 %v1071, %v1104
      %v1137 = vadd.f32 %v1072, %v1105
      %v1138 = vadd.f32 %v1073, %v1106
      %v1139 = vadd.f32 %v1074, %v1107
      %v1140 = vadd.f32 %v1075, %v1108
      %v1141 = vadd.f32 %v1076, %v1109
      %v1142 = vadd.f32 %v1077, %v1110
      %v1143 = vadd.f32 %v1078, %v1111
      %v1144 = vadd.f32 %v1079, %v1112
      %v1145 = vadd.f32 %v1080, %v1113
      %v1146 = vadd.f32 %v1081, %v1114
      %v1147 = vadd.f32 %v1082, %v1115
      %v1148 = vadd.f32 %v1083, %v1116
      %v1149 = vadd.f32 %v1084, %v1117
      %v1150 = vadd.f32 %v1085, %v1118
      %v1151 = vadd.f32 %v1086, %v1119
      %v1152 = vadd.f32 %v1087, %v1120
      %v1153 = vadd.f32 %v1088, %v1121
      %v1154 = vadd.f32 %v1089, %v1122
      %v1155 = vadd.f32 %v1090, %v1123
      %v1156 = vadd.f32 %v1091, %v1124
      %v1157 = vperm.slane %v573, 1
      %v1158 = vmul.f32 %v539, %v1157
      %v1159 = vmul.f32 %v442, %v1157
      %v1160 = vmul.f32 %v556, %v1157
      %v1161 = vmul.f32 %v540, %v1157
      %v1162 = vmul.f32 %v445, %v1157
      %v1163 = vmul.f32 %v557, %v1157
      %v1164 = vmul.f32 %v541, %v1157
      %v1165 = vmul.f32 %v448, %v1157
      %v1166 = vmul.f32 %v558, %v1157
      %v1167 = vmul.f32 %v542, %v1157
      %v1168 = vmul.f32 %v451, %v1157
      %v1169 = vmul.f32 %v559, %v1157
      %v1170 = vmul.f32 %v543, %v1157
      %v1171 = vmul.f32 %v454, %v1157
      %v1172 = vmul.f32 %v560, %v1157
      %v1173 = vmul.f32 %v544, %v1157
      %v1174 = vmul.f32 %v457, %v1157
      %v1175 = vmul.f32 %v561, %v1157
      %v1176 = vmul.f32 %v545, %v1157
      %v1177 = vmul.f32 %v460, %v1157
      %v1178 = vmul.f32 %v562, %v1157
      %v1179 = vmul.f32 %v546, %v1157
      %v1180 = vmul.f32 %v463, %v1157
      %v1181 = vmul.f32 %v563, %v1157
      %v1182 = vmul.f32 %v547, %v1157
      %v1183 = vmul.f32 %v466, %v1157
      %v1184 = vmul.f32 %v564, %v1157
      %v1185 = vmul.f32 %v548, %v1157
      %v1186 = vmul.f32 %v469, %v1157
      %v1187 = vmul.f32 %v565, %v1157
      %v1188 = vmul.f32 %v549, %v1157
      %v1189 = vmul.f32 %v472, %v1157
      %v1190 = vmul.f32 %v566, %v1157
      %v1191 = vmul.f32 %v550, %v1157
      %v1192 = vmul.f32 %v475, %v1157
      %v1193 = vmul.f32 %v567, %v1157
      %v1194 = vmul.f32 %v551, %v1157
      %v1195 = vmul.f32 %v478, %v1157
      %v1196 = vmul.f32 %v568, %v1157
      %v1197 = vmul.f32 %v552, %v1157
      %v1198 = vmul.f32 %v481, %v1157
      %v1199 = vmul.f32 %v569, %v1157
      %v1200 = vmul.f32 %v553, %v1157
      %v1201 = vmul.f32 %v484, %v1157
      %v1202 = vmul.f32 %v570, %v1157
      %v1203 = vmul.f32 %v554, %v1157
      %v1204 = vmul.f32 %v487, %v1157
      %v1205 = vmul.f32 %v571, %v1157
      %v1254 = vrot.slane %v1158, 1
      %v1255 = vrot.slane %v1159, 1
      %v1256 = vsel %vm705, %v1254, %v1255
      %v1257 = vrot.slane %v1160, 1
      %v1258 = vsel %vm705, %v1255, %v1257
      %v1259 = vrot.slane %v1161, 1
      %v1260 = vrot.slane %v1162, 1
      %v1261 = vsel %vm705, %v1259, %v1260
      %v1262 = vrot.slane %v1163, 1
      %v1263 = vsel %vm705, %v1260, %v1262
      %v1264 = vrot.slane %v1164, 1
      %v1265 = vrot.slane %v1165, 1
      %v1266 = vsel %vm705, %v1264, %v1265
      %v1267 = vrot.slane %v1166, 1
      %v1268 = vsel %vm705, %v1265, %v1267
      %v1269 = vrot.slane %v1167, 1
      %v1270 = vrot.slane %v1168, 1
      %v1271 = vsel %vm705, %v1269, %v1270
      %v1272 = vrot.slane %v1169, 1
      %v1273 = vsel %vm705, %v1270, %v1272
      %v1274 = vrot.slane %v1170, 1
      %v1275 = vrot.slane %v1171, 1
      %v1276 = vsel %vm705, %v1274, %v1275
      %v1277 = vrot.slane %v1172, 1
      %v1278 = vsel %vm705, %v1275, %v1277
      %v1279 = vrot.slane %v1173, 1
      %v1280 = vrot.slane %v1174, 1
      %v1281 = vsel %vm705, %v1279, %v1280
      %v1282 = vrot.slane %v1175, 1
      %v1283 = vsel %vm705, %v1280, %v1282
      %v1284 = vrot.slane %v1176, 1
      %v1285 = vrot.slane %v1177, 1
      %v1286 = vsel %vm705, %v1284, %v1285
      %v1287 = vrot.slane %v1178, 1
      %v1288 = vsel %vm705, %v1285, %v1287
      %v1289 = vrot.slane %v1179, 1
      %v1290 = vrot.slane %v1180, 1
      %v1291 = vsel %vm705, %v1289, %v1290
      %v1292 = vrot.slane %v1181, 1
      %v1293 = vsel %vm705, %v1290, %v1292
      %v1294 = vrot.slane %v1182, 1
      %v1295 = vrot.slane %v1183, 1
      %v1296 = vsel %vm705, %v1294, %v1295
      %v1297 = vrot.slane %v1184, 1
      %v1298 = vsel %vm705, %v1295, %v1297
      %v1299 = vrot.slane %v1185, 1
      %v1300 = vrot.slane %v1186, 1
      %v1301 = vsel %vm705, %v1299, %v1300
      %v1302 = vrot.slane %v1187, 1
      %v1303 = vsel %vm705, %v1300, %v1302
      %v1304 = vrot.slane %v1188, 1
      %v1305 = vrot.slane %v1189, 1
      %v1306 = vsel %vm705, %v1304, %v1305
      %v1307 = vrot.slane %v1190, 1
      %v1308 = vsel %vm705, %v1305, %v1307
      %v1309 = vrot.slane %v1191, 1
      %v1310 = vrot.slane %v1192, 1
      %v1311 = vsel %vm705, %v1309, %v1310
      %v1312 = vrot.slane %v1193, 1
      %v1313 = vsel %vm705, %v1310, %v1312
      %v1314 = vrot.slane %v1194, 1
      %v1315 = vrot.slane %v1195, 1
      %v1316 = vsel %vm705, %v1314, %v1315
      %v1317 = vrot.slane %v1196, 1
      %v1318 = vsel %vm705, %v1315, %v1317
      %v1319 = vrot.slane %v1197, 1
      %v1320 = vrot.slane %v1198, 1
      %v1321 = vsel %vm705, %v1319, %v1320
      %v1322 = vrot.slane %v1199, 1
      %v1323 = vsel %vm705, %v1320, %v1322
      %v1324 = vrot.slane %v1200, 1
      %v1325 = vrot.slane %v1201, 1
      %v1326 = vsel %vm705, %v1324, %v1325
      %v1327 = vrot.slane %v1202, 1
      %v1328 = vsel %vm705, %v1325, %v1327
      %v1329 = vrot.slane %v1203, 1
      %v1330 = vrot.slane %v1204, 1
      %v1331 = vsel %vm705, %v1329, %v1330
      %v1332 = vrot.slane %v1205, 1
      %v1333 = vsel %vm705, %v1330, %v1332
      %v1366 = vadd.f32 %v1125, %v1256
      %v1367 = vadd.f32 %v1126, %v1258
      %v1368 = vadd.f32 %v1127, %v1261
      %v1369 = vadd.f32 %v1128, %v1263
      %v1370 = vadd.f32 %v1129, %v1266
      %v1371 = vadd.f32 %v1130, %v1268
      %v1372 = vadd.f32 %v1131, %v1271
      %v1373 = vadd.f32 %v1132, %v1273
      %v1374 = vadd.f32 %v1133, %v1276
      %v1375 = vadd.f32 %v1134, %v1278
      %v1376 = vadd.f32 %v1135, %v1281
      %v1377 = vadd.f32 %v1136, %v1283
      %v1378 = vadd.f32 %v1137, %v1286
      %v1379 = vadd.f32 %v1138, %v1288
      %v1380 = vadd.f32 %v1139, %v1291
      %v1381 = vadd.f32 %v1140, %v1293
      %v1382 = vadd.f32 %v1141, %v1296
      %v1383 = vadd.f32 %v1142, %v1298
      %v1384 = vadd.f32 %v1143, %v1301
      %v1385 = vadd.f32 %v1144, %v1303
      %v1386 = vadd.f32 %v1145, %v1306
      %v1387 = vadd.f32 %v1146, %v1308
      %v1388 = vadd.f32 %v1147, %v1311
      %v1389 = vadd.f32 %v1148, %v1313
      %v1390 = vadd.f32 %v1149, %v1316
      %v1391 = vadd.f32 %v1150, %v1318
      %v1392 = vadd.f32 %v1151, %v1321
      %v1393 = vadd.f32 %v1152, %v1323
      %v1394 = vadd.f32 %v1153, %v1326
      %v1395 = vadd.f32 %v1154, %v1328
      %v1396 = vadd.f32 %v1155, %v1331
      %v1397 = vadd.f32 %v1156, %v1333
      %v1398 = vperm.slane %v573, 2
      %v1399 = vmul.f32 %v539, %v1398
      %v1400 = vmul.f32 %v442, %v1398
      %v1401 = vmul.f32 %v556, %v1398
      %v1402 = vmul.f32 %v540, %v1398
      %v1403 = vmul.f32 %v445, %v1398
      %v1404 = vmul.f32 %v557, %v1398
      %v1405 = vmul.f32 %v541, %v1398
      %v1406 = vmul.f32 %v448, %v1398
      %v1407 = vmul.f32 %v558, %v1398
      %v1408 = vmul.f32 %v542, %v1398
      %v1409 = vmul.f32 %v451, %v1398
      %v1410 = vmul.f32 %v559, %v1398
      %v1411 = vmul.f32 %v543, %v1398
      %v1412 = vmul.f32 %v454, %v1398
      %v1413 = vmul.f32 %v560, %v1398
      %v1414 = vmul.f32 %v544, %v1398
      %v1415 = vmul.f32 %v457, %v1398
      %v1416 = vmul.f32 %v561, %v1398
      %v1417 = vmul.f32 %v545, %v1398
      %v1418 = vmul.f32 %v460, %v1398
      %v1419 = vmul.f32 %v562, %v1398
      %v1420 = vmul.f32 %v546, %v1398
      %v1421 = vmul.f32 %v463, %v1398
      %v1422 = vmul.f32 %v563, %v1398
      %v1423 = vmul.f32 %v547, %v1398
      %v1424 = vmul.f32 %v466, %v1398
      %v1425 = vmul.f32 %v564, %v1398
      %v1426 = vmul.f32 %v548, %v1398
      %v1427 = vmul.f32 %v469, %v1398
      %v1428 = vmul.f32 %v565, %v1398
      %v1429 = vmul.f32 %v549, %v1398
      %v1430 = vmul.f32 %v472, %v1398
      %v1431 = vmul.f32 %v566, %v1398
      %v1432 = vmul.f32 %v550, %v1398
      %v1433 = vmul.f32 %v475, %v1398
      %v1434 = vmul.f32 %v567, %v1398
      %v1435 = vmul.f32 %v551, %v1398
      %v1436 = vmul.f32 %v478, %v1398
      %v1437 = vmul.f32 %v568, %v1398
      %v1438 = vmul.f32 %v552, %v1398
      %v1439 = vmul.f32 %v481, %v1398
      %v1440 = vmul.f32 %v569, %v1398
      %v1441 = vmul.f32 %v553, %v1398
      %v1442 = vmul.f32 %v484, %v1398
      %v1443 = vmul.f32 %v570, %v1398
      %v1444 = vmul.f32 %v554, %v1398
      %v1445 = vmul.f32 %v487, %v1398
      %v1446 = vmul.f32 %v571, %v1398
      %v1495 = vrot.slane %v1399, 2
      %v1496 = vrot.slane %v1400, 2
      %v1497 = vsel %vm947, %v1495, %v1496
      %v1498 = vrot.slane %v1401, 2
      %v1499 = vsel %vm947, %v1496, %v1498
      %v1500 = vrot.slane %v1402, 2
      %v1501 = vrot.slane %v1403, 2
      %v1502 = vsel %vm947, %v1500, %v1501
      %v1503 = vrot.slane %v1404, 2
      %v1504 = vsel %vm947, %v1501, %v1503
      %v1505 = vrot.slane %v1405, 2
      %v1506 = vrot.slane %v1406, 2
      %v1507 = vsel %vm947, %v1505, %v1506
      %v1508 = vrot.slane %v1407, 2
      %v1509 = vsel %vm947, %v1506, %v1508
      %v1510 = vrot.slane %v1408, 2
      %v1511 = vrot.slane %v1409, 2
      %v1512 = vsel %vm947, %v1510, %v1511
      %v1513 = vrot.slane %v1410, 2
      %v1514 = vsel %vm947, %v1511, %v1513
      %v1515 = vrot.slane %v1411, 2
      %v1516 = vrot.slane %v1412, 2
      %v1517 = vsel %vm947, %v1515, %v1516
      %v1518 = vrot.slane %v1413, 2
      %v1519 = vsel %vm947, %v1516, %v1518
      %v1520 = vrot.slane %v1414, 2
      %v1521 = vrot.slane %v1415, 2
      %v1522 = vsel %vm947, %v1520, %v1521
      %v1523 = vrot.slane %v1416, 2
      %v1524 = vsel %vm947, %v1521, %v1523
      %v1525 = vrot.slane %v1417, 2
      %v1526 = vrot.slane %v1418, 2
      %v1527 = vsel %vm947, %v1525, %v1526
      %v1528 = vrot.slane %v1419, 2
      %v1529 = vsel %vm947, %v1526, %v1528
      %v1530 = vrot.slane %v1420, 2
      %v1531 = vrot.slane %v1421, 2
      %v1532 = vsel %vm947, %v1530, %v1531
      %v1533 = vrot.slane %v1422, 2
      %v1534 = vsel %vm947, %v1531, %v1533
      %v1535 = vrot.slane %v1423, 2
      %v1536 = vrot.slane %v1424, 2
      %v1537 = vsel %vm947, %v1535, %v1536
      %v1538 = vrot.slane %v1425, 2
      %v1539 = vsel %vm947, %v1536, %v1538
      %v1540 = vrot.slane %v1426, 2
      %v1541 = vrot.slane %v1427, 2
      %v1542 = vsel %vm947, %v1540, %v1541
      %v1543 = vrot.slane %v1428, 2
      %v1544 = vsel %vm947, %v1541, %v1543
      %v1545 = vrot.slane %v1429, 2
      %v1546 = vrot.slane %v1430, 2
      %v1547 = vsel %vm947, %v1545, %v1546
      %v1548 = vrot.slane %v1431, 2
      %v1549 = vsel %vm947, %v1546, %v1548
      %v1550 = vrot.slane %v1432, 2
      %v1551 = vrot.slane %v1433, 2
      %v1552 = vsel %vm947, %v1550, %v1551
      %v1553 = vrot.slane %v1434, 2
      %v1554 = vsel %vm947, %v1551, %v1553
      %v1555 = vrot.slane %v1435, 2
      %v1556 = vrot.slane %v1436, 2
      %v1557 = vsel %vm947, %v1555, %v1556
      %v1558 = vrot.slane %v1437, 2
      %v1559 = vsel %vm947, %v1556, %v1558
      %v1560 = vrot.slane %v1438, 2
      %v1561 = vrot.slane %v1439, 2
      %v1562 = vsel %vm947, %v1560, %v1561
      %v1563 = vrot.slane %v1440, 2
      %v1564 = vsel %vm947, %v1561, %v1563
      %v1565 = vrot.slane %v1441, 2
      %v1566 = vrot.slane %v1442, 2
      %v1567 = vsel %vm947, %v1565, %v1566
      %v1568 = vrot.slane %v1443, 2
      %v1569 = vsel %vm947, %v1566, %v1568
      %v1570 = vrot.slane %v1444, 2
      %v1571 = vrot.slane %v1445, 2
      %v1572 = vsel %vm947, %v1570, %v1571
      %v1573 = vrot.slane %v1446, 2
      %v1574 = vsel %vm947, %v1571, %v1573
      %v1607 = vadd.f32 %v1366, %v1497
      %v1608 = vadd.f32 %v1367, %v1499
      %v1609 = vadd.f32 %v1368, %v1502
      %v1610 = vadd.f32 %v1369, %v1504
      %v1611 = vadd.f32 %v1370, %v1507
      %v1612 = vadd.f32 %v1371, %v1509
      %v1613 = vadd.f32 %v1372, %v1512
      %v1614 = vadd.f32 %v1373, %v1514
      %v1615 = vadd.f32 %v1374, %v1517
      %v1616 = vadd.f32 %v1375, %v1519
      %v1617 = vadd.f32 %v1376, %v1522
      %v1618 = vadd.f32 %v1377, %v1524
      %v1619 = vadd.f32 %v1378, %v1527
      %v1620 = vadd.f32 %v1379, %v1529
      %v1621 = vadd.f32 %v1380, %v1532
      %v1622 = vadd.f32 %v1381, %v1534
      %v1623 = vadd.f32 %v1382, %v1537
      %v1624 = vadd.f32 %v1383, %v1539
      %v1625 = vadd.f32 %v1384, %v1542
      %v1626 = vadd.f32 %v1385, %v1544
      %v1627 = vadd.f32 %v1386, %v1547
      %v1628 = vadd.f32 %v1387, %v1549
      %v1629 = vadd.f32 %v1388, %v1552
      %v1630 = vadd.f32 %v1389, %v1554
      %v1631 = vadd.f32 %v1390, %v1557
      %v1632 = vadd.f32 %v1391, %v1559
      %v1633 = vadd.f32 %v1392, %v1562
      %v1634 = vadd.f32 %v1393, %v1564
      %v1635 = vadd.f32 %v1394, %v1567
      %v1636 = vadd.f32 %v1395, %v1569
      %v1637 = vadd.f32 %v1396, %v1572
      %v1638 = vadd.f32 %v1397, %v1574
      %v1639 = vperm.slane %v574, 0
      %v1640 = vmul.f32 %v540, %v1639
      %v1641 = vmul.f32 %v445, %v1639
      %v1642 = vmul.f32 %v541, %v1639
      %v1643 = vmul.f32 %v448, %v1639
      %v1644 = vmul.f32 %v542, %v1639
      %v1645 = vmul.f32 %v451, %v1639
      %v1646 = vmul.f32 %v543, %v1639
      %v1647 = vmul.f32 %v454, %v1639
      %v1648 = vmul.f32 %v544, %v1639
      %v1649 = vmul.f32 %v457, %v1639
      %v1650 = vmul.f32 %v545, %v1639
      %v1651 = vmul.f32 %v460, %v1639
      %v1652 = vmul.f32 %v546, %v1639
      %v1653 = vmul.f32 %v463, %v1639
      %v1654 = vmul.f32 %v547, %v1639
      %v1655 = vmul.f32 %v466, %v1639
      %v1656 = vmul.f32 %v548, %v1639
      %v1657 = vmul.f32 %v469, %v1639
      %v1658 = vmul.f32 %v549, %v1639
      %v1659 = vmul.f32 %v472, %v1639
      %v1660 = vmul.f32 %v550, %v1639
      %v1661 = vmul.f32 %v475, %v1639
      %v1662 = vmul.f32 %v551, %v1639
      %v1663 = vmul.f32 %v478, %v1639
      %v1664 = vmul.f32 %v552, %v1639
      %v1665 = vmul.f32 %v481, %v1639
      %v1666 = vmul.f32 %v553, %v1639
      %v1667 = vmul.f32 %v484, %v1639
      %v1668 = vmul.f32 %v554, %v1639
      %v1669 = vmul.f32 %v487, %v1639
      %v1670 = vmul.f32 %v538, %v1639
      %v1671 = vmul.f32 %v439, %v1639
      %v1672 = vadd.f32 %v1607, %v1640
      %v1673 = vadd.f32 %v1608, %v1641
      %v1674 = vadd.f32 %v1609, %v1642
      %v1675 = vadd.f32 %v1610, %v1643
      %v1676 = vadd.f32 %v1611, %v1644
      %v1677 = vadd.f32 %v1612, %v1645
      %v1678 = vadd.f32 %v1613, %v1646
      %v1679 = vadd.f32 %v1614, %v1647
      %v1680 = vadd.f32 %v1615, %v1648
      %v1681 = vadd.f32 %v1616, %v1649
      %v1682 = vadd.f32 %v1617, %v1650
      %v1683 = vadd.f32 %v1618, %v1651
      %v1684 = vadd.f32 %v1619, %v1652
      %v1685 = vadd.f32 %v1620, %v1653
      %v1686 = vadd.f32 %v1621, %v1654
      %v1687 = vadd.f32 %v1622, %v1655
      %v1688 = vadd.f32 %v1623, %v1656
      %v1689 = vadd.f32 %v1624, %v1657
      %v1690 = vadd.f32 %v1625, %v1658
      %v1691 = vadd.f32 %v1626, %v1659
      %v1692 = vadd.f32 %v1627, %v1660
      %v1693 = vadd.f32 %v1628, %v1661
      %v1694 = vadd.f32 %v1629, %v1662
      %v1695 = vadd.f32 %v1630, %v1663
      %v1696 = vadd.f32 %v1631, %v1664
      %v1697 = vadd.f32 %v1632, %v1665
      %v1698 = vadd.f32 %v1633, %v1666
      %v1699 = vadd.f32 %v1634, %v1667
      %v1700 = vadd.f32 %v1635, %v1668
      %v1701 = vadd.f32 %v1636, %v1669
      %v1702 = vadd.f32 %v1637, %v1670
      %v1703 = vadd.f32 %v1638, %v1671
      %v1704 = vperm.slane %v574, 1
      %v1705 = vmul.f32 %v540, %v1704
      %v1706 = vmul.f32 %v445, %v1704
      %v1707 = vmul.f32 %v557, %v1704
      %v1708 = vmul.f32 %v541, %v1704
      %v1709 = vmul.f32 %v448, %v1704
      %v1710 = vmul.f32 %v558, %v1704
      %v1711 = vmul.f32 %v542, %v1704
      %v1712 = vmul.f32 %v451, %v1704
      %v1713 = vmul.f32 %v559, %v1704
      %v1714 = vmul.f32 %v543, %v1704
      %v1715 = vmul.f32 %v454, %v1704
      %v1716 = vmul.f32 %v560, %v1704
      %v1717 = vmul.f32 %v544, %v1704
      %v1718 = vmul.f32 %v457, %v1704
      %v1719 = vmul.f32 %v561, %v1704
      %v1720 = vmul.f32 %v545, %v1704
      %v1721 = vmul.f32 %v460, %v1704
      %v1722 = vmul.f32 %v562, %v1704
      %v1723 = vmul.f32 %v546, %v1704
      %v1724 = vmul.f32 %v463, %v1704
      %v1725 = vmul.f32 %v563, %v1704
      %v1726 = vmul.f32 %v547, %v1704
      %v1727 = vmul.f32 %v466, %v1704
      %v1728 = vmul.f32 %v564, %v1704
      %v1729 = vmul.f32 %v548, %v1704
      %v1730 = vmul.f32 %v469, %v1704
      %v1731 = vmul.f32 %v565, %v1704
      %v1732 = vmul.f32 %v549, %v1704
      %v1733 = vmul.f32 %v472, %v1704
      %v1734 = vmul.f32 %v566, %v1704
      %v1735 = vmul.f32 %v550, %v1704
      %v1736 = vmul.f32 %v475, %v1704
      %v1737 = vmul.f32 %v567, %v1704
      %v1738 = vmul.f32 %v551, %v1704
      %v1739 = vmul.f32 %v478, %v1704
      %v1740 = vmul.f32 %v568, %v1704
      %v1741 = vmul.f32 %v552, %v1704
      %v1742 = vmul.f32 %v481, %v1704
      %v1743 = vmul.f32 %v569, %v1704
      %v1744 = vmul.f32 %v553, %v1704
      %v1745 = vmul.f32 %v484, %v1704
      %v1746 = vmul.f32 %v570, %v1704
      %v1747 = vmul.f32 %v554, %v1704
      %v1748 = vmul.f32 %v487, %v1704
      %v1749 = vmul.f32 %v571, %v1704
      %v1750 = vmul.f32 %v538, %v1704
      %v1751 = vmul.f32 %v439, %v1704
      %v1752 = vmul.f32 %v555, %v1704
      %v1801 = vrot.slane %v1705, 1
      %v1802 = vrot.slane %v1706, 1
      %v1803 = vsel %vm705, %v1801, %v1802
      %v1804 = vrot.slane %v1707, 1
      %v1805 = vsel %vm705, %v1802, %v1804
      %v1806 = vrot.slane %v1708, 1
      %v1807 = vrot.slane %v1709, 1
      %v1808 = vsel %vm705, %v1806, %v1807
      %v1809 = vrot.slane %v1710, 1
      %v1810 = vsel %vm705, %v1807, %v1809
      %v1811 = vrot.slane %v1711, 1
      %v1812 = vrot.slane %v1712, 1
      %v1813 = vsel %vm705, %v1811, %v1812
      %v1814 = vrot.slane %v1713, 1
      %v1815 = vsel %vm705, %v1812, %v1814
      %v1816 = vrot.slane %v1714, 1
      %v1817 = vrot.slane %v1715, 1
      %v1818 = vsel %vm705, %v1816, %v1817
      %v1819 = vrot.slane %v1716, 1
      %v1820 = vsel %vm705, %v1817, %v1819
      %v1821 = vrot.slane %v1717, 1
      %v1822 = vrot.slane %v1718, 1
      %v1823 = vsel %vm705, %v1821, %v1822
      %v1824 = vrot.slane %v1719, 1
      %v1825 = vsel %vm705, %v1822, %v1824
      %v1826 = vrot.slane %v1720, 1
      %v1827 = vrot.slane %v1721, 1
      %v1828 = vsel %vm705, %v1826, %v1827
      %v1829 = vrot.slane %v1722, 1
      %v1830 = vsel %vm705, %v1827, %v1829
      %v1831 = vrot.slane %v1723, 1
      %v1832 = vrot.slane %v1724, 1
      %v1833 = vsel %vm705, %v1831, %v1832
      %v1834 = vrot.slane %v1725, 1
      %v1835 = vsel %vm705, %v1832, %v1834
      %v1836 = vrot.slane %v1726, 1
      %v1837 = vrot.slane %v1727, 1
      %v1838 = vsel %vm705, %v1836, %v1837
      %v1839 = vrot.slane %v1728, 1
      %v1840 = vsel %vm705, %v1837, %v1839
      %v1841 = vrot.slane %v1729, 1
      %v1842 = vrot.slane %v1730, 1
      %v1843 = vsel %vm705, %v1841, %v1842
      %v1844 = vrot.slane %v1731, 1
      %v1845 = vsel %vm705, %v1842, %v1844
      %v1846 = vrot.slane %v1732, 1
      %v1847 = vrot.slane %v1733, 1
      %v1848 = vsel %vm705, %v1846, %v1847
      %v1849 = vrot.slane %v1734, 1
      %v1850 = vsel %vm705, %v1847, %v1849
      %v1851 = vrot.slane %v1735, 1
      %v1852 = vrot.slane %v1736, 1
      %v1853 = vsel %vm705, %v1851, %v1852
      %v1854 = vrot.slane %v1737, 1
      %v1855 = vsel %vm705, %v1852, %v1854
      %v1856 = vrot.slane %v1738, 1
      %v1857 = vrot.slane %v1739, 1
      %v1858 = vsel %vm705, %v1856, %v1857
      %v1859 = vrot.slane %v1740, 1
      %v1860 = vsel %vm705, %v1857, %v1859
      %v1861 = vrot.slane %v1741, 1
      %v1862 = vrot.slane %v1742, 1
      %v1863 = vsel %vm705, %v1861, %v1862
      %v1864 = vrot.slane %v1743, 1
      %v1865 = vsel %vm705, %v1862, %v1864
      %v1866 = vrot.slane %v1744, 1
      %v1867 = vrot.slane %v1745, 1
      %v1868 = vsel %vm705, %v1866, %v1867
      %v1869 = vrot.slane %v1746, 1
      %v1870 = vsel %vm705, %v1867, %v1869
      %v1871 = vrot.slane %v1747, 1
      %v1872 = vrot.slane %v1748, 1
      %v1873 = vsel %vm705, %v1871, %v1872
      %v1874 = vrot.slane %v1749, 1
      %v1875 = vsel %vm705, %v1872, %v1874
      %v1876 = vrot.slane %v1750, 1
      %v1877 = vrot.slane %v1751, 1
      %v1878 = vsel %vm705, %v1876, %v1877
      %v1879 = vrot.slane %v1752, 1
      %v1880 = vsel %vm705, %v1877, %v1879
      %v1913 = vadd.f32 %v1672, %v1803
      %v1914 = vadd.f32 %v1673, %v1805
      %v1915 = vadd.f32 %v1674, %v1808
      %v1916 = vadd.f32 %v1675, %v1810
      %v1917 = vadd.f32 %v1676, %v1813
      %v1918 = vadd.f32 %v1677, %v1815
      %v1919 = vadd.f32 %v1678, %v1818
      %v1920 = vadd.f32 %v1679, %v1820
      %v1921 = vadd.f32 %v1680, %v1823
      %v1922 = vadd.f32 %v1681, %v1825
      %v1923 = vadd.f32 %v1682, %v1828
      %v1924 = vadd.f32 %v1683, %v1830
      %v1925 = vadd.f32 %v1684, %v1833
      %v1926 = vadd.f32 %v1685, %v1835
      %v1927 = vadd.f32 %v1686, %v1838
      %v1928 = vadd.f32 %v1687, %v1840
      %v1929 = vadd.f32 %v1688, %v1843
      %v1930 = vadd.f32 %v1689, %v1845
      %v1931 = vadd.f32 %v1690, %v1848
      %v1932 = vadd.f32 %v1691, %v1850
      %v1933 = vadd.f32 %v1692, %v1853
      %v1934 = vadd.f32 %v1693, %v1855
      %v1935 = vadd.f32 %v1694, %v1858
      %v1936 = vadd.f32 %v1695, %v1860
      %v1937 = vadd.f32 %v1696, %v1863
      %v1938 = vadd.f32 %v1697, %v1865
      %v1939 = vadd.f32 %v1698, %v1868
      %v1940 = vadd.f32 %v1699, %v1870
      %v1941 = vadd.f32 %v1700, %v1873
      %v1942 = vadd.f32 %v1701, %v1875
      %v1943 = vadd.f32 %v1702, %v1878
      %v1944 = vadd.f32 %v1703, %v1880
      %v1945 = vperm.slane %v574, 2
      %v1946 = vmul.f32 %v540, %v1945
      %v1947 = vmul.f32 %v445, %v1945
      %v1948 = vmul.f32 %v557, %v1945
      %v1949 = vmul.f32 %v541, %v1945
      %v1950 = vmul.f32 %v448, %v1945
      %v1951 = vmul.f32 %v558, %v1945
      %v1952 = vmul.f32 %v542, %v1945
      %v1953 = vmul.f32 %v451, %v1945
      %v1954 = vmul.f32 %v559, %v1945
      %v1955 = vmul.f32 %v543, %v1945
      %v1956 = vmul.f32 %v454, %v1945
      %v1957 = vmul.f32 %v560, %v1945
      %v1958 = vmul.f32 %v544, %v1945
      %v1959 = vmul.f32 %v457, %v1945
      %v1960 = vmul.f32 %v561, %v1945
      %v1961 = vmul.f32 %v545, %v1945
      %v1962 = vmul.f32 %v460, %v1945
      %v1963 = vmul.f32 %v562, %v1945
      %v1964 = vmul.f32 %v546, %v1945
      %v1965 = vmul.f32 %v463, %v1945
      %v1966 = vmul.f32 %v563, %v1945
      %v1967 = vmul.f32 %v547, %v1945
      %v1968 = vmul.f32 %v466, %v1945
      %v1969 = vmul.f32 %v564, %v1945
      %v1970 = vmul.f32 %v548, %v1945
      %v1971 = vmul.f32 %v469, %v1945
      %v1972 = vmul.f32 %v565, %v1945
      %v1973 = vmul.f32 %v549, %v1945
      %v1974 = vmul.f32 %v472, %v1945
      %v1975 = vmul.f32 %v566, %v1945
      %v1976 = vmul.f32 %v550, %v1945
      %v1977 = vmul.f32 %v475, %v1945
      %v1978 = vmul.f32 %v567, %v1945
      %v1979 = vmul.f32 %v551, %v1945
      %v1980 = vmul.f32 %v478, %v1945
      %v1981 = vmul.f32 %v568, %v1945
      %v1982 = vmul.f32 %v552, %v1945
      %v1983 = vmul.f32 %v481, %v1945
      %v1984 = vmul.f32 %v569, %v1945
      %v1985 = vmul.f32 %v553, %v1945
      %v1986 = vmul.f32 %v484, %v1945
      %v1987 = vmul.f32 %v570, %v1945
      %v1988 = vmul.f32 %v554, %v1945
      %v1989 = vmul.f32 %v487, %v1945
      %v1990 = vmul.f32 %v571, %v1945
      %v1991 = vmul.f32 %v538, %v1945
      %v1992 = vmul.f32 %v439, %v1945
      %v1993 = vmul.f32 %v555, %v1945
      %v2042 = vrot.slane %v1946, 2
      %v2043 = vrot.slane %v1947, 2
      %v2044 = vsel %vm947, %v2042, %v2043
      %v2045 = vrot.slane %v1948, 2
      %v2046 = vsel %vm947, %v2043, %v2045
      %v2047 = vrot.slane %v1949, 2
      %v2048 = vrot.slane %v1950, 2
      %v2049 = vsel %vm947, %v2047, %v2048
      %v2050 = vrot.slane %v1951, 2
      %v2051 = vsel %vm947, %v2048, %v2050
      %v2052 = vrot.slane %v1952, 2
      %v2053 = vrot.slane %v1953, 2
      %v2054 = vsel %vm947, %v2052, %v2053
      %v2055 = vrot.slane %v1954, 2
      %v2056 = vsel %vm947, %v2053, %v2055
      %v2057 = vrot.slane %v1955, 2
      %v2058 = vrot.slane %v1956, 2
      %v2059 = vsel %vm947, %v2057, %v2058
      %v2060 = vrot.slane %v1957, 2
      %v2061 = vsel %vm947, %v2058, %v2060
      %v2062 = vrot.slane %v1958, 2
      %v2063 = vrot.slane %v1959, 2
      %v2064 = vsel %vm947, %v2062, %v2063
      %v2065 = vrot.slane %v1960, 2
      %v2066 = vsel %vm947, %v2063, %v2065
      %v2067 = vrot.slane %v1961, 2
      %v2068 = vrot.slane %v1962, 2
      %v2069 = vsel %vm947, %v2067, %v2068
      %v2070 = vrot.slane %v1963, 2
      %v2071 = vsel %vm947, %v2068, %v2070
      %v2072 = vrot.slane %v1964, 2
      %v2073 = vrot.slane %v1965, 2
      %v2074 = vsel %vm947, %v2072, %v2073
      %v2075 = vrot.slane %v1966, 2
      %v2076 = vsel %vm947, %v2073, %v2075
      %v2077 = vrot.slane %v1967, 2
      %v2078 = vrot.slane %v1968, 2
      %v2079 = vsel %vm947, %v2077, %v2078
      %v2080 = vrot.slane %v1969, 2
      %v2081 = vsel %vm947, %v2078, %v2080
      %v2082 = vrot.slane %v1970, 2
      %v2083 = vrot.slane %v1971, 2
      %v2084 = vsel %vm947, %v2082, %v2083
      %v2085 = vrot.slane %v1972, 2
      %v2086 = vsel %vm947, %v2083, %v2085
      %v2087 = vrot.slane %v1973, 2
      %v2088 = vrot.slane %v1974, 2
      %v2089 = vsel %vm947, %v2087, %v2088
      %v2090 = vrot.slane %v1975, 2
      %v2091 = vsel %vm947, %v2088, %v2090
      %v2092 = vrot.slane %v1976, 2
      %v2093 = vrot.slane %v1977, 2
      %v2094 = vsel %vm947, %v2092, %v2093
      %v2095 = vrot.slane %v1978, 2
      %v2096 = vsel %vm947, %v2093, %v2095
      %v2097 = vrot.slane %v1979, 2
      %v2098 = vrot.slane %v1980, 2
      %v2099 = vsel %vm947, %v2097, %v2098
      %v2100 = vrot.slane %v1981, 2
      %v2101 = vsel %vm947, %v2098, %v2100
      %v2102 = vrot.slane %v1982, 2
      %v2103 = vrot.slane %v1983, 2
      %v2104 = vsel %vm947, %v2102, %v2103
      %v2105 = vrot.slane %v1984, 2
      %v2106 = vsel %vm947, %v2103, %v2105
      %v2107 = vrot.slane %v1985, 2
      %v2108 = vrot.slane %v1986, 2
      %v2109 = vsel %vm947, %v2107, %v2108
      %v2110 = vrot.slane %v1987, 2
      %v2111 = vsel %vm947, %v2108, %v2110
      %v2112 = vrot.slane %v1988, 2
      %v2113 = vrot.slane %v1989, 2
      %v2114 = vsel %vm947, %v2112, %v2113
      %v2115 = vrot.slane %v1990, 2
      %v2116 = vsel %vm947, %v2113, %v2115
      %v2117 = vrot.slane %v1991, 2
      %v2118 = vrot.slane %v1992, 2
      %v2119 = vsel %vm947, %v2117, %v2118
      %v2120 = vrot.slane %v1993, 2
      %v2121 = vsel %vm947, %v2118, %v2120
      %v2154 = vadd.f32 %v1913, %v2044
      %v2155 = vadd.f32 %v1914, %v2046
      %v2156 = vadd.f32 %v1915, %v2049
      %v2157 = vadd.f32 %v1916, %v2051
      %v2158 = vadd.f32 %v1917, %v2054
      %v2159 = vadd.f32 %v1918, %v2056
      %v2160 = vadd.f32 %v1919, %v2059
      %v2161 = vadd.f32 %v1920, %v2061
      %v2162 = vadd.f32 %v1921, %v2064
      %v2163 = vadd.f32 %v1922, %v2066
      %v2164 = vadd.f32 %v1923, %v2069
      %v2165 = vadd.f32 %v1924, %v2071
      %v2166 = vadd.f32 %v1925, %v2074
      %v2167 = vadd.f32 %v1926, %v2076
      %v2168 = vadd.f32 %v1927, %v2079
      %v2169 = vadd.f32 %v1928, %v2081
      %v2170 = vadd.f32 %v1929, %v2084
      %v2171 = vadd.f32 %v1930, %v2086
      %v2172 = vadd.f32 %v1931, %v2089
      %v2173 = vadd.f32 %v1932, %v2091
      %v2174 = vadd.f32 %v1933, %v2094
      %v2175 = vadd.f32 %v1934, %v2096
      %v2176 = vadd.f32 %v1935, %v2099
      %v2177 = vadd.f32 %v1936, %v2101
      %v2178 = vadd.f32 %v1937, %v2104
      %v2179 = vadd.f32 %v1938, %v2106
      %v2180 = vadd.f32 %v1939, %v2109
      %v2181 = vadd.f32 %v1940, %v2111
      %v2182 = vadd.f32 %v1941, %v2114
      %v2183 = vadd.f32 %v1942, %v2116
      %v2184 = vadd.f32 %v1943, %v2119
      %v2185 = vadd.f32 %v1944, %v2121
      %2186 = vst [vmem:[%s231] sm:$0xff] %v2154
      %2187 = vst [vmem:[%s231 + $0x8] sm:$0xff] %v2155
      %2188 = vst [vmem:[%s231 + $0x10] sm:$0xff] %v2156
      %2189 = vst [vmem:[%s231 + $0x18] sm:$0xff] %v2157
      %2190 = vst [vmem:[%s231 + $0x20] sm:$0xff] %v2158
      %2191 = vst [vmem:[%s231 + $0x28] sm:$0xff] %v2159
      %2192 = vst [vmem:[%s231 + $0x30] sm:$0xff] %v2160
      %2193 = vst [vmem:[%s231 + $0x38] sm:$0xff] %v2161
      %2194 = vst [vmem:[%s231 + $0x40] sm:$0xff] %v2162
      %2195 = vst [vmem:[%s231 + $0x48] sm:$0xff] %v2163
      %2196 = vst [vmem:[%s231 + $0x50] sm:$0xff] %v2164
      %2197 = vst [vmem:[%s231 + $0x58] sm:$0xff] %v2165
      %2198 = vst [vmem:[%s231 + $0x60] sm:$0xff] %v2166
      %2199 = vst [vmem:[%s231 + $0x68] sm:$0xff] %v2167
      %2200 = vst [vmem:[%s231 + $0x70] sm:$0xff] %v2168
      %2201 = vst [vmem:[%s231 + $0x78] sm:$0xff] %v2169
      %2202 = vst [vmem:[%s231 + $0x80] sm:$0xff] %v2170
      %2203 = vst [vmem:[%s231 + $0x88] sm:$0xff] %v2171
      %2204 = vst [vmem:[%s231 + $0x90] sm:$0xff] %v2172
      %2205 = vst [vmem:[%s231 + $0x98] sm:$0xff] %v2173
      %2206 = vst [vmem:[%s231 + $0xa0] sm:$0xff] %v2174
      %2207 = vst [vmem:[%s231 + $0xa8] sm:$0xff] %v2175
      %2208 = vst [vmem:[%s231 + $0xb0] sm:$0xff] %v2176
      %2209 = vst [vmem:[%s231 + $0xb8] sm:$0xff] %v2177
      %2210 = vst [vmem:[%s231 + $0xc0] sm:$0xff] %v2178
      %2211 = vst [vmem:[%s231 + $0xc8] sm:$0xff] %v2179
      %2212 = vst [vmem:[%s231 + $0xd0] sm:$0xff] %v2180
      %2213 = vst [vmem:[%s231 + $0xd8] sm:$0xff] %v2181
      %2214 = vst [vmem:[%s231 + $0xe0] sm:$0xff] %v2182
      %2215 = vst [vmem:[%s231 + $0xe8] sm:$0xff] %v2183
      %2216 = vst [vmem:[%s231 + $0xf0] sm:$0xff] %v2184
      %2217 = vst [vmem:[%s231 + $0xf8] sm:$0xff] %v2185
      %v2218 = vadd.f32 %v2154, %v2155
      %v2219 = vadd.f32 %v2218, %v2156
      %v2220 = vadd.f32 %v2219, %v2157
      %v2221 = vadd.f32 %v2220, %v2158
      %v2222 = vadd.f32 %v2221, %v2159
      %v2223 = vadd.f32 %v2222, %v2160
      %v2224 = vadd.f32 %v2223, %v2161
      %v2225 = vadd.f32 %v2224, %v2162
      %v2226 = vadd.f32 %v2225, %v2163
      %v2227 = vadd.f32 %v2226, %v2164
      %v2228 = vadd.f32 %v2227, %v2165
      %v2229 = vadd.f32 %v2228, %v2166
      %v2230 = vadd.f32 %v2229, %v2167
      %v2231 = vadd.f32 %v2230, %v2168
      %v2232 = vadd.f32 %v2231, %v2169
      %v2233 = vadd.f32 %v2232, %v2170
      %v2234 = vadd.f32 %v2233, %v2171
      %v2235 = vadd.f32 %v2234, %v2172
      %v2236 = vadd.f32 %v2235, %v2173
      %v2237 = vadd.f32 %v2236, %v2174
      %v2238 = vadd.f32 %v2237, %v2175
      %v2239 = vadd.f32 %v2238, %v2176
      %v2240 = vadd.f32 %v2239, %v2177
      %v2241 = vadd.f32 %v2240, %v2178
      %v2242 = vadd.f32 %v2241, %v2179
      %v2243 = vadd.f32 %v2242, %v2180
      %v2244 = vadd.f32 %v2243, %v2181
      %v2245 = vadd.f32 %v2244, %v2182
      %v2246 = vadd.f32 %v2245, %v2183
      %v2247 = vadd.f32 %v2246, %v2184
      %v2248 = vadd.f32 %v2247, %v2185
      %v2249 = vrot.slane %v2248, 4
      %v2250 = vadd.f32 %v2248, %v2249
      %v2251 = vrot.slane %v2250, 2
      %v2252 = vadd.f32 %v2250, %v2251
      %v2253 = vrot.slane %v2252, 1
      %v2254 = vadd.f32 %v2252, %v2253
      %v2255 = vmul.f32 %v2154, %v2154
      %v2256 = vmul.f32 %v2155, %v2155
      %v2257 = vmul.f32 %v2156, %v2156
      %v2258 = vmul.f32 %v2157, %v2157
      %v2259 = vmul.f32 %v2158, %v2158
      %v2260 = vmul.f32 %v2159, %v2159
      %v2261 = vmul.f32 %v2160, %v2160
      %v2262 = vmul.f32 %v2161, %v2161
      %v2263 = vmul.f32 %v2162, %v2162
      %v2264 = vmul.f32 %v2163, %v2163
      %v2265 = vmul.f32 %v2164, %v2164
      %v2266 = vmul.f32 %v2165, %v2165
      %v2267 = vmul.f32 %v2166, %v2166
      %v2268 = vmul.f32 %v2167, %v2167
      %v2269 = vmul.f32 %v2168, %v2168
      %v2270 = vmul.f32 %v2169, %v2169
      %v2271 = vmul.f32 %v2170, %v2170
      %v2272 = vmul.f32 %v2171, %v2171
      %v2273 = vmul.f32 %v2172, %v2172
      %v2274 = vmul.f32 %v2173, %v2173
      %v2275 = vmul.f32 %v2174, %v2174
      %v2276 = vmul.f32 %v2175, %v2175
      %v2277 = vmul.f32 %v2176, %v2176
      %v2278 = vmul.f32 %v2177, %v2177
      %v2279 = vmul.f32 %v2178, %v2178
      %v2280 = vmul.f32 %v2179, %v2179
      %v2281 = vmul.f32 %v2180, %v2180
      %v2282 = vmul.f32 %v2181, %v2181
      %v2283 = vmul.f32 %v2182, %v2182
      %v2284 = vmul.f32 %v2183, %v2183
      %v2285 = vmul.f32 %v2184, %v2184
      %v2286 = vmul.f32 %v2185, %v2185
      %v2287 = vadd.f32 %v2255, %v2256
      %v2288 = vadd.f32 %v2287, %v2257
      %v2289 = vadd.f32 %v2288, %v2258
      %v2290 = vadd.f32 %v2289, %v2259
      %v2291 = vadd.f32 %v2290, %v2260
      %v2292 = vadd.f32 %v2291, %v2261
      %v2293 = vadd.f32 %v2292, %v2262
      %v2294 = vadd.f32 %v2293, %v2263
      %v2295 = vadd.f32 %v2294, %v2264
      %v2296 = vadd.f32 %v2295, %v2265
      %v2297 = vadd.f32 %v2296, %v2266
      %v2298 = vadd.f32 %v2297, %v2267
      %v2299 = vadd.f32 %v2298, %v2268
      %v2300 = vadd.f32 %v2299, %v2269
      %v2301 = vadd.f32 %v2300, %v2270
      %v2302 = vadd.f32 %v2301, %v2271
      %v2303 = vadd.f32 %v2302, %v2272
      %v2304 = vadd.f32 %v2303, %v2273
      %v2305 = vadd.f32 %v2304, %v2274
      %v2306 = vadd.f32 %v2305, %v2275
      %v2307 = vadd.f32 %v2306, %v2276
      %v2308 = vadd.f32 %v2307, %v2277
      %v2309 = vadd.f32 %v2308, %v2278
      %v2310 = vadd.f32 %v2309, %v2279
      %v2311 = vadd.f32 %v2310, %v2280
      %v2312 = vadd.f32 %v2311, %v2281
      %v2313 = vadd.f32 %v2312, %v2282
      %v2314 = vadd.f32 %v2313, %v2283
      %v2315 = vadd.f32 %v2314, %v2284
      %v2316 = vadd.f32 %v2315, %v2285
      %v2317 = vadd.f32 %v2316, %v2286
      %v2318 = vrot.slane %v2317, 4
      %v2319 = vadd.f32 %v2317, %v2318
      %v2320 = vrot.slane %v2319, 2
      %v2321 = vadd.f32 %v2319, %v2320
      %v2322 = vrot.slane %v2321, 1
      %v2323 = vadd.f32 %v2321, %v2322
      %v2324 = vsel %vm437, %v2254, %v2323
      %2325 = vst [vmem:[%s235] sm:$0x3] %v2324
      %p2326 = scmp.lt.s32.totalorder %s17, 1
      %s2327 = scalar_select %p2326, %s17, 1
      %s2328 = smul.addr %s2327, 32
      %s2329 = smul.addr %s2328, 8
      %s2330 = scalar_lea.vmem %s4, %s2329
      %p2331 = scmp.lt.s32.totalorder %s17, 1
      %s2332 = scalar_select %p2331, %s17, 1
      %s2333 = smul.addr %s2332, 2
      %s2334 = scalar_lea.vmem %s5, %s2333
      // Predicated region
      $region37: #{inverted_residual.5} parent=35 // pred_check
        %p2335 = pneg %p124
      $region38: #{inverted_residual.5} parent=35 // pred_check_branch
        %2337 = sbr.rel (%p2335) target = $region40
      $region39: #{inverted_residual.5} parent=35 // pred_region
        _
      $region40: #{inverted_residual.5} parent=35 // pred_fallthru
        _
      // Predicated region
      $region41: #{inverted_residual.5} parent=35 // pred_check
        %p2338 = pneg %p150
      $region42: #{inverted_residual.5} parent=35 // pred_check_branch
        %2340 = sbr.rel (%p2338) target = $region44
      $region43: #{inverted_residual.5} parent=35 // pred_region
        _
      $region44: #{inverted_residual.5} parent=35 // pred_fallthru
        _
    $region36: #{inverted_residual.5} parent=5 // pred_fallthru
      _
    %p2341 = scmp.le.s32.totalorder 2, %s12
    // Predicated region
    $region45: #{inverted_residual.5} parent=5 // pred_check
      %p2342 = pneg %p2341
    $region46: #{inverted_residual.5} parent=5 // pred_check_branch
      %2344 = sbr.rel (%p2342) target = $region48
    $region47: #{inverted_residual.5} parent=5 // pred_region
      %s2345 = ssub.s32 %s12, 2
      // Predicated region
      $region49: #{inverted_residual.5} parent=47 // pred_check
        %p2346 = pneg %p130
      $region50: #{inverted_residual.5} parent=47 // pred_check_branch
        %2348 = sbr.rel (%p2346) target = $region52
      $region51: #{inverted_residual.5} parent=47 // pred_region
        %p2349 = scmp.lt.s32.totalorder %s18, 1
        %s2350 = scalar_select %p2349, %s18, 1
        %s2351 = smul.addr %s2350, 32
        %s2352 = smul.addr %s2351, 8
        %s2353 = scalar_lea.vmem %s4, %s2352
      $region52: #{inverted_residual.5} parent=47 // pred_fallthru
        _
      // Predicated region
      $region53: #{inverted_residual.5} parent=47 // pred_check
        %p2354 = pneg %p156
      $region54: #{inverted_residual.5} parent=47 // pred_check_branch
        %2356 = sbr.rel (%p2354) target = $region56
      $region55: #{inverted_residual.5} parent=47 // pred_region
        %p2357 = scmp.lt.s32.totalorder %s18, 1
        %s2358 = scalar_select %p2357, %s18, 1
        %s2359 = smul.addr %s2358, 2
        %s2360 = scalar_lea.vmem %s5, %s2359
      $region56: #{inverted_residual.5} parent=47 // pred_fallthru
        _
    $region48: #{inverted_residual.5} parent=5 // pred_fallthru
      _
  $region6: #{inverted_residual.5} parent=0 // loop_footer
    %s16 = sadd.s32 1, %s12
  $region7: #{inverted_residual.5} parent=0 // loop_footer_branch
    %11 = sbr.rel target = $region3
  $region8: #{inverted_residual.5} parent=0 // loop_exit
    _

</llo_original>
